<compile_context>
chip_gen: v7x
topology: tpu7x:2x2x1
jax: 0.10.0
libtpu: 0.0.40
codegen_flags: <defaults>
</compile_context>

<pallas_src>
import functools

import jax
import jax.numpy as jnp
from jax.experimental import pallas as pl
from jax.experimental.pallas import tpu as pltpu

# ----------------------------------------------------------------------------
# Configuration consistent with R_CNNCritic.__init__
# ----------------------------------------------------------------------------
HIDDEN      = 64      # args.hidden_size
NUM_AGENTS  = 2
ACTION_DIM  = 5       # action_space.n
SIZE_FC     = 10      # obs_shape['one-dim'].shape[0]
NUM_CHANNEL = 3       # obs_shape['two-dim'].shape[0]
OBS_H       = 8       # obs_shape['two-dim'].shape[1]
RECURRENT_N = 1
KERNEL_SIZE = 3
CNN_HID     = HIDDEN // 2                       # 32
CNN_OH      = OBS_H - KERNEL_SIZE + 1           # 6
CNN_OHW     = CNN_OH * CNN_OH                   # 36
CNN_TAPS    = NUM_CHANNEL * KERNEL_SIZE ** 2    # 27
CNN_FLAT    = CNN_OHW * CNN_HID                 # 1152
LN_EPS      = 1e-5
N_LAYERS    = 4                                 # MLPBase: fc1 + layer_N(=3)
SA_IN       = 2 * HIDDEN + ACTION_DIM           # 133
MG_IN       = (NUM_AGENTS + 1) * HIDDEN + HIDDEN  # 256
OUT_W       = 2 * HIDDEN                        # packed kernel output width

# packed small-input (B, 128) column layout
XS_OBS, XS_ACT, XS_MASK, XS_H0, XS_WIDTH = 0, 16, 32, 64, 128

# packed tall first-layer weight (row-padded to 8-aligned segments)
SE_W0_OFF, SE_W0_PAD = 0, 16
SA_W0_OFF, SA_W0_PAD = 16, 136
MG_W0_OFF            = 152
W0_ROWS              = 408

# stacked (64, 64) square weights
SQ_SE, SQ_SA, SQ_MG, SQ_FC2, SQ_VOUT, N_SQ = 0, 3, 6, 9, 10, 11

# packed (1, 64) vector rows: per-MLP 4 layers x [bias, gamma, beta]
V_SE, V_SA, V_MG = 0, 12, 24
V_FC1B, V_FC2B, V_GRU_G, V_GRU_BT, V_VB, N_V64 = 36, 37, 38, 39, 40, 41

# packed wide (1, 256) vector rows
VW_SE_G, VW_SE_B, VW_SA_G, VW_SA_B, VW_MG_G, VW_MG_B, VW_GRU_B = range(7)
VW_WIDTH = 256


# ----------------------------------------------------------------------------
# The single fused forward kernel
# ----------------------------------------------------------------------------
def _fused_critic_kernel(xs_ref, conv_ref, w0_ref, fc1_ref, w64_ref,
                         gru_ref, v64_ref, vw_ref, out_ref):
    f32 = jnp.float32
    B = xs_ref.shape[0]

    def dot(a, b):
        return jnp.dot(a, b, preferred_element_type=f32)

    def ln(x, g, b):
        mu = jnp.mean(x, axis=-1, keepdims=True)
        var = jnp.mean((x - mu) ** 2, axis=-1, keepdims=True)
        return (x - mu) * jax.lax.rsqrt(var + LN_EPS) * g + b

    def v64(r):                       # (1, 64) param row
        return v64_ref[r:r + 1, :]

    def vwide(r, width):              # (1, width) param row
        return vw_ref[r:r + 1, 0:width]

    def mlp(x, in_width, fng_row, w0, sq_base, v_base):
        # MLPBase: LayerNorm(input) -> [Linear -> ReLU -> LayerNorm] x N_LAYERS
        y = ln(x, vwide(fng_row, in_width), vwide(fng_row + 1, in_width))
        y = jnp.maximum(dot(y, w0) + v64(v_base), 0.0)
        y = ln(y, v64(v_base + 1), v64(v_base + 2))
        for l in range(1, N_LAYERS):
            y = jnp.maximum(dot(y, w64_ref[sq_base + l - 1]) + v64(v_base + 3 * l), 0.0)
            y = ln(y, v64(v_base + 3 * l + 1), v64(v_base + 3 * l + 2))
        return y

    # ---- unpack the small per-row inputs (single lane-dense operand) --------
    obs = xs_ref[:, XS_OBS:XS_OBS + SIZE_FC]
    act = xs_ref[:, XS_ACT:XS_ACT + ACTION_DIM]
    msk = xs_ref[:, XS_MASK:XS_MASK + 1]
    h0  = xs_ref[:, XS_H0:XS_H0 + HIDDEN]

    # ---- State_Encoder (MLP on the 1-D observation) --------------------------
    state_feat = mlp(obs, SIZE_FC, VW_SE_G,
                     w0_ref[SE_W0_OFF:SE_W0_OFF + SIZE_FC, :], SQ_SE, V_SE)

    # ---- CNNBase fc1 / fc2 (conv+ReLU already lane-dense in conv_ref) -------
    # fc1 is ONE K=1152 matmul (the previous 36-way per-position loop is gone).
    y = jnp.maximum(dot(conv_ref[...], fc1_ref[...]) + v64(V_FC1B), 0.0)
    cnn_feat = jnp.maximum(dot(y, w64_ref[SQ_FC2]) + v64(V_FC2B), 0.0)

    # ---- SA_Encoder on [state | cnn | action] (in-register concat) ----------
    sa_in = jnp.concatenate([state_feat, cnn_feat, act], axis=-1)       # (B, 133)
    sa_out = mlp(sa_in, SA_IN, VW_SA_G,
                 w0_ref[SA_W0_OFF:SA_W0_OFF + SA_IN, :], SQ_SA, V_SA)

    # ---- tile SA features across agents: O(B) sublane rolls, no BxB matmuls -
    # saf_a[b] = sa_out[(b // A) * A + a]; rows with b % A == r take the roll
    # by (r - a) (numpy roll convention: rolled[b] = sa_out[b - shift]).
    row_mod = jax.lax.broadcasted_iota(jnp.int32, (B, 1), 0) % NUM_AGENTS
    saf = []
    for a in range(NUM_AGENTS):
        t = jnp.zeros((B, HIDDEN), f32)
        for r in range(NUM_AGENTS):
            shift = (r - a) % B
            rolled = sa_out if shift == 0 else pltpu.roll(sa_out, shift, 0)
            t = jnp.where(row_mod == r, rolled, t)
        saf.append(t)

    # ---- MergeLayer on [state | cnn | saf_0 | saf_1] -------------------------
    mg_in = jnp.concatenate([state_feat, cnn_feat] + saf, axis=-1)      # (B, 256)
    critic_feat = mlp(mg_in, MG_IN, VW_MG_G,
                      w0_ref[MG_W0_OFF:MG_W0_OFF + MG_IN, :], SQ_MG, V_MG)

    # ---- masked single-step GRU: ONE fused (B,2H)x(2H,4H) matmul -------------
    # gate columns: [r (pre-summed) | z (pre-summed) | gi_n | gh_n]
    h = h0 * msk
    xh = jnp.concatenate([critic_feat, h], axis=-1)                     # (B, 128)
    gates = dot(xh, gru_ref[...]) + vwide(VW_GRU_B, 4 * HIDDEN)         # (B, 256)
    H = HIDDEN
    r = jax.nn.sigmoid(gates[:, 0:H])
    z = jax.nn.sigmoid(gates[:, H:2 * H])
    n = jnp.tanh(gates[:, 2 * H:3 * H] + r * gates[:, 3 * H:4 * H])
    hn = (1.0 - z) * n + z * h                     # hidden returned un-normed
    xo = ln(hn, v64(V_GRU_G), v64(V_GRU_BT))       # RNNLayer output LayerNorm

    # ---- value head (weight zero-padded to 64 cols -> lane-dense output) ----
    allv = dot(xo, w64_ref[SQ_VOUT]) + v64(V_VB)                        # (B, 64)

    # single lane-dense packed output: [h (64) | all_values padded (64)]
    out_ref[...] = jnp.concatenate([hn, allv], axis=-1)                 # (B, 128)


# ----------------------------------------------------------------------------
# pallas_call wrapper (grid-less single invocation, everything VMEM-resident)
# ----------------------------------------------------------------------------
def _fused_forward(params, xsmall, convact):
    B = xsmall.shape[0]
    vmem = pl.BlockSpec(memory_space=pltpu.MemorySpace.VMEM)
    operands = [xsmall, convact, params["w0pack"], params["fc1_w"],
                params["w64"], params["gru_w"], params["vec64"], params["vecwide"]]
    return pl.pallas_call(
        _fused_critic_kernel,
        out_shape=jax.ShapeDtypeStruct((B, OUT_W), jnp.float32),
        in_specs=[vmem] * len(operands),
        out_specs=vmem,
    )(*operands)


# ----------------------------------------------------------------------------
# Wrapper glue (im2col, conv GEMM, one-hot, packing) -- all inside one jit
# ----------------------------------------------------------------------------
def _im2col_batch_major(x_nchw, k):
    # rows ordered (batch, oh, ow); columns in channel-major tap order to match
    # the PyTorch Conv2d weight reshape (Cout, C*KH*KW).
    B, C, H, W = x_nchw.shape
    oh, ow = H - k + 1, W - k + 1
    taps = []
    for kh in range(k):
        for kw in range(k):
            taps.append(x_nchw[:, :, kh:kh + oh, kw:kw + ow])   # (B, C, oh, ow)
    t = jnp.stack(taps, axis=2)              # (B, C, k*k, oh, ow)
    t = t.transpose(0, 3, 4, 1, 2)           # (B, oh, ow, C, k*k)
    return t.reshape(B * oh * ow, C * k * k)


@functools.partial(jax.jit, static_argnames=("return_all_value",))
def r_cnn_critic_forward(params, obs_two, obs_one, action_batch, rnn_states,
                         masks, return_all_value=False):
    obs_cnn = obs_two.reshape(-1, NUM_CHANNEL, OBS_H, OBS_H).astype(jnp.float32)
    obs_fc = obs_one.reshape(-1, SIZE_FC).astype(jnp.float32)
    action_batch = action_batch.reshape(-1, action_batch.shape[-1]).astype(jnp.float32)
    rnn_states = rnn_states.astype(jnp.float32)

    if action_batch.shape[-1] != ACTION_DIM:
        # index-format actions -> one-hot (torch scatter branch)
        action_batch = jax.nn.one_hot(action_batch[:, 0].astype(jnp.int32),
                                      ACTION_DIM, dtype=jnp.float32)

    B = obs_fc.shape[0]
    masks = masks.astype(jnp.float32).reshape(B, -1)

    # conv-as-matmul (27x32 GEMM) + ReLU in the surrounding jit: the
    # (B*OHW, 32) -> (B, OHW*32) lane-dense relayout is free here and lets the
    # in-kernel fc1 be a single K=1152 MXU matmul (36 KB operand vs 31 KB of
    # raw patches, so HBM traffic and launch count are unchanged).
    patches = _im2col_batch_major(obs_cnn, KERNEL_SIZE)
    convact = jnp.maximum(patches @ params["conv_w"] + params["conv_b"], 0.0)
    convact = convact.reshape(B, CNN_FLAT)

    # pack the small per-row inputs into one lane-dense (B, 128) operand
    h0 = rnn_states[:, 0, :]
    xsmall = jnp.zeros((B, XS_WIDTH), jnp.float32)
    xsmall = xsmall.at[:, XS_OBS:XS_OBS + SIZE_FC].set(obs_fc)
    xsmall = xsmall.at[:, XS_ACT:XS_ACT + ACTION_DIM].set(action_batch)
    xsmall = xsmall.at[:, XS_MASK:XS_MASK + 1].set(masks[:, :1])
    xsmall = xsmall.at[:, XS_H0:XS_H0 + HIDDEN].set(h0)

    packed = _fused_forward(params, xsmall, convact)          # (B, 128)

    h_new = packed[:, 0:HIDDEN]
    all_values = packed[:, HIDDEN:HIDDEN + ACTION_DIM]
    int_acs = jnp.argmax(action_batch, axis=-1)               # torch .max indices
    values = jnp.take_along_axis(all_values, int_acs[:, None], axis=1)

    if return_all_value:
        return values, all_values
    return values, h_new[:, None, :]


# ----------------------------------------------------------------------------
# Deterministic parameter initialization (incl. one-time weight re-layouts)
# ----------------------------------------------------------------------------
def init_params(key):
    kit = iter(jax.random.split(key, 32))

    def nrm(shape, scale=0.1):
        return scale * jax.random.normal(next(kit), shape, jnp.float32)

    def lin(din, dout):
        return nrm((din, dout)), jnp.zeros((1, dout), jnp.float32)

    def mlp_raw(din):
        ws, bs = [], []
        w, b = lin(din, HIDDEN); ws.append(w); bs.append(b)
        for _ in range(N_LAYERS - 1):
            w, b = lin(HIDDEN, HIDDEN); ws.append(w); bs.append(b)
        return {"fn_g": jnp.ones((1, din), jnp.float32),
                "fn_b": jnp.zeros((1, din), jnp.float32),
                "ws": ws, "bs": bs,
                "g": [jnp.ones((1, HIDDEN), jnp.float32) for _ in range(N_LAYERS)],
                "bt": [jnp.zeros((1, HIDDEN), jnp.float32) for _ in range(N_LAYERS)]}

    se = mlp_raw(SIZE_FC)
    conv_w, conv_b = lin(CNN_TAPS, CNN_HID)
    fc1_w, fc1_b = lin(CNN_HID * CNN_OHW, HIDDEN)   # rows: torch flatten order c*OHW + p
    fc2_w, fc2_b = lin(HIDDEN, HIDDEN)
    sa = mlp_raw(SA_IN)
    mg = mlp_raw(MG_IN)
    w_ih = nrm((3, HIDDEN, HIDDEN))                 # GRU gates [r, z, n]
    w_hh = nrm((3, HIDDEN, HIDDEN))
    b_ih = jnp.zeros((3, 1, HIDDEN), jnp.float32)
    b_hh = jnp.zeros((3, 1, HIDDEN), jnp.float32)
    gru_g = jnp.ones((1, HIDDEN), jnp.float32)
    gru_bt = jnp.zeros((1, HIDDEN), jnp.float32)
    v_w, v_b = lin(HIDDEN, ACTION_DIM)

    # ---- one-time re-layouts / packing (per performance review) --------------
    def pad_rows(w, rows):
        return jnp.pad(w, ((0, rows - w.shape[0]), (0, 0)))

    def pad_cols(v, width):
        return jnp.pad(v, ((0, 0), (0, width - v.shape[-1])))

    # tall first-layer weights, 8-aligned row segments
    w0pack = jnp.concatenate([
        pad_rows(se["ws"][0], SE_W0_PAD),    # rows [0, 16)
        pad_rows(sa["ws"][0], SA_W0_PAD),    # rows [16, 152)
        mg["ws"][0],                         # rows [152, 408)
    ], axis=0)

    # cnn fc1 re-laid so the lane-dense (B, OHW*32) conv activation (column =
    # p*32 + c) feeds it directly -> folds away the NHWC->NCHW transpose.
    fc1_packed = (fc1_w.reshape(CNN_HID, CNN_OHW, HIDDEN)
                  .transpose(1, 0, 2).reshape(CNN_FLAT, HIDDEN))

    # all (64, 64) square weights + zero-padded value head in one stack
    v_w_pad = pad_cols(v_w, HIDDEN)
    w64 = jnp.stack(se["ws"][1:] + sa["ws"][1:] + mg["ws"][1:] + [fc2_w, v_w_pad])

    # fused GRU weight (2H, 4H): columns [r (ih+hh) | z (ih+hh) | gi_n | gh_n]
    H = HIDDEN
    gru_w = jnp.zeros((2 * H, 4 * H), jnp.float32)
    gru_w = gru_w.at[:H, 0:H].set(w_ih[0]).at[H:, 0:H].set(w_hh[0])
    gru_w = gru_w.at[:H, H:2 * H].set(w_ih[1]).at[H:, H:2 * H].set(w_hh[1])
    gru_w = gru_w.at[:H, 2 * H:3 * H].set(w_ih[2])
    gru_w = gru_w.at[H:, 3 * H:4 * H].set(w_hh[2])
    gru_b = jnp.concatenate([b_ih[0] + b_hh[0], b_ih[1] + b_hh[1],
                             b_ih[2], b_hh[2]], axis=-1)          # (1, 4H)

    # all (1, 64) vectors in one slab
    rows64 = []
    for m in (se, sa, mg):
        for l in range(N_LAYERS):
            rows64 += [m["bs"][l], m["g"][l], m["bt"][l]]
    rows64 += [fc1_b, fc2_b, gru_g, gru_bt, pad_cols(v_b, HIDDEN)]
    vec64 = jnp.concatenate(rows64, axis=0)                       # (41, 64)

    # all wide (1, <=256) vectors in one slab
    vecwide = jnp.concatenate([
        pad_cols(se["fn_g"], VW_WIDTH), pad_cols(se["fn_b"], VW_WIDTH),
        pad_cols(sa["fn_g"], VW_WIDTH), pad_cols(sa["fn_b"], VW_WIDTH),
        pad_cols(mg["fn_g"], VW_WIDTH), pad_cols(mg["fn_b"], VW_WIDTH),
        gru_b], axis=0)                                           # (7, 256)

    return {"conv_w": conv_w, "conv_b": conv_b,
            "w0pack": w0pack, "fc1_w": fc1_packed, "w64": w64,
            "gru_w": gru_w, "vec64": vec64, "vecwide": vecwide}


# ----------------------------------------------------------------------------
if __name__ == "__main__":
    key = jax.random.PRNGKey(0)
    kp, k1, k2, k3, k4 = jax.random.split(key, 5)
    params = init_params(kp)

    n_rollout = 4
    B = n_rollout * NUM_AGENTS                   # batch = 8 (multiple of num_agents)

    obs_two = jax.random.normal(k1, (B, NUM_CHANNEL, OBS_H, OBS_H), jnp.float32)
    obs_one = jax.random.normal(k2, (B, SIZE_FC), jnp.float32)
    act_idx = jax.random.randint(k3, (B,), 0, ACTION_DIM)
    action = jax.nn.one_hot(act_idx, ACTION_DIM, dtype=jnp.float32)
    rnn_states = jax.random.normal(k4, (B, RECURRENT_N, HIDDEN), jnp.float32)
    masks = jnp.ones((B, 1), jnp.float32)

    values, rnn_states_out = r_cnn_critic_forward(
        params, obs_two, obs_one, action, rnn_states, masks)
    jax.block_until_ready((values, rnn_states_out))

    assert values.shape == (B, 1)
    assert rnn_states_out.shape == (B, RECURRENT_N, HIDDEN)
    print("KERNEL_OK")
</pallas_src>

<mosaic_0001>
module attributes {stable_mosaic.version = 11 : i64} {
  func.func @_fused_critic_kernel(%arg0: memref<8x128xf32, #tpu.memory_space<vmem>>, %arg1: memref<8x1152xf32, #tpu.memory_space<vmem>>, %arg2: memref<408x64xf32, #tpu.memory_space<vmem>>, %arg3: memref<1152x64xf32, #tpu.memory_space<vmem>>, %arg4: memref<11x64x64xf32, #tpu.memory_space<vmem>>, %arg5: memref<128x256xf32, #tpu.memory_space<vmem>>, %arg6: memref<41x64xf32, #tpu.memory_space<vmem>>, %arg7: memref<7x256xf32, #tpu.memory_space<vmem>>, %arg8: memref<8x128xf32, #tpu.memory_space<vmem>>) attributes {dimension_semantics = [], scalar_prefetch = 0 : i64, scratch_operands = 0 : i64, tpu.core_type = #tpu.core_type<tc>} {
    %c0 = arith.constant 0 : index
    %c0_0 = arith.constant 0 : index
    %0 = vector.load %arg0[%c0, %c0_0] : memref<8x128xf32, #tpu.memory_space<vmem>>, vector<8x10xf32>
    %c0_1 = arith.constant 0 : index
    %c16 = arith.constant 16 : index
    %1 = vector.load %arg0[%c0_1, %c16] : memref<8x128xf32, #tpu.memory_space<vmem>>, vector<8x5xf32>
    %c0_2 = arith.constant 0 : index
    %c32 = arith.constant 32 : index
    %2 = vector.load %arg0[%c0_2, %c32] : memref<8x128xf32, #tpu.memory_space<vmem>>, vector<8x1xf32>
    %c0_3 = arith.constant 0 : index
    %c64 = arith.constant 64 : index
    %3 = vector.load %arg0[%c0_3, %c64] : memref<8x128xf32, #tpu.memory_space<vmem>>, vector<8x64xf32>
    %c0_4 = arith.constant 0 : index
    %c0_5 = arith.constant 0 : index
    %4 = vector.load %arg2[%c0_4, %c0_5] : memref<408x64xf32, #tpu.memory_space<vmem>>, vector<10x64xf32>
    %c0_6 = arith.constant 0 : index
    %c0_7 = arith.constant 0 : index
    %5 = vector.load %arg7[%c0_6, %c0_7] : memref<7x256xf32, #tpu.memory_space<vmem>>, vector<1x10xf32>
    %c1 = arith.constant 1 : index
    %c0_8 = arith.constant 0 : index
    %6 = vector.load %arg7[%c1, %c0_8] : memref<7x256xf32, #tpu.memory_space<vmem>>, vector<1x10xf32>
    %cst = arith.constant dense<0.000000e+00> : vector<8xf32>
    %7 = vector.multi_reduction <add>, %0, %cst [1] : vector<8x10xf32> to vector<8xf32>
    %8 = vector.shape_cast %7 : vector<8xf32> to vector<8x1xf32>
    %cst_9 = arith.constant 1.000000e+01 : f32
    %9 = vector.broadcast %cst_9 : f32 to vector<8x1xf32>
    %10 = arith.divf %8, %9 : vector<8x1xf32>
    %11 = vector.broadcast %10 : vector<8x1xf32> to vector<8x10xf32>
    %12 = arith.subf %0, %11 : vector<8x10xf32>
    %13 = arith.mulf %12, %12 : vector<8x10xf32>
    %cst_10 = arith.constant dense<0.000000e+00> : vector<8xf32>
    %14 = vector.multi_reduction <add>, %13, %cst_10 [1] : vector<8x10xf32> to vector<8xf32>
    %15 = vector.shape_cast %14 : vector<8xf32> to vector<8x1xf32>
    %cst_11 = arith.constant 1.000000e+01 : f32
    %16 = vector.broadcast %cst_11 : f32 to vector<8x1xf32>
    %17 = arith.divf %15, %16 : vector<8x1xf32>
    %18 = vector.broadcast %10 : vector<8x1xf32> to vector<8x10xf32>
    %19 = arith.subf %0, %18 : vector<8x10xf32>
    %cst_12 = arith.constant 9.99999974E-6 : f32
    %20 = vector.broadcast %cst_12 : f32 to vector<8x1xf32>
    %21 = arith.addf %17, %20 : vector<8x1xf32>
    %22 = math.rsqrt %21 : vector<8x1xf32>
    %23 = vector.broadcast %22 : vector<8x1xf32> to vector<8x10xf32>
    %24 = arith.mulf %19, %23 : vector<8x10xf32>
    %25 = vector.broadcast %5 : vector<1x10xf32> to vector<8x10xf32>
    %26 = arith.mulf %24, %25 : vector<8x10xf32>
    %27 = vector.broadcast %6 : vector<1x10xf32> to vector<8x10xf32>
    %28 = arith.addf %26, %27 : vector<8x10xf32>
    %cst_13 = arith.constant dense<0.000000e+00> : vector<8x64xf32>
    %29 = tpu.matmul %28, %4, %cst_13 {dimension_numbers = #tpu.dot_dimension_numbers<[1], [0], [0], [1], [0, 0, 1, 1], [], []>} : vector<8x10xf32>, vector<10x64xf32>, vector<8x64xf32> -> vector<8x64xf32>
    %c0_14 = arith.constant 0 : index
    %c0_15 = arith.constant 0 : index
    %30 = vector.load %arg6[%c0_14, %c0_15] : memref<41x64xf32, #tpu.memory_space<vmem>>, vector<1x64xf32>
    %31 = vector.broadcast %30 : vector<1x64xf32> to vector<8x64xf32>
    %32 = arith.addf %29, %31 : vector<8x64xf32>
    %cst_16 = arith.constant 0.000000e+00 : f32
    %33 = vector.broadcast %cst_16 : f32 to vector<8x64xf32>
    %34 = arith.maximumf %32, %33 : vector<8x64xf32>
    %c1_17 = arith.constant 1 : index
    %c0_18 = arith.constant 0 : index
    %35 = vector.load %arg6[%c1_17, %c0_18] : memref<41x64xf32, #tpu.memory_space<vmem>>, vector<1x64xf32>
    %c2 = arith.constant 2 : index
    %c0_19 = arith.constant 0 : index
    %36 = vector.load %arg6[%c2, %c0_19] : memref<41x64xf32, #tpu.memory_space<vmem>>, vector<1x64xf32>
    %cst_20 = arith.constant dense<0.000000e+00> : vector<8xf32>
    %37 = vector.multi_reduction <add>, %34, %cst_20 [1] : vector<8x64xf32> to vector<8xf32>
    %38 = vector.shape_cast %37 : vector<8xf32> to vector<8x1xf32>
    %cst_21 = arith.constant 6.400000e+01 : f32
    %39 = vector.broadcast %cst_21 : f32 to vector<8x1xf32>
    %40 = arith.divf %38, %39 : vector<8x1xf32>
    %41 = vector.broadcast %40 : vector<8x1xf32> to vector<8x64xf32>
    %42 = arith.subf %34, %41 : vector<8x64xf32>
    %43 = arith.mulf %42, %42 : vector<8x64xf32>
    %cst_22 = arith.constant dense<0.000000e+00> : vector<8xf32>
    %44 = vector.multi_reduction <add>, %43, %cst_22 [1] : vector<8x64xf32> to vector<8xf32>
    %45 = vector.shape_cast %44 : vector<8xf32> to vector<8x1xf32>
    %cst_23 = arith.constant 6.400000e+01 : f32
    %46 = vector.broadcast %cst_23 : f32 to vector<8x1xf32>
    %47 = arith.divf %45, %46 : vector<8x1xf32>
    %48 = vector.broadcast %40 : vector<8x1xf32> to vector<8x64xf32>
    %49 = arith.subf %34, %48 : vector<8x64xf32>
    %cst_24 = arith.constant 9.99999974E-6 : f32
    %50 = vector.broadcast %cst_24 : f32 to vector<8x1xf32>
    %51 = arith.addf %47, %50 : vector<8x1xf32>
    %52 = math.rsqrt %51 : vector<8x1xf32>
    %53 = vector.broadcast %52 : vector<8x1xf32> to vector<8x64xf32>
    %54 = arith.mulf %49, %53 : vector<8x64xf32>
    %55 = vector.broadcast %35 : vector<1x64xf32> to vector<8x64xf32>
    %56 = arith.mulf %54, %55 : vector<8x64xf32>
    %57 = vector.broadcast %36 : vector<1x64xf32> to vector<8x64xf32>
    %58 = arith.addf %56, %57 : vector<8x64xf32>
    %c0_25 = arith.constant 0 : index
    %c0_26 = arith.constant 0 : index
    %c0_27 = arith.constant 0 : index
    %59 = vector.load %arg4[%c0_25, %c0_26, %c0_27] : memref<11x64x64xf32, #tpu.memory_space<vmem>>, vector<1x64x64xf32>
    %60 = vector.shape_cast %59 : vector<1x64x64xf32> to vector<64x64xf32>
    %cst_28 = arith.constant dense<0.000000e+00> : vector<8x64xf32>
    %61 = tpu.matmul %58, %60, %cst_28 {dimension_numbers = #tpu.dot_dimension_numbers<[1], [0], [0], [1], [0, 0, 1, 1], [], []>} : vector<8x64xf32>, vector<64x64xf32>, vector<8x64xf32> -> vector<8x64xf32>
    %c3 = arith.constant 3 : index
    %c0_29 = arith.constant 0 : index
    %62 = vector.load %arg6[%c3, %c0_29] : memref<41x64xf32, #tpu.memory_space<vmem>>, vector<1x64xf32>
    %63 = vector.broadcast %62 : vector<1x64xf32> to vector<8x64xf32>
    %64 = arith.addf %61, %63 : vector<8x64xf32>
    %cst_30 = arith.constant 0.000000e+00 : f32
    %65 = vector.broadcast %cst_30 : f32 to vector<8x64xf32>
    %66 = arith.maximumf %64, %65 : vector<8x64xf32>
    %c4 = arith.constant 4 : index
    %c0_31 = arith.constant 0 : index
    %67 = vector.load %arg6[%c4, %c0_31] : memref<41x64xf32, #tpu.memory_space<vmem>>, vector<1x64xf32>
    %c5 = arith.constant 5 : index
    %c0_32 = arith.constant 0 : index
    %68 = vector.load %arg6[%c5, %c0_32] : memref<41x64xf32, #tpu.memory_space<vmem>>, vector<1x64xf32>
    %cst_33 = arith.constant dense<0.000000e+00> : vector<8xf32>
    %69 = vector.multi_reduction <add>, %66, %cst_33 [1] : vector<8x64xf32> to vector<8xf32>
    %70 = vector.shape_cast %69 : vector<8xf32> to vector<8x1xf32>
    %cst_34 = arith.constant 6.400000e+01 : f32
    %71 = vector.broadcast %cst_34 : f32 to vector<8x1xf32>
    %72 = arith.divf %70, %71 : vector<8x1xf32>
    %73 = vector.broadcast %72 : vector<8x1xf32> to vector<8x64xf32>
    %74 = arith.subf %66, %73 : vector<8x64xf32>
    %75 = arith.mulf %74, %74 : vector<8x64xf32>
    %cst_35 = arith.constant dense<0.000000e+00> : vector<8xf32>
    %76 = vector.multi_reduction <add>, %75, %cst_35 [1] : vector<8x64xf32> to vector<8xf32>
    %77 = vector.shape_cast %76 : vector<8xf32> to vector<8x1xf32>
    %cst_36 = arith.constant 6.400000e+01 : f32
    %78 = vector.broadcast %cst_36 : f32 to vector<8x1xf32>
    %79 = arith.divf %77, %78 : vector<8x1xf32>
    %80 = vector.broadcast %72 : vector<8x1xf32> to vector<8x64xf32>
    %81 = arith.subf %66, %80 : vector<8x64xf32>
    %cst_37 = arith.constant 9.99999974E-6 : f32
    %82 = vector.broadcast %cst_37 : f32 to vector<8x1xf32>
    %83 = arith.addf %79, %82 : vector<8x1xf32>
    %84 = math.rsqrt %83 : vector<8x1xf32>
    %85 = vector.broadcast %84 : vector<8x1xf32> to vector<8x64xf32>
    %86 = arith.mulf %81, %85 : vector<8x64xf32>
    %87 = vector.broadcast %67 : vector<1x64xf32> to vector<8x64xf32>
    %88 = arith.mulf %86, %87 : vector<8x64xf32>
    %89 = vector.broadcast %68 : vector<1x64xf32> to vector<8x64xf32>
    %90 = arith.addf %88, %89 : vector<8x64xf32>
    %c1_38 = arith.constant 1 : index
    %c0_39 = arith.constant 0 : index
    %c0_40 = arith.constant 0 : index
    %91 = vector.load %arg4[%c1_38, %c0_39, %c0_40] : memref<11x64x64xf32, #tpu.memory_space<vmem>>, vector<1x64x64xf32>
    %92 = vector.shape_cast %91 : vector<1x64x64xf32> to vector<64x64xf32>
    %cst_41 = arith.constant dense<0.000000e+00> : vector<8x64xf32>
    %93 = tpu.matmul %90, %92, %cst_41 {dimension_numbers = #tpu.dot_dimension_numbers<[1], [0], [0], [1], [0, 0, 1, 1], [], []>} : vector<8x64xf32>, vector<64x64xf32>, vector<8x64xf32> -> vector<8x64xf32>
    %c6 = arith.constant 6 : index
    %c0_42 = arith.constant 0 : index
    %94 = vector.load %arg6[%c6, %c0_42] : memref<41x64xf32, #tpu.memory_space<vmem>>, vector<1x64xf32>
    %95 = vector.broadcast %94 : vector<1x64xf32> to vector<8x64xf32>
    %96 = arith.addf %93, %95 : vector<8x64xf32>
    %cst_43 = arith.constant 0.000000e+00 : f32
    %97 = vector.broadcast %cst_43 : f32 to vector<8x64xf32>
    %98 = arith.maximumf %96, %97 : vector<8x64xf32>
    %c7 = arith.constant 7 : index
    %c0_44 = arith.constant 0 : index
    %99 = vector.load %arg6[%c7, %c0_44] : memref<41x64xf32, #tpu.memory_space<vmem>>, vector<1x64xf32>
    %c8 = arith.constant 8 : index
    %c0_45 = arith.constant 0 : index
    %100 = vector.load %arg6[%c8, %c0_45] : memref<41x64xf32, #tpu.memory_space<vmem>>, vector<1x64xf32>
    %cst_46 = arith.constant dense<0.000000e+00> : vector<8xf32>
    %101 = vector.multi_reduction <add>, %98, %cst_46 [1] : vector<8x64xf32> to vector<8xf32>
    %102 = vector.shape_cast %101 : vector<8xf32> to vector<8x1xf32>
    %cst_47 = arith.constant 6.400000e+01 : f32
    %103 = vector.broadcast %cst_47 : f32 to vector<8x1xf32>
    %104 = arith.divf %102, %103 : vector<8x1xf32>
    %105 = vector.broadcast %104 : vector<8x1xf32> to vector<8x64xf32>
    %106 = arith.subf %98, %105 : vector<8x64xf32>
    %107 = arith.mulf %106, %106 : vector<8x64xf32>
    %cst_48 = arith.constant dense<0.000000e+00> : vector<8xf32>
    %108 = vector.multi_reduction <add>, %107, %cst_48 [1] : vector<8x64xf32> to vector<8xf32>
    %109 = vector.shape_cast %108 : vector<8xf32> to vector<8x1xf32>
    %cst_49 = arith.constant 6.400000e+01 : f32
    %110 = vector.broadcast %cst_49 : f32 to vector<8x1xf32>
    %111 = arith.divf %109, %110 : vector<8x1xf32>
    %112 = vector.broadcast %104 : vector<8x1xf32> to vector<8x64xf32>
    %113 = arith.subf %98, %112 : vector<8x64xf32>
    %cst_50 = arith.constant 9.99999974E-6 : f32
    %114 = vector.broadcast %cst_50 : f32 to vector<8x1xf32>
    %115 = arith.addf %111, %114 : vector<8x1xf32>
    %116 = math.rsqrt %115 : vector<8x1xf32>
    %117 = vector.broadcast %116 : vector<8x1xf32> to vector<8x64xf32>
    %118 = arith.mulf %113, %117 : vector<8x64xf32>
    %119 = vector.broadcast %99 : vector<1x64xf32> to vector<8x64xf32>
    %120 = arith.mulf %118, %119 : vector<8x64xf32>
    %121 = vector.broadcast %100 : vector<1x64xf32> to vector<8x64xf32>
    %122 = arith.addf %120, %121 : vector<8x64xf32>
    %c2_51 = arith.constant 2 : index
    %c0_52 = arith.constant 0 : index
    %c0_53 = arith.constant 0 : index
    %123 = vector.load %arg4[%c2_51, %c0_52, %c0_53] : memref<11x64x64xf32, #tpu.memory_space<vmem>>, vector<1x64x64xf32>
    %124 = vector.shape_cast %123 : vector<1x64x64xf32> to vector<64x64xf32>
    %cst_54 = arith.constant dense<0.000000e+00> : vector<8x64xf32>
    %125 = tpu.matmul %122, %124, %cst_54 {dimension_numbers = #tpu.dot_dimension_numbers<[1], [0], [0], [1], [0, 0, 1, 1], [], []>} : vector<8x64xf32>, vector<64x64xf32>, vector<8x64xf32> -> vector<8x64xf32>
    %c9 = arith.constant 9 : index
    %c0_55 = arith.constant 0 : index
    %126 = vector.load %arg6[%c9, %c0_55] : memref<41x64xf32, #tpu.memory_space<vmem>>, vector<1x64xf32>
    %127 = vector.broadcast %126 : vector<1x64xf32> to vector<8x64xf32>
    %128 = arith.addf %125, %127 : vector<8x64xf32>
    %cst_56 = arith.constant 0.000000e+00 : f32
    %129 = vector.broadcast %cst_56 : f32 to vector<8x64xf32>
    %130 = arith.maximumf %128, %129 : vector<8x64xf32>
    %c10 = arith.constant 10 : index
    %c0_57 = arith.constant 0 : index
    %131 = vector.load %arg6[%c10, %c0_57] : memref<41x64xf32, #tpu.memory_space<vmem>>, vector<1x64xf32>
    %c11 = arith.constant 11 : index
    %c0_58 = arith.constant 0 : index
    %132 = vector.load %arg6[%c11, %c0_58] : memref<41x64xf32, #tpu.memory_space<vmem>>, vector<1x64xf32>
    %cst_59 = arith.constant dense<0.000000e+00> : vector<8xf32>
    %133 = vector.multi_reduction <add>, %130, %cst_59 [1] : vector<8x64xf32> to vector<8xf32>
    %134 = vector.shape_cast %133 : vector<8xf32> to vector<8x1xf32>
    %cst_60 = arith.constant 6.400000e+01 : f32
    %135 = vector.broadcast %cst_60 : f32 to vector<8x1xf32>
    %136 = arith.divf %134, %135 : vector<8x1xf32>
    %137 = vector.broadcast %136 : vector<8x1xf32> to vector<8x64xf32>
    %138 = arith.subf %130, %137 : vector<8x64xf32>
    %139 = arith.mulf %138, %138 : vector<8x64xf32>
    %cst_61 = arith.constant dense<0.000000e+00> : vector<8xf32>
    %140 = vector.multi_reduction <add>, %139, %cst_61 [1] : vector<8x64xf32> to vector<8xf32>
    %141 = vector.shape_cast %140 : vector<8xf32> to vector<8x1xf32>
    %cst_62 = arith.constant 6.400000e+01 : f32
    %142 = vector.broadcast %cst_62 : f32 to vector<8x1xf32>
    %143 = arith.divf %141, %142 : vector<8x1xf32>
    %144 = vector.broadcast %136 : vector<8x1xf32> to vector<8x64xf32>
    %145 = arith.subf %130, %144 : vector<8x64xf32>
    %cst_63 = arith.constant 9.99999974E-6 : f32
    %146 = vector.broadcast %cst_63 : f32 to vector<8x1xf32>
    %147 = arith.addf %143, %146 : vector<8x1xf32>
    %148 = math.rsqrt %147 : vector<8x1xf32>
    %149 = vector.broadcast %148 : vector<8x1xf32> to vector<8x64xf32>
    %150 = arith.mulf %145, %149 : vector<8x64xf32>
    %151 = vector.broadcast %131 : vector<1x64xf32> to vector<8x64xf32>
    %152 = arith.mulf %150, %151 : vector<8x64xf32>
    %153 = vector.broadcast %132 : vector<1x64xf32> to vector<8x64xf32>
    %154 = arith.addf %152, %153 : vector<8x64xf32>
    %c0_64 = arith.constant 0 : index
    %c0_65 = arith.constant 0 : index
    %155 = vector.load %arg1[%c0_64, %c0_65] : memref<8x1152xf32, #tpu.memory_space<vmem>>, vector<8x1152xf32>
    %c0_66 = arith.constant 0 : index
    %c0_67 = arith.constant 0 : index
    %156 = vector.load %arg3[%c0_66, %c0_67] : memref<1152x64xf32, #tpu.memory_space<vmem>>, vector<1152x64xf32>
    %cst_68 = arith.constant dense<0.000000e+00> : vector<8x64xf32>
    %157 = tpu.matmul %155, %156, %cst_68 {dimension_numbers = #tpu.dot_dimension_numbers<[1], [0], [0], [1], [0, 0, 1, 1], [], []>} : vector<8x1152xf32>, vector<1152x64xf32>, vector<8x64xf32> -> vector<8x64xf32>
    %c36 = arith.constant 36 : index
    %c0_69 = arith.constant 0 : index
    %158 = vector.load %arg6[%c36, %c0_69] : memref<41x64xf32, #tpu.memory_space<vmem>>, vector<1x64xf32>
    %159 = vector.broadcast %158 : vector<1x64xf32> to vector<8x64xf32>
    %160 = arith.addf %157, %159 : vector<8x64xf32>
    %cst_70 = arith.constant 0.000000e+00 : f32
    %161 = vector.broadcast %cst_70 : f32 to vector<8x64xf32>
    %162 = arith.maximumf %160, %161 : vector<8x64xf32>
    %c9_71 = arith.constant 9 : index
    %c0_72 = arith.constant 0 : index
    %c0_73 = arith.constant 0 : index
    %163 = vector.load %arg4[%c9_71, %c0_72, %c0_73] : memref<11x64x64xf32, #tpu.memory_space<vmem>>, vector<1x64x64xf32>
    %164 = vector.shape_cast %163 : vector<1x64x64xf32> to vector<64x64xf32>
    %cst_74 = arith.constant dense<0.000000e+00> : vector<8x64xf32>
    %165 = tpu.matmul %162, %164, %cst_74 {dimension_numbers = #tpu.dot_dimension_numbers<[1], [0], [0], [1], [0, 0, 1, 1], [], []>} : vector<8x64xf32>, vector<64x64xf32>, vector<8x64xf32> -> vector<8x64xf32>
    %c37 = arith.constant 37 : index
    %c0_75 = arith.constant 0 : index
    %166 = vector.load %arg6[%c37, %c0_75] : memref<41x64xf32, #tpu.memory_space<vmem>>, vector<1x64xf32>
    %167 = vector.broadcast %166 : vector<1x64xf32> to vector<8x64xf32>
    %168 = arith.addf %165, %167 : vector<8x64xf32>
    %cst_76 = arith.constant 0.000000e+00 : f32
    %169 = vector.broadcast %cst_76 : f32 to vector<8x64xf32>
    %170 = arith.maximumf %168, %169 : vector<8x64xf32>
    %171 = tpu.concatenate %154, %170, %1 in 1 : vector<8x64xf32>, vector<8x64xf32>, vector<8x5xf32> -> vector<8x133xf32>
    %c16_77 = arith.constant 16 : index
    %c0_78 = arith.constant 0 : index
    %172 = vector.load %arg2[%c16_77, %c0_78] : memref<408x64xf32, #tpu.memory_space<vmem>>, vector<133x64xf32>
    %c2_79 = arith.constant 2 : index
    %c0_80 = arith.constant 0 : index
    %173 = vector.load %arg7[%c2_79, %c0_80] : memref<7x256xf32, #tpu.memory_space<vmem>>, vector<1x133xf32>
    %c3_81 = arith.constant 3 : index
    %c0_82 = arith.constant 0 : index
    %174 = vector.load %arg7[%c3_81, %c0_82] : memref<7x256xf32, #tpu.memory_space<vmem>>, vector<1x133xf32>
    %cst_83 = arith.constant dense<0.000000e+00> : vector<8xf32>
    %175 = vector.multi_reduction <add>, %171, %cst_83 [1] : vector<8x133xf32> to vector<8xf32>
    %176 = vector.shape_cast %175 : vector<8xf32> to vector<8x1xf32>
    %cst_84 = arith.constant 1.330000e+02 : f32
    %177 = vector.broadcast %cst_84 : f32 to vector<8x1xf32>
    %178 = arith.divf %176, %177 : vector<8x1xf32>
    %179 = vector.broadcast %178 : vector<8x1xf32> to vector<8x133xf32>
    %180 = arith.subf %171, %179 : vector<8x133xf32>
    %181 = arith.mulf %180, %180 : vector<8x133xf32>
    %cst_85 = arith.constant dense<0.000000e+00> : vector<8xf32>
    %182 = vector.multi_reduction <add>, %181, %cst_85 [1] : vector<8x133xf32> to vector<8xf32>
    %183 = vector.shape_cast %182 : vector<8xf32> to vector<8x1xf32>
    %cst_86 = arith.constant 1.330000e+02 : f32
    %184 = vector.broadcast %cst_86 : f32 to vector<8x1xf32>
    %185 = arith.divf %183, %184 : vector<8x1xf32>
    %186 = vector.broadcast %178 : vector<8x1xf32> to vector<8x133xf32>
    %187 = arith.subf %171, %186 : vector<8x133xf32>
    %cst_87 = arith.constant 9.99999974E-6 : f32
    %188 = vector.broadcast %cst_87 : f32 to vector<8x1xf32>
    %189 = arith.addf %185, %188 : vector<8x1xf32>
    %190 = math.rsqrt %189 : vector<8x1xf32>
    %191 = vector.broadcast %190 : vector<8x1xf32> to vector<8x133xf32>
    %192 = arith.mulf %187, %191 : vector<8x133xf32>
    %193 = vector.broadcast %173 : vector<1x133xf32> to vector<8x133xf32>
    %194 = arith.mulf %192, %193 : vector<8x133xf32>
    %195 = vector.broadcast %174 : vector<1x133xf32> to vector<8x133xf32>
    %196 = arith.addf %194, %195 : vector<8x133xf32>
    %cst_88 = arith.constant dense<0.000000e+00> : vector<8x64xf32>
    %197 = tpu.matmul %196, %172, %cst_88 {dimension_numbers = #tpu.dot_dimension_numbers<[1], [0], [0], [1], [0, 0, 1, 1], [], []>} : vector<8x133xf32>, vector<133x64xf32>, vector<8x64xf32> -> vector<8x64xf32>
    %c12 = arith.constant 12 : index
    %c0_89 = arith.constant 0 : index
    %198 = vector.load %arg6[%c12, %c0_89] : memref<41x64xf32, #tpu.memory_space<vmem>>, vector<1x64xf32>
    %199 = vector.broadcast %198 : vector<1x64xf32> to vector<8x64xf32>
    %200 = arith.addf %197, %199 : vector<8x64xf32>
    %cst_90 = arith.constant 0.000000e+00 : f32
    %201 = vector.broadcast %cst_90 : f32 to vector<8x64xf32>
    %202 = arith.maximumf %200, %201 : vector<8x64xf32>
    %c13 = arith.constant 13 : index
    %c0_91 = arith.constant 0 : index
    %203 = vector.load %arg6[%c13, %c0_91] : memref<41x64xf32, #tpu.memory_space<vmem>>, vector<1x64xf32>
    %c14 = arith.constant 14 : index
    %c0_92 = arith.constant 0 : index
    %204 = vector.load %arg6[%c14, %c0_92] : memref<41x64xf32, #tpu.memory_space<vmem>>, vector<1x64xf32>
    %cst_93 = arith.constant dense<0.000000e+00> : vector<8xf32>
    %205 = vector.multi_reduction <add>, %202, %cst_93 [1] : vector<8x64xf32> to vector<8xf32>
    %206 = vector.shape_cast %205 : vector<8xf32> to vector<8x1xf32>
    %cst_94 = arith.constant 6.400000e+01 : f32
    %207 = vector.broadcast %cst_94 : f32 to vector<8x1xf32>
    %208 = arith.divf %206, %207 : vector<8x1xf32>
    %209 = vector.broadcast %208 : vector<8x1xf32> to vector<8x64xf32>
    %210 = arith.subf %202, %209 : vector<8x64xf32>
    %211 = arith.mulf %210, %210 : vector<8x64xf32>
    %cst_95 = arith.constant dense<0.000000e+00> : vector<8xf32>
    %212 = vector.multi_reduction <add>, %211, %cst_95 [1] : vector<8x64xf32> to vector<8xf32>
    %213 = vector.shape_cast %212 : vector<8xf32> to vector<8x1xf32>
    %cst_96 = arith.constant 6.400000e+01 : f32
    %214 = vector.broadcast %cst_96 : f32 to vector<8x1xf32>
    %215 = arith.divf %213, %214 : vector<8x1xf32>
    %216 = vector.broadcast %208 : vector<8x1xf32> to vector<8x64xf32>
    %217 = arith.subf %202, %216 : vector<8x64xf32>
    %cst_97 = arith.constant 9.99999974E-6 : f32
    %218 = vector.broadcast %cst_97 : f32 to vector<8x1xf32>
    %219 = arith.addf %215, %218 : vector<8x1xf32>
    %220 = math.rsqrt %219 : vector<8x1xf32>
    %221 = vector.broadcast %220 : vector<8x1xf32> to vector<8x64xf32>
    %222 = arith.mulf %217, %221 : vector<8x64xf32>
    %223 = vector.broadcast %203 : vector<1x64xf32> to vector<8x64xf32>
    %224 = arith.mulf %222, %223 : vector<8x64xf32>
    %225 = vector.broadcast %204 : vector<1x64xf32> to vector<8x64xf32>
    %226 = arith.addf %224, %225 : vector<8x64xf32>
    %c3_98 = arith.constant 3 : index
    %c0_99 = arith.constant 0 : index
    %c0_100 = arith.constant 0 : index
    %227 = vector.load %arg4[%c3_98, %c0_99, %c0_100] : memref<11x64x64xf32, #tpu.memory_space<vmem>>, vector<1x64x64xf32>
    %228 = vector.shape_cast %227 : vector<1x64x64xf32> to vector<64x64xf32>
    %cst_101 = arith.constant dense<0.000000e+00> : vector<8x64xf32>
    %229 = tpu.matmul %226, %228, %cst_101 {dimension_numbers = #tpu.dot_dimension_numbers<[1], [0], [0], [1], [0, 0, 1, 1], [], []>} : vector<8x64xf32>, vector<64x64xf32>, vector<8x64xf32> -> vector<8x64xf32>
    %c15 = arith.constant 15 : index
    %c0_102 = arith.constant 0 : index
    %230 = vector.load %arg6[%c15, %c0_102] : memref<41x64xf32, #tpu.memory_space<vmem>>, vector<1x64xf32>
    %231 = vector.broadcast %230 : vector<1x64xf32> to vector<8x64xf32>
    %232 = arith.addf %229, %231 : vector<8x64xf32>
    %cst_103 = arith.constant 0.000000e+00 : f32
    %233 = vector.broadcast %cst_103 : f32 to vector<8x64xf32>
    %234 = arith.maximumf %232, %233 : vector<8x64xf32>
    %c16_104 = arith.constant 16 : index
    %c0_105 = arith.constant 0 : index
    %235 = vector.load %arg6[%c16_104, %c0_105] : memref<41x64xf32, #tpu.memory_space<vmem>>, vector<1x64xf32>
    %c17 = arith.constant 17 : index
    %c0_106 = arith.constant 0 : index
    %236 = vector.load %arg6[%c17, %c0_106] : memref<41x64xf32, #tpu.memory_space<vmem>>, vector<1x64xf32>
    %cst_107 = arith.constant dense<0.000000e+00> : vector<8xf32>
    %237 = vector.multi_reduction <add>, %234, %cst_107 [1] : vector<8x64xf32> to vector<8xf32>
    %238 = vector.shape_cast %237 : vector<8xf32> to vector<8x1xf32>
    %cst_108 = arith.constant 6.400000e+01 : f32
    %239 = vector.broadcast %cst_108 : f32 to vector<8x1xf32>
    %240 = arith.divf %238, %239 : vector<8x1xf32>
    %241 = vector.broadcast %240 : vector<8x1xf32> to vector<8x64xf32>
    %242 = arith.subf %234, %241 : vector<8x64xf32>
    %243 = arith.mulf %242, %242 : vector<8x64xf32>
    %cst_109 = arith.constant dense<0.000000e+00> : vector<8xf32>
    %244 = vector.multi_reduction <add>, %243, %cst_109 [1] : vector<8x64xf32> to vector<8xf32>
    %245 = vector.shape_cast %244 : vector<8xf32> to vector<8x1xf32>
    %cst_110 = arith.constant 6.400000e+01 : f32
    %246 = vector.broadcast %cst_110 : f32 to vector<8x1xf32>
    %247 = arith.divf %245, %246 : vector<8x1xf32>
    %248 = vector.broadcast %240 : vector<8x1xf32> to vector<8x64xf32>
    %249 = arith.subf %234, %248 : vector<8x64xf32>
    %cst_111 = arith.constant 9.99999974E-6 : f32
    %250 = vector.broadcast %cst_111 : f32 to vector<8x1xf32>
    %251 = arith.addf %247, %250 : vector<8x1xf32>
    %252 = math.rsqrt %251 : vector<8x1xf32>
    %253 = vector.broadcast %252 : vector<8x1xf32> to vector<8x64xf32>
    %254 = arith.mulf %249, %253 : vector<8x64xf32>
    %255 = vector.broadcast %235 : vector<1x64xf32> to vector<8x64xf32>
    %256 = arith.mulf %254, %255 : vector<8x64xf32>
    %257 = vector.broadcast %236 : vector<1x64xf32> to vector<8x64xf32>
    %258 = arith.addf %256, %257 : vector<8x64xf32>
    %c4_112 = arith.constant 4 : index
    %c0_113 = arith.constant 0 : index
    %c0_114 = arith.constant 0 : index
    %259 = vector.load %arg4[%c4_112, %c0_113, %c0_114] : memref<11x64x64xf32, #tpu.memory_space<vmem>>, vector<1x64x64xf32>
    %260 = vector.shape_cast %259 : vector<1x64x64xf32> to vector<64x64xf32>
    %cst_115 = arith.constant dense<0.000000e+00> : vector<8x64xf32>
    %261 = tpu.matmul %258, %260, %cst_115 {dimension_numbers = #tpu.dot_dimension_numbers<[1], [0], [0], [1], [0, 0, 1, 1], [], []>} : vector<8x64xf32>, vector<64x64xf32>, vector<8x64xf32> -> vector<8x64xf32>
    %c18 = arith.constant 18 : index
    %c0_116 = arith.constant 0 : index
    %262 = vector.load %arg6[%c18, %c0_116] : memref<41x64xf32, #tpu.memory_space<vmem>>, vector<1x64xf32>
    %263 = vector.broadcast %262 : vector<1x64xf32> to vector<8x64xf32>
    %264 = arith.addf %261, %263 : vector<8x64xf32>
    %cst_117 = arith.constant 0.000000e+00 : f32
    %265 = vector.broadcast %cst_117 : f32 to vector<8x64xf32>
    %266 = arith.maximumf %264, %265 : vector<8x64xf32>
    %c19 = arith.constant 19 : index
    %c0_118 = arith.constant 0 : index
    %267 = vector.load %arg6[%c19, %c0_118] : memref<41x64xf32, #tpu.memory_space<vmem>>, vector<1x64xf32>
    %c20 = arith.constant 20 : index
    %c0_119 = arith.constant 0 : index
    %268 = vector.load %arg6[%c20, %c0_119] : memref<41x64xf32, #tpu.memory_space<vmem>>, vector<1x64xf32>
    %cst_120 = arith.constant dense<0.000000e+00> : vector<8xf32>
    %269 = vector.multi_reduction <add>, %266, %cst_120 [1] : vector<8x64xf32> to vector<8xf32>
    %270 = vector.shape_cast %269 : vector<8xf32> to vector<8x1xf32>
    %cst_121 = arith.constant 6.400000e+01 : f32
    %271 = vector.broadcast %cst_121 : f32 to vector<8x1xf32>
    %272 = arith.divf %270, %271 : vector<8x1xf32>
    %273 = vector.broadcast %272 : vector<8x1xf32> to vector<8x64xf32>
    %274 = arith.subf %266, %273 : vector<8x64xf32>
    %275 = arith.mulf %274, %274 : vector<8x64xf32>
    %cst_122 = arith.constant dense<0.000000e+00> : vector<8xf32>
    %276 = vector.multi_reduction <add>, %275, %cst_122 [1] : vector<8x64xf32> to vector<8xf32>
    %277 = vector.shape_cast %276 : vector<8xf32> to vector<8x1xf32>
    %cst_123 = arith.constant 6.400000e+01 : f32
    %278 = vector.broadcast %cst_123 : f32 to vector<8x1xf32>
    %279 = arith.divf %277, %278 : vector<8x1xf32>
    %280 = vector.broadcast %272 : vector<8x1xf32> to vector<8x64xf32>
    %281 = arith.subf %266, %280 : vector<8x64xf32>
    %cst_124 = arith.constant 9.99999974E-6 : f32
    %282 = vector.broadcast %cst_124 : f32 to vector<8x1xf32>
    %283 = arith.addf %279, %282 : vector<8x1xf32>
    %284 = math.rsqrt %283 : vector<8x1xf32>
    %285 = vector.broadcast %284 : vector<8x1xf32> to vector<8x64xf32>
    %286 = arith.mulf %281, %285 : vector<8x64xf32>
    %287 = vector.broadcast %267 : vector<1x64xf32> to vector<8x64xf32>
    %288 = arith.mulf %286, %287 : vector<8x64xf32>
    %289 = vector.broadcast %268 : vector<1x64xf32> to vector<8x64xf32>
    %290 = arith.addf %288, %289 : vector<8x64xf32>
    %c5_125 = arith.constant 5 : index
    %c0_126 = arith.constant 0 : index
    %c0_127 = arith.constant 0 : index
    %291 = vector.load %arg4[%c5_125, %c0_126, %c0_127] : memref<11x64x64xf32, #tpu.memory_space<vmem>>, vector<1x64x64xf32>
    %292 = vector.shape_cast %291 : vector<1x64x64xf32> to vector<64x64xf32>
    %cst_128 = arith.constant dense<0.000000e+00> : vector<8x64xf32>
    %293 = tpu.matmul %290, %292, %cst_128 {dimension_numbers = #tpu.dot_dimension_numbers<[1], [0], [0], [1], [0, 0, 1, 1], [], []>} : vector<8x64xf32>, vector<64x64xf32>, vector<8x64xf32> -> vector<8x64xf32>
    %c21 = arith.constant 21 : index
    %c0_129 = arith.constant 0 : index
    %294 = vector.load %arg6[%c21, %c0_129] : memref<41x64xf32, #tpu.memory_space<vmem>>, vector<1x64xf32>
    %295 = vector.broadcast %294 : vector<1x64xf32> to vector<8x64xf32>
    %296 = arith.addf %293, %295 : vector<8x64xf32>
    %cst_130 = arith.constant 0.000000e+00 : f32
    %297 = vector.broadcast %cst_130 : f32 to vector<8x64xf32>
    %298 = arith.maximumf %296, %297 : vector<8x64xf32>
    %c22 = arith.constant 22 : index
    %c0_131 = arith.constant 0 : index
    %299 = vector.load %arg6[%c22, %c0_131] : memref<41x64xf32, #tpu.memory_space<vmem>>, vector<1x64xf32>
    %c23 = arith.constant 23 : index
    %c0_132 = arith.constant 0 : index
    %300 = vector.load %arg6[%c23, %c0_132] : memref<41x64xf32, #tpu.memory_space<vmem>>, vector<1x64xf32>
    %cst_133 = arith.constant dense<0.000000e+00> : vector<8xf32>
    %301 = vector.multi_reduction <add>, %298, %cst_133 [1] : vector<8x64xf32> to vector<8xf32>
    %302 = vector.shape_cast %301 : vector<8xf32> to vector<8x1xf32>
    %cst_134 = arith.constant 6.400000e+01 : f32
    %303 = vector.broadcast %cst_134 : f32 to vector<8x1xf32>
    %304 = arith.divf %302, %303 : vector<8x1xf32>
    %305 = vector.broadcast %304 : vector<8x1xf32> to vector<8x64xf32>
    %306 = arith.subf %298, %305 : vector<8x64xf32>
    %307 = arith.mulf %306, %306 : vector<8x64xf32>
    %cst_135 = arith.constant dense<0.000000e+00> : vector<8xf32>
    %308 = vector.multi_reduction <add>, %307, %cst_135 [1] : vector<8x64xf32> to vector<8xf32>
    %309 = vector.shape_cast %308 : vector<8xf32> to vector<8x1xf32>
    %cst_136 = arith.constant 6.400000e+01 : f32
    %310 = vector.broadcast %cst_136 : f32 to vector<8x1xf32>
    %311 = arith.divf %309, %310 : vector<8x1xf32>
    %312 = vector.broadcast %304 : vector<8x1xf32> to vector<8x64xf32>
    %313 = arith.subf %298, %312 : vector<8x64xf32>
    %cst_137 = arith.constant 9.99999974E-6 : f32
    %314 = vector.broadcast %cst_137 : f32 to vector<8x1xf32>
    %315 = arith.addf %311, %314 : vector<8x1xf32>
    %316 = math.rsqrt %315 : vector<8x1xf32>
    %317 = vector.broadcast %316 : vector<8x1xf32> to vector<8x64xf32>
    %318 = arith.mulf %313, %317 : vector<8x64xf32>
    %319 = vector.broadcast %299 : vector<1x64xf32> to vector<8x64xf32>
    %320 = arith.mulf %318, %319 : vector<8x64xf32>
    %321 = vector.broadcast %300 : vector<1x64xf32> to vector<8x64xf32>
    %322 = arith.addf %320, %321 : vector<8x64xf32>
    %323 = tpu.iota {dimensions = array<i32: 0>} : vector<8x1xi32>
    %c2_i32 = arith.constant 2 : i32
    %c0_i32 = arith.constant 0 : i32
    %324 = arith.cmpi eq, %c2_i32, %c0_i32 : i32
    %c1_i32 = arith.constant 1 : i32
    %325 = arith.select %324, %c1_i32, %c2_i32 : i32
    %326 = vector.broadcast %325 : i32 to vector<8x1xi32>
    %327 = arith.remsi %323, %326 : vector<8x1xi32>
    %c0_i32_138 = arith.constant 0 : i32
    %328 = vector.broadcast %c0_i32_138 : i32 to vector<8x1xi32>
    %329 = arith.cmpi ne, %327, %328 : vector<8x1xi32>
    %c0_i32_139 = arith.constant 0 : i32
    %330 = vector.broadcast %c0_i32_139 : i32 to vector<8x1xi32>
    %331 = arith.cmpi slt, %327, %330 : vector<8x1xi32>
    %c0_i32_140 = arith.constant 0 : i32
    %332 = arith.cmpi slt, %325, %c0_i32_140 : i32
    %333 = vector.broadcast %332 : i1 to vector<8x1xi1>
    %334 = vector.broadcast %333 : vector<8x1xi1> to vector<8x1xi1>
    %335 = arith.xori %331, %334 : vector<8x1xi1>
    %336 = arith.andi %335, %329 : vector<8x1xi1>
    %337 = vector.broadcast %325 : i32 to vector<8x1xi32>
    %338 = arith.addi %327, %337 : vector<8x1xi32>
    %339 = arith.select %336, %338, %327 : vector<8x1xi1>, vector<8x1xi32>
    %cst_141 = arith.constant 0.000000e+00 : f32
    %340 = vector.broadcast %cst_141 : f32 to vector<8x64xf32>
    %c0_i32_142 = arith.constant 0 : i32
    %341 = vector.broadcast %c0_i32_142 : i32 to vector<8x1xi32>
    %342 = arith.cmpi eq, %339, %341 : vector<8x1xi32>
    %343 = vector.shape_cast %342 : vector<8x1xi1> to vector<8x1xi1>
    %344 = vector.broadcast %343 : vector<8x1xi1> to vector<8x64xi1>
    %345 = arith.select %344, %322, %340 : vector<8x64xi1>, vector<8x64xf32>
    %c1_i32_143 = arith.constant 1 : i32
    %346 = tpu.dynamic_rotate %322 by %c1_i32_143 dim 0 : vector<8x64xf32>, i32 -> vector<8x64xf32>
    %c1_i32_144 = arith.constant 1 : i32
    %347 = vector.broadcast %c1_i32_144 : i32 to vector<8x1xi32>
    %348 = arith.cmpi eq, %339, %347 : vector<8x1xi32>
    %349 = vector.shape_cast %348 : vector<8x1xi1> to vector<8x1xi1>
    %350 = vector.broadcast %349 : vector<8x1xi1> to vector<8x64xi1>
    %351 = arith.select %350, %346, %345 : vector<8x64xi1>, vector<8x64xf32>
    %cst_145 = arith.constant 0.000000e+00 : f32
    %352 = vector.broadcast %cst_145 : f32 to vector<8x64xf32>
    %c7_i32 = arith.constant 7 : i32
    %353 = tpu.dynamic_rotate %322 by %c7_i32 dim 0 : vector<8x64xf32>, i32 -> vector<8x64xf32>
    %c0_i32_146 = arith.constant 0 : i32
    %354 = vector.broadcast %c0_i32_146 : i32 to vector<8x1xi32>
    %355 = arith.cmpi eq, %339, %354 : vector<8x1xi32>
    %356 = vector.shape_cast %355 : vector<8x1xi1> to vector<8x1xi1>
    %357 = vector.broadcast %356 : vector<8x1xi1> to vector<8x64xi1>
    %358 = arith.select %357, %353, %352 : vector<8x64xi1>, vector<8x64xf32>
    %c1_i32_147 = arith.constant 1 : i32
    %359 = vector.broadcast %c1_i32_147 : i32 to vector<8x1xi32>
    %360 = arith.cmpi eq, %339, %359 : vector<8x1xi32>
    %361 = vector.shape_cast %360 : vector<8x1xi1> to vector<8x1xi1>
    %362 = vector.broadcast %361 : vector<8x1xi1> to vector<8x64xi1>
    %363 = arith.select %362, %322, %358 : vector<8x64xi1>, vector<8x64xf32>
    %364 = tpu.concatenate %154, %170, %351, %363 in 1 : vector<8x64xf32>, vector<8x64xf32>, vector<8x64xf32>, vector<8x64xf32> -> vector<8x256xf32>
    %c152 = arith.constant 152 : index
    %c0_148 = arith.constant 0 : index
    %365 = vector.load %arg2[%c152, %c0_148] : memref<408x64xf32, #tpu.memory_space<vmem>>, vector<256x64xf32>
    %c4_149 = arith.constant 4 : index
    %c0_150 = arith.constant 0 : index
    %366 = vector.load %arg7[%c4_149, %c0_150] : memref<7x256xf32, #tpu.memory_space<vmem>>, vector<1x256xf32>
    %c5_151 = arith.constant 5 : index
    %c0_152 = arith.constant 0 : index
    %367 = vector.load %arg7[%c5_151, %c0_152] : memref<7x256xf32, #tpu.memory_space<vmem>>, vector<1x256xf32>
    %cst_153 = arith.constant dense<0.000000e+00> : vector<8xf32>
    %368 = vector.multi_reduction <add>, %364, %cst_153 [1] : vector<8x256xf32> to vector<8xf32>
    %369 = vector.shape_cast %368 : vector<8xf32> to vector<8x1xf32>
    %cst_154 = arith.constant 2.560000e+02 : f32
    %370 = vector.broadcast %cst_154 : f32 to vector<8x1xf32>
    %371 = arith.divf %369, %370 : vector<8x1xf32>
    %372 = vector.broadcast %371 : vector<8x1xf32> to vector<8x256xf32>
    %373 = arith.subf %364, %372 : vector<8x256xf32>
    %374 = arith.mulf %373, %373 : vector<8x256xf32>
    %cst_155 = arith.constant dense<0.000000e+00> : vector<8xf32>
    %375 = vector.multi_reduction <add>, %374, %cst_155 [1] : vector<8x256xf32> to vector<8xf32>
    %376 = vector.shape_cast %375 : vector<8xf32> to vector<8x1xf32>
    %cst_156 = arith.constant 2.560000e+02 : f32
    %377 = vector.broadcast %cst_156 : f32 to vector<8x1xf32>
    %378 = arith.divf %376, %377 : vector<8x1xf32>
    %379 = vector.broadcast %371 : vector<8x1xf32> to vector<8x256xf32>
    %380 = arith.subf %364, %379 : vector<8x256xf32>
    %cst_157 = arith.constant 9.99999974E-6 : f32
    %381 = vector.broadcast %cst_157 : f32 to vector<8x1xf32>
    %382 = arith.addf %378, %381 : vector<8x1xf32>
    %383 = math.rsqrt %382 : vector<8x1xf32>
    %384 = vector.broadcast %383 : vector<8x1xf32> to vector<8x256xf32>
    %385 = arith.mulf %380, %384 : vector<8x256xf32>
    %386 = vector.broadcast %366 : vector<1x256xf32> to vector<8x256xf32>
    %387 = arith.mulf %385, %386 : vector<8x256xf32>
    %388 = vector.broadcast %367 : vector<1x256xf32> to vector<8x256xf32>
    %389 = arith.addf %387, %388 : vector<8x256xf32>
    %cst_158 = arith.constant dense<0.000000e+00> : vector<8x64xf32>
    %390 = tpu.matmul %389, %365, %cst_158 {dimension_numbers = #tpu.dot_dimension_numbers<[1], [0], [0], [1], [0, 0, 1, 1], [], []>} : vector<8x256xf32>, vector<256x64xf32>, vector<8x64xf32> -> vector<8x64xf32>
    %c24 = arith.constant 24 : index
    %c0_159 = arith.constant 0 : index
    %391 = vector.load %arg6[%c24, %c0_159] : memref<41x64xf32, #tpu.memory_space<vmem>>, vector<1x64xf32>
    %392 = vector.broadcast %391 : vector<1x64xf32> to vector<8x64xf32>
    %393 = arith.addf %390, %392 : vector<8x64xf32>
    %cst_160 = arith.constant 0.000000e+00 : f32
    %394 = vector.broadcast %cst_160 : f32 to vector<8x64xf32>
    %395 = arith.maximumf %393, %394 : vector<8x64xf32>
    %c25 = arith.constant 25 : index
    %c0_161 = arith.constant 0 : index
    %396 = vector.load %arg6[%c25, %c0_161] : memref<41x64xf32, #tpu.memory_space<vmem>>, vector<1x64xf32>
    %c26 = arith.constant 26 : index
    %c0_162 = arith.constant 0 : index
    %397 = vector.load %arg6[%c26, %c0_162] : memref<41x64xf32, #tpu.memory_space<vmem>>, vector<1x64xf32>
    %cst_163 = arith.constant dense<0.000000e+00> : vector<8xf32>
    %398 = vector.multi_reduction <add>, %395, %cst_163 [1] : vector<8x64xf32> to vector<8xf32>
    %399 = vector.shape_cast %398 : vector<8xf32> to vector<8x1xf32>
    %cst_164 = arith.constant 6.400000e+01 : f32
    %400 = vector.broadcast %cst_164 : f32 to vector<8x1xf32>
    %401 = arith.divf %399, %400 : vector<8x1xf32>
    %402 = vector.broadcast %401 : vector<8x1xf32> to vector<8x64xf32>
    %403 = arith.subf %395, %402 : vector<8x64xf32>
    %404 = arith.mulf %403, %403 : vector<8x64xf32>
    %cst_165 = arith.constant dense<0.000000e+00> : vector<8xf32>
    %405 = vector.multi_reduction <add>, %404, %cst_165 [1] : vector<8x64xf32> to vector<8xf32>
    %406 = vector.shape_cast %405 : vector<8xf32> to vector<8x1xf32>
    %cst_166 = arith.constant 6.400000e+01 : f32
    %407 = vector.broadcast %cst_166 : f32 to vector<8x1xf32>
    %408 = arith.divf %406, %407 : vector<8x1xf32>
    %409 = vector.broadcast %401 : vector<8x1xf32> to vector<8x64xf32>
    %410 = arith.subf %395, %409 : vector<8x64xf32>
    %cst_167 = arith.constant 9.99999974E-6 : f32
    %411 = vector.broadcast %cst_167 : f32 to vector<8x1xf32>
    %412 = arith.addf %408, %411 : vector<8x1xf32>
    %413 = math.rsqrt %412 : vector<8x1xf32>
    %414 = vector.broadcast %413 : vector<8x1xf32> to vector<8x64xf32>
    %415 = arith.mulf %410, %414 : vector<8x64xf32>
    %416 = vector.broadcast %396 : vector<1x64xf32> to vector<8x64xf32>
    %417 = arith.mulf %415, %416 : vector<8x64xf32>
    %418 = vector.broadcast %397 : vector<1x64xf32> to vector<8x64xf32>
    %419 = arith.addf %417, %418 : vector<8x64xf32>
    %c6_168 = arith.constant 6 : index
    %c0_169 = arith.constant 0 : index
    %c0_170 = arith.constant 0 : index
    %420 = vector.load %arg4[%c6_168, %c0_169, %c0_170] : memref<11x64x64xf32, #tpu.memory_space<vmem>>, vector<1x64x64xf32>
    %421 = vector.shape_cast %420 : vector<1x64x64xf32> to vector<64x64xf32>
    %cst_171 = arith.constant dense<0.000000e+00> : vector<8x64xf32>
    %422 = tpu.matmul %419, %421, %cst_171 {dimension_numbers = #tpu.dot_dimension_numbers<[1], [0], [0], [1], [0, 0, 1, 1], [], []>} : vector<8x64xf32>, vector<64x64xf32>, vector<8x64xf32> -> vector<8x64xf32>
    %c27 = arith.constant 27 : index
    %c0_172 = arith.constant 0 : index
    %423 = vector.load %arg6[%c27, %c0_172] : memref<41x64xf32, #tpu.memory_space<vmem>>, vector<1x64xf32>
    %424 = vector.broadcast %423 : vector<1x64xf32> to vector<8x64xf32>
    %425 = arith.addf %422, %424 : vector<8x64xf32>
    %cst_173 = arith.constant 0.000000e+00 : f32
    %426 = vector.broadcast %cst_173 : f32 to vector<8x64xf32>
    %427 = arith.maximumf %425, %426 : vector<8x64xf32>
    %c28 = arith.constant 28 : index
    %c0_174 = arith.constant 0 : index
    %428 = vector.load %arg6[%c28, %c0_174] : memref<41x64xf32, #tpu.memory_space<vmem>>, vector<1x64xf32>
    %c29 = arith.constant 29 : index
    %c0_175 = arith.constant 0 : index
    %429 = vector.load %arg6[%c29, %c0_175] : memref<41x64xf32, #tpu.memory_space<vmem>>, vector<1x64xf32>
    %cst_176 = arith.constant dense<0.000000e+00> : vector<8xf32>
    %430 = vector.multi_reduction <add>, %427, %cst_176 [1] : vector<8x64xf32> to vector<8xf32>
    %431 = vector.shape_cast %430 : vector<8xf32> to vector<8x1xf32>
    %cst_177 = arith.constant 6.400000e+01 : f32
    %432 = vector.broadcast %cst_177 : f32 to vector<8x1xf32>
    %433 = arith.divf %431, %432 : vector<8x1xf32>
    %434 = vector.broadcast %433 : vector<8x1xf32> to vector<8x64xf32>
    %435 = arith.subf %427, %434 : vector<8x64xf32>
    %436 = arith.mulf %435, %435 : vector<8x64xf32>
    %cst_178 = arith.constant dense<0.000000e+00> : vector<8xf32>
    %437 = vector.multi_reduction <add>, %436, %cst_178 [1] : vector<8x64xf32> to vector<8xf32>
    %438 = vector.shape_cast %437 : vector<8xf32> to vector<8x1xf32>
    %cst_179 = arith.constant 6.400000e+01 : f32
    %439 = vector.broadcast %cst_179 : f32 to vector<8x1xf32>
    %440 = arith.divf %438, %439 : vector<8x1xf32>
    %441 = vector.broadcast %433 : vector<8x1xf32> to vector<8x64xf32>
    %442 = arith.subf %427, %441 : vector<8x64xf32>
    %cst_180 = arith.constant 9.99999974E-6 : f32
    %443 = vector.broadcast %cst_180 : f32 to vector<8x1xf32>
    %444 = arith.addf %440, %443 : vector<8x1xf32>
    %445 = math.rsqrt %444 : vector<8x1xf32>
    %446 = vector.broadcast %445 : vector<8x1xf32> to vector<8x64xf32>
    %447 = arith.mulf %442, %446 : vector<8x64xf32>
    %448 = vector.broadcast %428 : vector<1x64xf32> to vector<8x64xf32>
    %449 = arith.mulf %447, %448 : vector<8x64xf32>
    %450 = vector.broadcast %429 : vector<1x64xf32> to vector<8x64xf32>
    %451 = arith.addf %449, %450 : vector<8x64xf32>
    %c7_181 = arith.constant 7 : index
    %c0_182 = arith.constant 0 : index
    %c0_183 = arith.constant 0 : index
    %452 = vector.load %arg4[%c7_181, %c0_182, %c0_183] : memref<11x64x64xf32, #tpu.memory_space<vmem>>, vector<1x64x64xf32>
    %453 = vector.shape_cast %452 : vector<1x64x64xf32> to vector<64x64xf32>
    %cst_184 = arith.constant dense<0.000000e+00> : vector<8x64xf32>
    %454 = tpu.matmul %451, %453, %cst_184 {dimension_numbers = #tpu.dot_dimension_numbers<[1], [0], [0], [1], [0, 0, 1, 1], [], []>} : vector<8x64xf32>, vector<64x64xf32>, vector<8x64xf32> -> vector<8x64xf32>
    %c30 = arith.constant 30 : index
    %c0_185 = arith.constant 0 : index
    %455 = vector.load %arg6[%c30, %c0_185] : memref<41x64xf32, #tpu.memory_space<vmem>>, vector<1x64xf32>
    %456 = vector.broadcast %455 : vector<1x64xf32> to vector<8x64xf32>
    %457 = arith.addf %454, %456 : vector<8x64xf32>
    %cst_186 = arith.constant 0.000000e+00 : f32
    %458 = vector.broadcast %cst_186 : f32 to vector<8x64xf32>
    %459 = arith.maximumf %457, %458 : vector<8x64xf32>
    %c31 = arith.constant 31 : index
    %c0_187 = arith.constant 0 : index
    %460 = vector.load %arg6[%c31, %c0_187] : memref<41x64xf32, #tpu.memory_space<vmem>>, vector<1x64xf32>
    %c32_188 = arith.constant 32 : index
    %c0_189 = arith.constant 0 : index
    %461 = vector.load %arg6[%c32_188, %c0_189] : memref<41x64xf32, #tpu.memory_space<vmem>>, vector<1x64xf32>
    %cst_190 = arith.constant dense<0.000000e+00> : vector<8xf32>
    %462 = vector.multi_reduction <add>, %459, %cst_190 [1] : vector<8x64xf32> to vector<8xf32>
    %463 = vector.shape_cast %462 : vector<8xf32> to vector<8x1xf32>
    %cst_191 = arith.constant 6.400000e+01 : f32
    %464 = vector.broadcast %cst_191 : f32 to vector<8x1xf32>
    %465 = arith.divf %463, %464 : vector<8x1xf32>
    %466 = vector.broadcast %465 : vector<8x1xf32> to vector<8x64xf32>
    %467 = arith.subf %459, %466 : vector<8x64xf32>
    %468 = arith.mulf %467, %467 : vector<8x64xf32>
    %cst_192 = arith.constant dense<0.000000e+00> : vector<8xf32>
    %469 = vector.multi_reduction <add>, %468, %cst_192 [1] : vector<8x64xf32> to vector<8xf32>
    %470 = vector.shape_cast %469 : vector<8xf32> to vector<8x1xf32>
    %cst_193 = arith.constant 6.400000e+01 : f32
    %471 = vector.broadcast %cst_193 : f32 to vector<8x1xf32>
    %472 = arith.divf %470, %471 : vector<8x1xf32>
    %473 = vector.broadcast %465 : vector<8x1xf32> to vector<8x64xf32>
    %474 = arith.subf %459, %473 : vector<8x64xf32>
    %cst_194 = arith.constant 9.99999974E-6 : f32
    %475 = vector.broadcast %cst_194 : f32 to vector<8x1xf32>
    %476 = arith.addf %472, %475 : vector<8x1xf32>
    %477 = math.rsqrt %476 : vector<8x1xf32>
    %478 = vector.broadcast %477 : vector<8x1xf32> to vector<8x64xf32>
    %479 = arith.mulf %474, %478 : vector<8x64xf32>
    %480 = vector.broadcast %460 : vector<1x64xf32> to vector<8x64xf32>
    %481 = arith.mulf %479, %480 : vector<8x64xf32>
    %482 = vector.broadcast %461 : vector<1x64xf32> to vector<8x64xf32>
    %483 = arith.addf %481, %482 : vector<8x64xf32>
    %c8_195 = arith.constant 8 : index
    %c0_196 = arith.constant 0 : index
    %c0_197 = arith.constant 0 : index
    %484 = vector.load %arg4[%c8_195, %c0_196, %c0_197] : memref<11x64x64xf32, #tpu.memory_space<vmem>>, vector<1x64x64xf32>
    %485 = vector.shape_cast %484 : vector<1x64x64xf32> to vector<64x64xf32>
    %cst_198 = arith.constant dense<0.000000e+00> : vector<8x64xf32>
    %486 = tpu.matmul %483, %485, %cst_198 {dimension_numbers = #tpu.dot_dimension_numbers<[1], [0], [0], [1], [0, 0, 1, 1], [], []>} : vector<8x64xf32>, vector<64x64xf32>, vector<8x64xf32> -> vector<8x64xf32>
    %c33 = arith.constant 33 : index
    %c0_199 = arith.constant 0 : index
    %487 = vector.load %arg6[%c33, %c0_199] : memref<41x64xf32, #tpu.memory_space<vmem>>, vector<1x64xf32>
    %488 = vector.broadcast %487 : vector<1x64xf32> to vector<8x64xf32>
    %489 = arith.addf %486, %488 : vector<8x64xf32>
    %cst_200 = arith.constant 0.000000e+00 : f32
    %490 = vector.broadcast %cst_200 : f32 to vector<8x64xf32>
    %491 = arith.maximumf %489, %490 : vector<8x64xf32>
    %c34 = arith.constant 34 : index
    %c0_201 = arith.constant 0 : index
    %492 = vector.load %arg6[%c34, %c0_201] : memref<41x64xf32, #tpu.memory_space<vmem>>, vector<1x64xf32>
    %c35 = arith.constant 35 : index
    %c0_202 = arith.constant 0 : index
    %493 = vector.load %arg6[%c35, %c0_202] : memref<41x64xf32, #tpu.memory_space<vmem>>, vector<1x64xf32>
    %cst_203 = arith.constant dense<0.000000e+00> : vector<8xf32>
    %494 = vector.multi_reduction <add>, %491, %cst_203 [1] : vector<8x64xf32> to vector<8xf32>
    %495 = vector.shape_cast %494 : vector<8xf32> to vector<8x1xf32>
    %cst_204 = arith.constant 6.400000e+01 : f32
    %496 = vector.broadcast %cst_204 : f32 to vector<8x1xf32>
    %497 = arith.divf %495, %496 : vector<8x1xf32>
    %498 = vector.broadcast %497 : vector<8x1xf32> to vector<8x64xf32>
    %499 = arith.subf %491, %498 : vector<8x64xf32>
    %500 = arith.mulf %499, %499 : vector<8x64xf32>
    %cst_205 = arith.constant dense<0.000000e+00> : vector<8xf32>
    %501 = vector.multi_reduction <add>, %500, %cst_205 [1] : vector<8x64xf32> to vector<8xf32>
    %502 = vector.shape_cast %501 : vector<8xf32> to vector<8x1xf32>
    %cst_206 = arith.constant 6.400000e+01 : f32
    %503 = vector.broadcast %cst_206 : f32 to vector<8x1xf32>
    %504 = arith.divf %502, %503 : vector<8x1xf32>
    %505 = vector.broadcast %497 : vector<8x1xf32> to vector<8x64xf32>
    %506 = arith.subf %491, %505 : vector<8x64xf32>
    %cst_207 = arith.constant 9.99999974E-6 : f32
    %507 = vector.broadcast %cst_207 : f32 to vector<8x1xf32>
    %508 = arith.addf %504, %507 : vector<8x1xf32>
    %509 = math.rsqrt %508 : vector<8x1xf32>
    %510 = vector.broadcast %509 : vector<8x1xf32> to vector<8x64xf32>
    %511 = arith.mulf %506, %510 : vector<8x64xf32>
    %512 = vector.broadcast %492 : vector<1x64xf32> to vector<8x64xf32>
    %513 = arith.mulf %511, %512 : vector<8x64xf32>
    %514 = vector.broadcast %493 : vector<1x64xf32> to vector<8x64xf32>
    %515 = arith.addf %513, %514 : vector<8x64xf32>
    %516 = vector.broadcast %2 : vector<8x1xf32> to vector<8x64xf32>
    %517 = arith.mulf %3, %516 : vector<8x64xf32>
    %518 = tpu.concatenate %515, %517 in 1 : vector<8x64xf32>, vector<8x64xf32> -> vector<8x128xf32>
    %c0_208 = arith.constant 0 : index
    %c0_209 = arith.constant 0 : index
    %519 = vector.load %arg5[%c0_208, %c0_209] : memref<128x256xf32, #tpu.memory_space<vmem>>, vector<128x256xf32>
    %cst_210 = arith.constant dense<0.000000e+00> : vector<8x256xf32>
    %520 = tpu.matmul %518, %519, %cst_210 {dimension_numbers = #tpu.dot_dimension_numbers<[1], [0], [0], [1], [0, 0, 1, 1], [], []>} : vector<8x128xf32>, vector<128x256xf32>, vector<8x256xf32> -> vector<8x256xf32>
    %c6_211 = arith.constant 6 : index
    %c0_212 = arith.constant 0 : index
    %521 = vector.load %arg7[%c6_211, %c0_212] : memref<7x256xf32, #tpu.memory_space<vmem>>, vector<1x256xf32>
    %522 = vector.broadcast %521 : vector<1x256xf32> to vector<8x256xf32>
    %523 = arith.addf %520, %522 : vector<8x256xf32>
    %524 = vector.extract_strided_slice %523 {offsets = [0, 0], sizes = [8, 64], strides = [1, 1]} : vector<8x256xf32> to vector<8x64xf32>
    %525 = arith.negf %524 : vector<8x64xf32>
    %526 = math.exp %525 : vector<8x64xf32>
    %cst_213 = arith.constant 1.000000e+00 : f32
    %527 = vector.broadcast %cst_213 : f32 to vector<8x64xf32>
    %528 = arith.addf %527, %526 : vector<8x64xf32>
    %529 = arith.divf %527, %528 : vector<8x64xf32>
    %530 = vector.extract_strided_slice %523 {offsets = [0, 64], sizes = [8, 64], strides = [1, 1]} : vector<8x256xf32> to vector<8x64xf32>
    %531 = arith.negf %530 : vector<8x64xf32>
    %532 = math.exp %531 : vector<8x64xf32>
    %cst_214 = arith.constant 1.000000e+00 : f32
    %533 = vector.broadcast %cst_214 : f32 to vector<8x64xf32>
    %534 = arith.addf %533, %532 : vector<8x64xf32>
    %535 = arith.divf %533, %534 : vector<8x64xf32>
    %536 = vector.extract_strided_slice %523 {offsets = [0, 128], sizes = [8, 64], strides = [1, 1]} : vector<8x256xf32> to vector<8x64xf32>
    %537 = vector.extract_strided_slice %523 {offsets = [0, 192], sizes = [8, 64], strides = [1, 1]} : vector<8x256xf32> to vector<8x64xf32>
    %538 = arith.mulf %529, %537 : vector<8x64xf32>
    %539 = arith.addf %536, %538 : vector<8x64xf32>
    %540 = math.tanh %539 : vector<8x64xf32>
    %cst_215 = arith.constant 1.000000e+00 : f32
    %541 = vector.broadcast %cst_215 : f32 to vector<8x64xf32>
    %542 = arith.subf %541, %535 : vector<8x64xf32>
    %543 = arith.mulf %542, %540 : vector<8x64xf32>
    %544 = arith.mulf %535, %517 : vector<8x64xf32>
    %545 = arith.addf %543, %544 : vector<8x64xf32>
    %c38 = arith.constant 38 : index
    %c0_216 = arith.constant 0 : index
    %546 = vector.load %arg6[%c38, %c0_216] : memref<41x64xf32, #tpu.memory_space<vmem>>, vector<1x64xf32>
    %c39 = arith.constant 39 : index
    %c0_217 = arith.constant 0 : index
    %547 = vector.load %arg6[%c39, %c0_217] : memref<41x64xf32, #tpu.memory_space<vmem>>, vector<1x64xf32>
    %cst_218 = arith.constant dense<0.000000e+00> : vector<8xf32>
    %548 = vector.multi_reduction <add>, %545, %cst_218 [1] : vector<8x64xf32> to vector<8xf32>
    %549 = vector.shape_cast %548 : vector<8xf32> to vector<8x1xf32>
    %cst_219 = arith.constant 6.400000e+01 : f32
    %550 = vector.broadcast %cst_219 : f32 to vector<8x1xf32>
    %551 = arith.divf %549, %550 : vector<8x1xf32>
    %552 = vector.broadcast %551 : vector<8x1xf32> to vector<8x64xf32>
    %553 = arith.subf %545, %552 : vector<8x64xf32>
    %554 = arith.mulf %553, %553 : vector<8x64xf32>
    %cst_220 = arith.constant dense<0.000000e+00> : vector<8xf32>
    %555 = vector.multi_reduction <add>, %554, %cst_220 [1] : vector<8x64xf32> to vector<8xf32>
    %556 = vector.shape_cast %555 : vector<8xf32> to vector<8x1xf32>
    %cst_221 = arith.constant 6.400000e+01 : f32
    %557 = vector.broadcast %cst_221 : f32 to vector<8x1xf32>
    %558 = arith.divf %556, %557 : vector<8x1xf32>
    %559 = vector.broadcast %551 : vector<8x1xf32> to vector<8x64xf32>
    %560 = arith.subf %545, %559 : vector<8x64xf32>
    %cst_222 = arith.constant 9.99999974E-6 : f32
    %561 = vector.broadcast %cst_222 : f32 to vector<8x1xf32>
    %562 = arith.addf %558, %561 : vector<8x1xf32>
    %563 = math.rsqrt %562 : vector<8x1xf32>
    %564 = vector.broadcast %563 : vector<8x1xf32> to vector<8x64xf32>
    %565 = arith.mulf %560, %564 : vector<8x64xf32>
    %566 = vector.broadcast %546 : vector<1x64xf32> to vector<8x64xf32>
    %567 = arith.mulf %565, %566 : vector<8x64xf32>
    %568 = vector.broadcast %547 : vector<1x64xf32> to vector<8x64xf32>
    %569 = arith.addf %567, %568 : vector<8x64xf32>
    %c10_223 = arith.constant 10 : index
    %c0_224 = arith.constant 0 : index
    %c0_225 = arith.constant 0 : index
    %570 = vector.load %arg4[%c10_223, %c0_224, %c0_225] : memref<11x64x64xf32, #tpu.memory_space<vmem>>, vector<1x64x64xf32>
    %571 = vector.shape_cast %570 : vector<1x64x64xf32> to vector<64x64xf32>
    %cst_226 = arith.constant dense<0.000000e+00> : vector<8x64xf32>
    %572 = tpu.matmul %569, %571, %cst_226 {dimension_numbers = #tpu.dot_dimension_numbers<[1], [0], [0], [1], [0, 0, 1, 1], [], []>} : vector<8x64xf32>, vector<64x64xf32>, vector<8x64xf32> -> vector<8x64xf32>
    %c40 = arith.constant 40 : index
    %c0_227 = arith.constant 0 : index
    %573 = vector.load %arg6[%c40, %c0_227] : memref<41x64xf32, #tpu.memory_space<vmem>>, vector<1x64xf32>
    %574 = vector.broadcast %573 : vector<1x64xf32> to vector<8x64xf32>
    %575 = arith.addf %572, %574 : vector<8x64xf32>
    %576 = tpu.concatenate %545, %575 in 1 : vector<8x64xf32>, vector<8x64xf32> -> vector<8x128xf32>
    %c0_228 = arith.constant 0 : index
    %c0_229 = arith.constant 0 : index
    %577 = vector.load %arg8[%c0_228, %c0_229] : memref<8x128xf32, #tpu.memory_space<vmem>>, vector<8x128xf32>
    tpu.vector_store %arg8[%c0_228, %c0_229], %576 {strides = array<i32>} : memref<8x128xf32, #tpu.memory_space<vmem>>, vector<8x128xf32>,
    return
  }
}

</mosaic_0001>

<llo_original>
// kernel: r_cnn_critic_forward.1
$region0: #{r_cnn_critic_forward.1}
  #allocation0 [shape = 'u32[]', space=smem, size = 0x4, offset = 0x4, fixed_abs, tag = 'smem constant byte address 0x4 - core index']
  #allocation1 [shape = 'u32[144,128]{1,0:T(1,128)}', space=vmem, size = 0x12000, scoped, tag = 'internal scratch']
  %s0 = inlined_call_operand.vmem [shape: f32[8,128], index: 0, kind: input, shape index: {}]
  %s1 = inlined_call_operand.vmem [shape: f32[8,1152], index: 1, kind: input, shape index: {}]
  %s2 = inlined_call_operand.vmem [shape: f32[408,64], index: 2, kind: input, shape index: {}]
  %s3 = inlined_call_operand.vmem [shape: f32[1152,64], index: 3, kind: input, shape index: {}]
  %s4 = inlined_call_operand.vmem [shape: f32[11,64,64], index: 4, kind: input, shape index: {}]
  %s5 = inlined_call_operand.vmem [shape: f32[128,256], index: 5, kind: input, shape index: {}]
  %s6 = inlined_call_operand.vmem [shape: f32[41,64], index: 6, kind: input, shape index: {}]
  %s7 = inlined_call_operand.vmem [shape: f32[7,256], index: 7, kind: input, shape index: {}]
  %s8 = inlined_call_operand.vmem [shape: f32[8,128], index: 8, kind: output, shape index: {}]
  %s9 = sld [smem:[#allocation0]]
  $region42: #{r_cnn_critic_forward.1} parent=0
    _
  %s11 = ssub.s32 1, %s9
  %s12 = scalar_select 0, %s11, %s9
  // Predicated region
  $region2: #{r_cnn_critic_forward.1} parent=0 // pred_check
    _
  $region3: #{r_cnn_critic_forward.1} parent=0 // pred_check_branch
    %14 = sbr.rel (0) target = $region5
  $region4: #{r_cnn_critic_forward.1} parent=0 // pred_region
    _
  $region5: #{r_cnn_critic_forward.1} parent=0 // pred_fallthru
    _
  // Predicated region
  $region6: #{r_cnn_critic_forward.1} parent=0 // pred_check
    _
  $region7: #{r_cnn_critic_forward.1} parent=0 // pred_check_branch
    %16 = sbr.rel (0) target = $region9
  $region8: #{r_cnn_critic_forward.1} parent=0 // pred_region
    _
  $region9: #{r_cnn_critic_forward.1} parent=0 // pred_fallthru
    _
  // Predicated region
  $region10: #{r_cnn_critic_forward.1} parent=0 // pred_check
    _
  $region11: #{r_cnn_critic_forward.1} parent=0 // pred_check_branch
    %18 = sbr.rel (0) target = $region13
  $region12: #{r_cnn_critic_forward.1} parent=0 // pred_region
    _
  $region13: #{r_cnn_critic_forward.1} parent=0 // pred_fallthru
    _
  // Predicated region
  $region14: #{r_cnn_critic_forward.1} parent=0 // pred_check
    _
  $region15: #{r_cnn_critic_forward.1} parent=0 // pred_check_branch
    %20 = sbr.rel (0) target = $region17
  $region16: #{r_cnn_critic_forward.1} parent=0 // pred_region
    _
  $region17: #{r_cnn_critic_forward.1} parent=0 // pred_fallthru
    _
  // Predicated region
  $region18: #{r_cnn_critic_forward.1} parent=0 // pred_check
    _
  $region19: #{r_cnn_critic_forward.1} parent=0 // pred_check_branch
    %22 = sbr.rel (0) target = $region21
  $region20: #{r_cnn_critic_forward.1} parent=0 // pred_region
    _
  $region21: #{r_cnn_critic_forward.1} parent=0 // pred_fallthru
    _
  // Predicated region
  $region22: #{r_cnn_critic_forward.1} parent=0 // pred_check
    _
  $region23: #{r_cnn_critic_forward.1} parent=0 // pred_check_branch
    %24 = sbr.rel (0) target = $region25
  $region24: #{r_cnn_critic_forward.1} parent=0 // pred_region
    _
  $region25: #{r_cnn_critic_forward.1} parent=0 // pred_fallthru
    _
  // Predicated region
  $region26: #{r_cnn_critic_forward.1} parent=0 // pred_check
    _
  $region27: #{r_cnn_critic_forward.1} parent=0 // pred_check_branch
    %26 = sbr.rel (0) target = $region29
  $region28: #{r_cnn_critic_forward.1} parent=0 // pred_region
    _
  $region29: #{r_cnn_critic_forward.1} parent=0 // pred_fallthru
    _
  // Predicated region
  $region30: #{r_cnn_critic_forward.1} parent=0 // pred_check
    _
  $region31: #{r_cnn_critic_forward.1} parent=0 // pred_check_branch
    %28 = sbr.rel (0) target = $region33
  $region32: #{r_cnn_critic_forward.1} parent=0 // pred_region
    _
  $region33: #{r_cnn_critic_forward.1} parent=0 // pred_fallthru
    _
  %v29 = vld [vmem:[%s0] sm:$0xff]
  %v30 = vld [vmem:[%s2] sm:$0xff]
  %v31 = vld [vmem:[%s2 + $0x8] sm:$0x3]
  %v32 = vld [vmem:[%s7] ss:$0 sm:$0xff]
  %v33 = vld [vmem:[%s7 + $0x1] ss:$0 sm:$0xff]
  %vm34 = vcmask 80896
  %v35 = vsel %vm34, %v29, 0.0
  %36 = vadd.xlane.f32.xlu0 %v35
  %v37 = vpop.xlane.xlu0 %36
  %v38 = vrcp.pop 10.0
  %v39 = vmul.f32 %v37, %v38
  %v40 = vsub.f32 %v29, %v39
  %v41 = vmul.f32 %v40, %v40
  %v42 = vsel %vm34, %v41, 0.0
  %43 = vadd.xlane.f32.xlu0 %v42
  %v44 = vpop.xlane.xlu0 %43
  %v45 = vmul.f32 %v44, %v38
  %v46 = vadd.f32 %v45, 1e-05
  %v47 = vrsqrt.pop %v46
  %v48 = vmul.f32 %v40, %v47
  %v49 = vmul.f32 %v48, %v32
  %v50 = vadd.f32 %v49, %v33
  %v51 = vld [vmem:[%s6] sm:$0x1]
  %v52 = vlaneseq
  %v53 = vshrl.u32 %v52, 7
  %v54 = vsub.s32 0, %v53
  %v55 = vrot.slane %v51, %v54
  %v57 = vsel %vm34, %v50, 0
  %vm59 = vcmask 1041408
  %v61 = vsel %vm59, %v31, 0
  %63 = vmatprep.subr.mxu0 0.0
  %64 = vmatpush1.msra.mxu0 %v30
  %65 = vmatprep.subr.mxu0 0.0
  %66 = vmatpush1.msra.mxu0 %v61
  %67 = vmatprep.subr.mxu0 0.0
  %68 = vmatpush1.msra.mxu0 0.0
  %69 = vmatprep.subr.mxu0 0.0
  %70 = vmatpush1.msra.mxu0 0.0
  %71 = vmatprep.subr.mxu0 0.0
  %72 = vmatpush1.msra.mxu0 0.0
  %73 = vmatprep.subr.mxu0 0.0
  %74 = vmatpush1.msra.mxu0 0.0
  %75 = vmatprep.subr.mxu0 0.0
  %76 = vmatpush1.msra.mxu0 0.0
  %77 = vmatprep.subr.mxu0 0.0
  %78 = vmatpush1.msra.mxu0 0.0
  %79 = vmatprep.subr.mxu0 0.0
  %80 = vmatpush1.msra.mxu0 0.0
  %81 = vmatprep.subr.mxu0 0.0
  %82 = vmatpush1.msra.mxu0 0.0
  %83 = vmatprep.subr.mxu0 0.0
  %84 = vmatpush1.msra.mxu0 0.0
  %85 = vmatprep.subr.mxu0 0.0
  %86 = vmatpush1.msra.mxu0 0.0
  %87 = vmatprep.subr.mxu0 0.0
  %88 = vmatpush1.msra.mxu0 0.0
  %89 = vmatprep.subr.mxu0 0.0
  %90 = vmatpush1.msra.mxu0 0.0
  %91 = vmatprep.subr.mxu0 0.0
  %92 = vmatpush1.msra.mxu0 0.0
  %93 = vmatprep.subr.mxu0 0.0
  %94 = vmatpush1.msra.mxu0 0.0
  %95 = vmatprep.subr.mxu0 0.0
  %96 = vmatpush1.msra.mxu0 0.0
  %97 = vmatprep.subr.mxu0 0.0
  %98 = vmatpush1.msra.mxu0 0.0
  %99 = vmatprep.subr.mxu0 0.0
  %100 = vmatpush1.msra.mxu0 0.0
  %101 = vmatprep.subr.mxu0 0.0
  %102 = vmatpush1.msra.mxu0 0.0
  %103 = vmatprep.subr.mxu0 0.0
  %104 = vmatpush1.msra.mxu0 0.0
  %105 = vmatprep.subr.mxu0 0.0
  %106 = vmatpush1.msra.mxu0 0.0
  %107 = vmatprep.subr.mxu0 0.0
  %108 = vmatpush1.msra.mxu0 0.0
  %109 = vmatprep.subr.mxu0 0.0
  %110 = vmatpush1.msra.mxu0 0.0
  %111 = vmatprep.subr.mxu0 0.0
  %112 = vmatpush1.msra.mxu0 0.0
  %113 = vmatprep.subr.mxu0 0.0
  %114 = vmatpush1.msra.mxu0 0.0
  %115 = vmatprep.subr.mxu0 0.0
  %116 = vmatpush1.msra.mxu0 0.0
  %117 = vmatprep.subr.mxu0 0.0
  %118 = vmatpush1.msra.mxu0 0.0
  %119 = vmatprep.subr.mxu0 0.0
  %120 = vmatpush1.msra.mxu0 0.0
  %121 = vmatprep.subr.mxu0 0.0
  %122 = vmatpush1.msra.mxu0 0.0
  %123 = vmatprep.subr.mxu0 0.0
  %124 = vmatpush1.msra.mxu0 0.0
  %125 = vmatprep.subr.mxu0 0.0
  %126 = vmatpush1.msra.mxu0 0.0
  %127 = vmatprep.mubr.f32.mxu0 0.0
  %128 = vmatmul.mubr.f32.gmra.mrb[0].mxu0 %v57
  %v129 = vpop.f32.mrb[0].mxu0
  %v130 = vadd.f32 %v55, %v129
  %v131 = vpop.f32.mrb[0].mxu0
  %132 = vdwg.mxu0
  %v133 = vmax.f32 %v130, 0.0
  %v134 = vld [vmem:[%s6 + $0x1] sm:$0x1]
  %v135 = vld [vmem:[%s6 + $0x2] sm:$0x1]
  %vm136 = vcmask 523264
  %v137 = vsel %vm136, %v133, 0.0
  %138 = vadd.xlane.f32.xlu0 %v137
  %v139 = vpop.xlane.xlu0 %138
  %v140 = vrcp.pop 64.0
  %v141 = vmul.f32 %v139, %v140
  %v142 = vsub.f32 %v133, %v141
  %v143 = vmul.f32 %v142, %v142
  %v144 = vsel %vm136, %v143, 0.0
  %145 = vadd.xlane.f32.xlu0 %v144
  %v146 = vpop.xlane.xlu0 %145
  %v147 = vmul.f32 %v146, %v140
  %v148 = vadd.f32 %v147, 1e-05
  %v149 = vrsqrt.pop %v148
  %v150 = vmul.f32 %v142, %v149
  %v151 = vlaneseq
  %v152 = vshrl.u32 %v151, 7
  %v153 = vsub.s32 0, %v152
  %v154 = vrot.slane %v134, %v153
  %v155 = vmul.f32 %v150, %v154
  %v156 = vlaneseq
  %v157 = vshrl.u32 %v156, 7
  %v158 = vsub.s32 0, %v157
  %v159 = vrot.slane %v135, %v158
  %v160 = vadd.f32 %v155, %v159
  %v161 = vld [vmem:[%s4] sm:$0xff]
  %v162 = vld [vmem:[%s4 + $0x8] sm:$0xff]
  %v163 = vld [vmem:[%s4 + $0x10] sm:$0xff]
  %v164 = vld [vmem:[%s4 + $0x18] sm:$0xff]
  %v165 = vld [vmem:[%s4 + $0x20] sm:$0xff]
  %v166 = vld [vmem:[%s4 + $0x28] sm:$0xff]
  %v167 = vld [vmem:[%s4 + $0x30] sm:$0xff]
  %v168 = vld [vmem:[%s4 + $0x38] sm:$0xff]
  %v169 = vld [vmem:[%s6 + $0x3] sm:$0x1]
  %v170 = vlaneseq
  %v171 = vshrl.u32 %v170, 7
  %v172 = vsub.s32 0, %v171
  %v173 = vrot.slane %v169, %v172
  %v175 = vsel %vm136, %v160, 0
  %177 = vmatprep.subr.mxu0 0.0
  %178 = vmatpush1.msra.mxu0 %v161
  %179 = vmatprep.subr.mxu0 0.0
  %180 = vmatpush1.msra.mxu0 %v162
  %181 = vmatprep.subr.mxu0 0.0
  %182 = vmatpush1.msra.mxu0 %v163
  %183 = vmatprep.subr.mxu0 0.0
  %184 = vmatpush1.msra.mxu0 %v164
  %185 = vmatprep.subr.mxu0 0.0
  %186 = vmatpush1.msra.mxu0 %v165
  %187 = vmatprep.subr.mxu0 0.0
  %188 = vmatpush1.msra.mxu0 %v166
  %189 = vmatprep.subr.mxu0 0.0
  %190 = vmatpush1.msra.mxu0 %v167
  %191 = vmatprep.subr.mxu0 0.0
  %192 = vmatpush1.msra.mxu0 %v168
  %193 = vmatprep.subr.mxu0 0.0
  %194 = vmatpush1.msra.mxu0 0.0
  %195 = vmatprep.subr.mxu0 0.0
  %196 = vmatpush1.msra.mxu0 0.0
  %197 = vmatprep.subr.mxu0 0.0
  %198 = vmatpush1.msra.mxu0 0.0
  %199 = vmatprep.subr.mxu0 0.0
  %200 = vmatpush1.msra.mxu0 0.0
  %201 = vmatprep.subr.mxu0 0.0
  %202 = vmatpush1.msra.mxu0 0.0
  %203 = vmatprep.subr.mxu0 0.0
  %204 = vmatpush1.msra.mxu0 0.0
  %205 = vmatprep.subr.mxu0 0.0
  %206 = vmatpush1.msra.mxu0 0.0
  %207 = vmatprep.subr.mxu0 0.0
  %208 = vmatpush1.msra.mxu0 0.0
  %209 = vmatprep.subr.mxu0 0.0
  %210 = vmatpush1.msra.mxu0 0.0
  %211 = vmatprep.subr.mxu0 0.0
  %212 = vmatpush1.msra.mxu0 0.0
  %213 = vmatprep.subr.mxu0 0.0
  %214 = vmatpush1.msra.mxu0 0.0
  %215 = vmatprep.subr.mxu0 0.0
  %216 = vmatpush1.msra.mxu0 0.0
  %217 = vmatprep.subr.mxu0 0.0
  %218 = vmatpush1.msra.mxu0 0.0
  %219 = vmatprep.subr.mxu0 0.0
  %220 = vmatpush1.msra.mxu0 0.0
  %221 = vmatprep.subr.mxu0 0.0
  %222 = vmatpush1.msra.mxu0 0.0
  %223 = vmatprep.subr.mxu0 0.0
  %224 = vmatpush1.msra.mxu0 0.0
  %225 = vmatprep.subr.mxu0 0.0
  %226 = vmatpush1.msra.mxu0 0.0
  %227 = vmatprep.subr.mxu0 0.0
  %228 = vmatpush1.msra.mxu0 0.0
  %229 = vmatprep.subr.mxu0 0.0
  %230 = vmatpush1.msra.mxu0 0.0
  %231 = vmatprep.subr.mxu0 0.0
  %232 = vmatpush1.msra.mxu0 0.0
  %233 = vmatprep.subr.mxu0 0.0
  %234 = vmatpush1.msra.mxu0 0.0
  %235 = vmatprep.subr.mxu0 0.0
  %236 = vmatpush1.msra.mxu0 0.0
  %237 = vmatprep.subr.mxu0 0.0
  %238 = vmatpush1.msra.mxu0 0.0
  %239 = vmatprep.subr.mxu0 0.0
  %240 = vmatpush1.msra.mxu0 0.0
  %241 = vmatprep.mubr.f32.mxu0 0.0
  %242 = vmatmul.mubr.f32.gmra.mrb[0].mxu0 %v175
  %v243 = vpop.f32.mrb[0].mxu0
  %v244 = vadd.f32 %v173, %v243
  %v245 = vpop.f32.mrb[0].mxu0
  %246 = vdwg.mxu0
  %v247 = vmax.f32 %v244, 0.0
  %v248 = vld [vmem:[%s6 + $0x4] sm:$0x1]
  %v249 = vld [vmem:[%s6 + $0x5] sm:$0x1]
  %v250 = vsel %vm136, %v247, 0.0
  %251 = vadd.xlane.f32.xlu0 %v250
  %v252 = vpop.xlane.xlu0 %251
  %v253 = vmul.f32 %v252, %v140
  %v254 = vsub.f32 %v247, %v253
  %v255 = vmul.f32 %v254, %v254
  %v256 = vsel %vm136, %v255, 0.0
  %257 = vadd.xlane.f32.xlu0 %v256
  %v258 = vpop.xlane.xlu0 %257
  %v259 = vmul.f32 %v258, %v140
  %v260 = vadd.f32 %v259, 1e-05
  %v261 = vrsqrt.pop %v260
  %v262 = vmul.f32 %v254, %v261
  %v263 = vlaneseq
  %v264 = vshrl.u32 %v263, 7
  %v265 = vsub.s32 0, %v264
  %v266 = vrot.slane %v248, %v265
  %v267 = vmul.f32 %v262, %v266
  %v268 = vlaneseq
  %v269 = vshrl.u32 %v268, 7
  %v270 = vsub.s32 0, %v269
  %v271 = vrot.slane %v249, %v270
  %v272 = vadd.f32 %v267, %v271
  %s273 = scalar_lea.vmem %s4, 64
  %v274 = vld [vmem:[%s273] sm:$0xff]
  %v275 = vld [vmem:[%s273 + $0x8] sm:$0xff]
  %v276 = vld [vmem:[%s273 + $0x10] sm:$0xff]
  %v277 = vld [vmem:[%s273 + $0x18] sm:$0xff]
  %v278 = vld [vmem:[%s273 + $0x20] sm:$0xff]
  %v279 = vld [vmem:[%s273 + $0x28] sm:$0xff]
  %v280 = vld [vmem:[%s273 + $0x30] sm:$0xff]
  %v281 = vld [vmem:[%s273 + $0x38] sm:$0xff]
  %v282 = vld [vmem:[%s6 + $0x6] sm:$0x1]
  %v283 = vlaneseq
  %v284 = vshrl.u32 %v283, 7
  %v285 = vsub.s32 0, %v284
  %v286 = vrot.slane %v282, %v285
  %v288 = vsel %vm136, %v272, 0
  %290 = vmatprep.subr.mxu0 0.0
  %291 = vmatpush1.msra.mxu0 %v274
  %292 = vmatprep.subr.mxu0 0.0
  %293 = vmatpush1.msra.mxu0 %v275
  %294 = vmatprep.subr.mxu0 0.0
  %295 = vmatpush1.msra.mxu0 %v276
  %296 = vmatprep.subr.mxu0 0.0
  %297 = vmatpush1.msra.mxu0 %v277
  %298 = vmatprep.subr.mxu0 0.0
  %299 = vmatpush1.msra.mxu0 %v278
  %300 = vmatprep.subr.mxu0 0.0
  %301 = vmatpush1.msra.mxu0 %v279
  %302 = vmatprep.subr.mxu0 0.0
  %303 = vmatpush1.msra.mxu0 %v280
  %304 = vmatprep.subr.mxu0 0.0
  %305 = vmatpush1.msra.mxu0 %v281
  %306 = vmatprep.subr.mxu0 0.0
  %307 = vmatpush1.msra.mxu0 0.0
  %308 = vmatprep.subr.mxu0 0.0
  %309 = vmatpush1.msra.mxu0 0.0
  %310 = vmatprep.subr.mxu0 0.0
  %311 = vmatpush1.msra.mxu0 0.0
  %312 = vmatprep.subr.mxu0 0.0
  %313 = vmatpush1.msra.mxu0 0.0
  %314 = vmatprep.subr.mxu0 0.0
  %315 = vmatpush1.msra.mxu0 0.0
  %316 = vmatprep.subr.mxu0 0.0
  %317 = vmatpush1.msra.mxu0 0.0
  %318 = vmatprep.subr.mxu0 0.0
  %319 = vmatpush1.msra.mxu0 0.0
  %320 = vmatprep.subr.mxu0 0.0
  %321 = vmatpush1.msra.mxu0 0.0
  %322 = vmatprep.subr.mxu0 0.0
  %323 = vmatpush1.msra.mxu0 0.0
  %324 = vmatprep.subr.mxu0 0.0
  %325 = vmatpush1.msra.mxu0 0.0
  %326 = vmatprep.subr.mxu0 0.0
  %327 = vmatpush1.msra.mxu0 0.0
  %328 = vmatprep.subr.mxu0 0.0
  %329 = vmatpush1.msra.mxu0 0.0
  %330 = vmatprep.subr.mxu0 0.0
  %331 = vmatpush1.msra.mxu0 0.0
  %332 = vmatprep.subr.mxu0 0.0
  %333 = vmatpush1.msra.mxu0 0.0
  %334 = vmatprep.subr.mxu0 0.0
  %335 = vmatpush1.msra.mxu0 0.0
  %336 = vmatprep.subr.mxu0 0.0
  %337 = vmatpush1.msra.mxu0 0.0
  %338 = vmatprep.subr.mxu0 0.0
  %339 = vmatpush1.msra.mxu0 0.0
  %340 = vmatprep.subr.mxu0 0.0
  %341 = vmatpush1.msra.mxu0 0.0
  %342 = vmatprep.subr.mxu0 0.0
  %343 = vmatpush1.msra.mxu0 0.0
  %344 = vmatprep.subr.mxu0 0.0
  %345 = vmatpush1.msra.mxu0 0.0
  %346 = vmatprep.subr.mxu0 0.0
  %347 = vmatpush1.msra.mxu0 0.0
  %348 = vmatprep.subr.mxu0 0.0
  %349 = vmatpush1.msra.mxu0 0.0
  %350 = vmatprep.subr.mxu0 0.0
  %351 = vmatpush1.msra.mxu0 0.0
  %352 = vmatprep.subr.mxu0 0.0
  %353 = vmatpush1.msra.mxu0 0.0
  %354 = vmatprep.mubr.f32.mxu0 0.0
  %355 = vmatmul.mubr.f32.gmra.mrb[0].mxu0 %v288
  %v356 = vpop.f32.mrb[0].mxu0
  %v357 = vadd.f32 %v286, %v356
  %v358 = vpop.f32.mrb[0].mxu0
  %359 = vdwg.mxu0
  %v360 = vmax.f32 %v357, 0.0
  %v361 = vld [vmem:[%s6 + $0x7] sm:$0x1]
  %v362 = vld [vmem:[%s6 + $0x8] sm:$0x1]
  %v363 = vsel %vm136, %v360, 0.0
  %364 = vadd.xlane.f32.xlu0 %v363
  %v365 = vpop.xlane.xlu0 %364
  %v366 = vmul.f32 %v365, %v140
  %v367 = vsub.f32 %v360, %v366
  %v368 = vmul.f32 %v367, %v367
  %v369 = vsel %vm136, %v368, 0.0
  %370 = vadd.xlane.f32.xlu0 %v369
  %v371 = vpop.xlane.xlu0 %370
  %v372 = vmul.f32 %v371, %v140
  %v373 = vadd.f32 %v372, 1e-05
  %v374 = vrsqrt.pop %v373
  %v375 = vmul.f32 %v367, %v374
  %v376 = vlaneseq
  %v377 = vshrl.u32 %v376, 7
  %v378 = vsub.s32 0, %v377
  %v379 = vrot.slane %v361, %v378
  %v380 = vmul.f32 %v375, %v379
  %v381 = vlaneseq
  %v382 = vshrl.u32 %v381, 7
  %v383 = vsub.s32 0, %v382
  %v384 = vrot.slane %v362, %v383
  %v385 = vadd.f32 %v380, %v384
  %s386 = scalar_lea.vmem %s4, 128
  %v387 = vld [vmem:[%s386] sm:$0xff]
  %v388 = vld [vmem:[%s386 + $0x8] sm:$0xff]
  %v389 = vld [vmem:[%s386 + $0x10] sm:$0xff]
  %v390 = vld [vmem:[%s386 + $0x18] sm:$0xff]
  %v391 = vld [vmem:[%s386 + $0x20] sm:$0xff]
  %v392 = vld [vmem:[%s386 + $0x28] sm:$0xff]
  %v393 = vld [vmem:[%s386 + $0x30] sm:$0xff]
  %v394 = vld [vmem:[%s386 + $0x38] sm:$0xff]
  %v395 = vld [vmem:[%s6 + $0x9] sm:$0x1]
  %v396 = vlaneseq
  %v397 = vshrl.u32 %v396, 7
  %v398 = vsub.s32 0, %v397
  %v399 = vrot.slane %v395, %v398
  %v401 = vsel %vm136, %v385, 0
  %403 = vmatprep.subr.mxu0 0.0
  %404 = vmatpush1.msra.mxu0 %v387
  %405 = vmatprep.subr.mxu0 0.0
  %406 = vmatpush1.msra.mxu0 %v388
  %407 = vmatprep.subr.mxu0 0.0
  %408 = vmatpush1.msra.mxu0 %v389
  %409 = vmatprep.subr.mxu0 0.0
  %410 = vmatpush1.msra.mxu0 %v390
  %411 = vmatprep.subr.mxu0 0.0
  %412 = vmatpush1.msra.mxu0 %v391
  %413 = vmatprep.subr.mxu0 0.0
  %414 = vmatpush1.msra.mxu0 %v392
  %415 = vmatprep.subr.mxu0 0.0
  %416 = vmatpush1.msra.mxu0 %v393
  %417 = vmatprep.subr.mxu0 0.0
  %418 = vmatpush1.msra.mxu0 %v394
  %419 = vmatprep.subr.mxu0 0.0
  %420 = vmatpush1.msra.mxu0 0.0
  %421 = vmatprep.subr.mxu0 0.0
  %422 = vmatpush1.msra.mxu0 0.0
  %423 = vmatprep.subr.mxu0 0.0
  %424 = vmatpush1.msra.mxu0 0.0
  %425 = vmatprep.subr.mxu0 0.0
  %426 = vmatpush1.msra.mxu0 0.0
  %427 = vmatprep.subr.mxu0 0.0
  %428 = vmatpush1.msra.mxu0 0.0
  %429 = vmatprep.subr.mxu0 0.0
  %430 = vmatpush1.msra.mxu0 0.0
  %431 = vmatprep.subr.mxu0 0.0
  %432 = vmatpush1.msra.mxu0 0.0
  %433 = vmatprep.subr.mxu0 0.0
  %434 = vmatpush1.msra.mxu0 0.0
  %435 = vmatprep.subr.mxu0 0.0
  %436 = vmatpush1.msra.mxu0 0.0
  %437 = vmatprep.subr.mxu0 0.0
  %438 = vmatpush1.msra.mxu0 0.0
  %439 = vmatprep.subr.mxu0 0.0
  %440 = vmatpush1.msra.mxu0 0.0
  %441 = vmatprep.subr.mxu0 0.0
  %442 = vmatpush1.msra.mxu0 0.0
  %443 = vmatprep.subr.mxu0 0.0
  %444 = vmatpush1.msra.mxu0 0.0
  %445 = vmatprep.subr.mxu0 0.0
  %446 = vmatpush1.msra.mxu0 0.0
  %447 = vmatprep.subr.mxu0 0.0
  %448 = vmatpush1.msra.mxu0 0.0
  %449 = vmatprep.subr.mxu0 0.0
  %450 = vmatpush1.msra.mxu0 0.0
  %451 = vmatprep.subr.mxu0 0.0
  %452 = vmatpush1.msra.mxu0 0.0
  %453 = vmatprep.subr.mxu0 0.0
  %454 = vmatpush1.msra.mxu0 0.0
  %455 = vmatprep.subr.mxu0 0.0
  %456 = vmatpush1.msra.mxu0 0.0
  %457 = vmatprep.subr.mxu0 0.0
  %458 = vmatpush1.msra.mxu0 0.0
  %459 = vmatprep.subr.mxu0 0.0
  %460 = vmatpush1.msra.mxu0 0.0
  %461 = vmatprep.subr.mxu0 0.0
  %462 = vmatpush1.msra.mxu0 0.0
  %463 = vmatprep.subr.mxu0 0.0
  %464 = vmatpush1.msra.mxu0 0.0
  %465 = vmatprep.subr.mxu0 0.0
  %466 = vmatpush1.msra.mxu0 0.0
  %467 = vmatprep.mubr.f32.mxu0 0.0
  %468 = vmatmul.mubr.f32.gmra.mrb[0].mxu0 %v401
  %v469 = vpop.f32.mrb[0].mxu0
  %v470 = vadd.f32 %v399, %v469
  %v471 = vpop.f32.mrb[0].mxu0
  %472 = vdwg.mxu0
  %v473 = vmax.f32 %v470, 0.0
  %v474 = vld [vmem:[%s6 + $0xa] sm:$0x1]
  %v475 = vld [vmem:[%s6 + $0xb] sm:$0x1]
  %v476 = vsel %vm136, %v473, 0.0
  %477 = vadd.xlane.f32.xlu0 %v476
  %v478 = vpop.xlane.xlu0 %477
  %v479 = vmul.f32 %v478, %v140
  %v480 = vsub.f32 %v473, %v479
  %v481 = vmul.f32 %v480, %v480
  %v482 = vsel %vm136, %v481, 0.0
  %483 = vadd.xlane.f32.xlu0 %v482
  %v484 = vpop.xlane.xlu0 %483
  %v485 = vmul.f32 %v484, %v140
  %v486 = vadd.f32 %v485, 1e-05
  %v487 = vrsqrt.pop %v486
  %v488 = vmul.f32 %v480, %v487
  %v489 = vlaneseq
  %v490 = vshrl.u32 %v489, 7
  %v491 = vsub.s32 0, %v490
  %v492 = vrot.slane %v474, %v491
  %v493 = vmul.f32 %v488, %v492
  %v494 = vlaneseq
  %v495 = vshrl.u32 %v494, 7
  %v496 = vsub.s32 0, %v495
  %v497 = vrot.slane %v475, %v496
  %v498 = vadd.f32 %v493, %v497
  %v499 = vld [vmem:[%s1] sm:$0xff]
  %v500 = vld [vmem:[%s1 + $0x8] sm:$0xff]
  %v501 = vld [vmem:[%s1 + $0x10] sm:$0xff]
  %v502 = vld [vmem:[%s1 + $0x18] sm:$0xff]
  %v503 = vld [vmem:[%s1 + $0x20] sm:$0xff]
  %v504 = vld [vmem:[%s1 + $0x28] sm:$0xff]
  %v505 = vld [vmem:[%s1 + $0x30] sm:$0xff]
  %v506 = vld [vmem:[%s1 + $0x38] sm:$0xff]
  %v507 = vld [vmem:[%s1 + $0x40] sm:$0xff]
  %v508 = vld [vmem:[%s3] sm:$0xff]
  %v509 = vld [vmem:[%s3 + $0x8] sm:$0xff]
  %v510 = vld [vmem:[%s3 + $0x10] sm:$0xff]
  %v511 = vld [vmem:[%s3 + $0x18] sm:$0xff]
  %v512 = vld [vmem:[%s3 + $0x20] sm:$0xff]
  %v513 = vld [vmem:[%s3 + $0x28] sm:$0xff]
  %v514 = vld [vmem:[%s3 + $0x30] sm:$0xff]
  %v515 = vld [vmem:[%s3 + $0x38] sm:$0xff]
  %v516 = vld [vmem:[%s3 + $0x40] sm:$0xff]
  %v517 = vld [vmem:[%s3 + $0x48] sm:$0xff]
  %v518 = vld [vmem:[%s3 + $0x50] sm:$0xff]
  %v519 = vld [vmem:[%s3 + $0x58] sm:$0xff]
  %v520 = vld [vmem:[%s3 + $0x60] sm:$0xff]
  %v521 = vld [vmem:[%s3 + $0x68] sm:$0xff]
  %v522 = vld [vmem:[%s3 + $0x70] sm:$0xff]
  %v523 = vld [vmem:[%s3 + $0x78] sm:$0xff]
  %v524 = vld [vmem:[%s3 + $0x80] sm:$0xff]
  %v525 = vld [vmem:[%s3 + $0x88] sm:$0xff]
  %v526 = vld [vmem:[%s3 + $0x90] sm:$0xff]
  %v527 = vld [vmem:[%s3 + $0x98] sm:$0xff]
  %v528 = vld [vmem:[%s3 + $0xa0] sm:$0xff]
  %v529 = vld [vmem:[%s3 + $0xa8] sm:$0xff]
  %v530 = vld [vmem:[%s3 + $0xb0] sm:$0xff]
  %v531 = vld [vmem:[%s3 + $0xb8] sm:$0xff]
  %v532 = vld [vmem:[%s3 + $0xc0] sm:$0xff]
  %v533 = vld [vmem:[%s3 + $0xc8] sm:$0xff]
  %v534 = vld [vmem:[%s3 + $0xd0] sm:$0xff]
  %v535 = vld [vmem:[%s3 + $0xd8] sm:$0xff]
  %v536 = vld [vmem:[%s3 + $0xe0] sm:$0xff]
  %v537 = vld [vmem:[%s3 + $0xe8] sm:$0xff]
  %v538 = vld [vmem:[%s3 + $0xf0] sm:$0xff]
  %v539 = vld [vmem:[%s3 + $0xf8] sm:$0xff]
  %v540 = vld [vmem:[%s3 + $0x100] sm:$0xff]
  %v541 = vld [vmem:[%s3 + $0x108] sm:$0xff]
  %v542 = vld [vmem:[%s3 + $0x110] sm:$0xff]
  %v543 = vld [vmem:[%s3 + $0x118] sm:$0xff]
  %v544 = vld [vmem:[%s3 + $0x120] sm:$0xff]
  %v545 = vld [vmem:[%s3 + $0x128] sm:$0xff]
  %v546 = vld [vmem:[%s3 + $0x130] sm:$0xff]
  %v547 = vld [vmem:[%s3 + $0x138] sm:$0xff]
  %v548 = vld [vmem:[%s3 + $0x140] sm:$0xff]
  %v549 = vld [vmem:[%s3 + $0x148] sm:$0xff]
  %v550 = vld [vmem:[%s3 + $0x150] sm:$0xff]
  %v551 = vld [vmem:[%s3 + $0x158] sm:$0xff]
  %v552 = vld [vmem:[%s3 + $0x160] sm:$0xff]
  %v553 = vld [vmem:[%s3 + $0x168] sm:$0xff]
  %v554 = vld [vmem:[%s3 + $0x170] sm:$0xff]
  %v555 = vld [vmem:[%s3 + $0x178] sm:$0xff]
  %v556 = vld [vmem:[%s3 + $0x180] sm:$0xff]
  %v557 = vld [vmem:[%s3 + $0x188] sm:$0xff]
  %v558 = vld [vmem:[%s3 + $0x190] sm:$0xff]
  %v559 = vld [vmem:[%s3 + $0x198] sm:$0xff]
  %v560 = vld [vmem:[%s3 + $0x1a0] sm:$0xff]
  %v561 = vld [vmem:[%s3 + $0x1a8] sm:$0xff]
  %v562 = vld [vmem:[%s3 + $0x1b0] sm:$0xff]
  %v563 = vld [vmem:[%s3 + $0x1b8] sm:$0xff]
  %v564 = vld [vmem:[%s3 + $0x1c0] sm:$0xff]
  %v565 = vld [vmem:[%s3 + $0x1c8] sm:$0xff]
  %v566 = vld [vmem:[%s3 + $0x1d0] sm:$0xff]
  %v567 = vld [vmem:[%s3 + $0x1d8] sm:$0xff]
  %v568 = vld [vmem:[%s3 + $0x1e0] sm:$0xff]
  %v569 = vld [vmem:[%s3 + $0x1e8] sm:$0xff]
  %v570 = vld [vmem:[%s3 + $0x1f0] sm:$0xff]
  %v571 = vld [vmem:[%s3 + $0x1f8] sm:$0xff]
  %v572 = vld [vmem:[%s3 + $0x200] sm:$0xff]
  %v573 = vld [vmem:[%s3 + $0x208] sm:$0xff]
  %v574 = vld [vmem:[%s3 + $0x210] sm:$0xff]
  %v575 = vld [vmem:[%s3 + $0x218] sm:$0xff]
  %v576 = vld [vmem:[%s3 + $0x220] sm:$0xff]
  %v577 = vld [vmem:[%s3 + $0x228] sm:$0xff]
  %v578 = vld [vmem:[%s3 + $0x230] sm:$0xff]
  %v579 = vld [vmem:[%s3 + $0x238] sm:$0xff]
  %v580 = vld [vmem:[%s3 + $0x240] sm:$0xff]
  %v581 = vld [vmem:[%s3 + $0x248] sm:$0xff]
  %v582 = vld [vmem:[%s3 + $0x250] sm:$0xff]
  %v583 = vld [vmem:[%s3 + $0x258] sm:$0xff]
  %v584 = vld [vmem:[%s3 + $0x260] sm:$0xff]
  %v585 = vld [vmem:[%s3 + $0x268] sm:$0xff]
  %v586 = vld [vmem:[%s3 + $0x270] sm:$0xff]
  %v587 = vld [vmem:[%s3 + $0x278] sm:$0xff]
  %v588 = vld [vmem:[%s3 + $0x280] sm:$0xff]
  %v589 = vld [vmem:[%s3 + $0x288] sm:$0xff]
  %v590 = vld [vmem:[%s3 + $0x290] sm:$0xff]
  %v591 = vld [vmem:[%s3 + $0x298] sm:$0xff]
  %v592 = vld [vmem:[%s3 + $0x2a0] sm:$0xff]
  %v593 = vld [vmem:[%s3 + $0x2a8] sm:$0xff]
  %v594 = vld [vmem:[%s3 + $0x2b0] sm:$0xff]
  %v595 = vld [vmem:[%s3 + $0x2b8] sm:$0xff]
  %v596 = vld [vmem:[%s3 + $0x2c0] sm:$0xff]
  %v597 = vld [vmem:[%s3 + $0x2c8] sm:$0xff]
  %v598 = vld [vmem:[%s3 + $0x2d0] sm:$0xff]
  %v599 = vld [vmem:[%s3 + $0x2d8] sm:$0xff]
  %v600 = vld [vmem:[%s3 + $0x2e0] sm:$0xff]
  %v601 = vld [vmem:[%s3 + $0x2e8] sm:$0xff]
  %v602 = vld [vmem:[%s3 + $0x2f0] sm:$0xff]
  %v603 = vld [vmem:[%s3 + $0x2f8] sm:$0xff]
  %v604 = vld [vmem:[%s3 + $0x300] sm:$0xff]
  %v605 = vld [vmem:[%s3 + $0x308] sm:$0xff]
  %v606 = vld [vmem:[%s3 + $0x310] sm:$0xff]
  %v607 = vld [vmem:[%s3 + $0x318] sm:$0xff]
  %v608 = vld [vmem:[%s3 + $0x320] sm:$0xff]
  %v609 = vld [vmem:[%s3 + $0x328] sm:$0xff]
  %v610 = vld [vmem:[%s3 + $0x330] sm:$0xff]
  %v611 = vld [vmem:[%s3 + $0x338] sm:$0xff]
  %v612 = vld [vmem:[%s3 + $0x340] sm:$0xff]
  %v613 = vld [vmem:[%s3 + $0x348] sm:$0xff]
  %v614 = vld [vmem:[%s3 + $0x350] sm:$0xff]
  %v615 = vld [vmem:[%s3 + $0x358] sm:$0xff]
  %v616 = vld [vmem:[%s3 + $0x360] sm:$0xff]
  %v617 = vld [vmem:[%s3 + $0x368] sm:$0xff]
  %v618 = vld [vmem:[%s3 + $0x370] sm:$0xff]
  %v619 = vld [vmem:[%s3 + $0x378] sm:$0xff]
  %v620 = vld [vmem:[%s3 + $0x380] sm:$0xff]
  %v621 = vld [vmem:[%s3 + $0x388] sm:$0xff]
  %v622 = vld [vmem:[%s3 + $0x390] sm:$0xff]
  %v623 = vld [vmem:[%s3 + $0x398] sm:$0xff]
  %v624 = vld [vmem:[%s3 + $0x3a0] sm:$0xff]
  %v625 = vld [vmem:[%s3 + $0x3a8] sm:$0xff]
  %v626 = vld [vmem:[%s3 + $0x3b0] sm:$0xff]
  %v627 = vld [vmem:[%s3 + $0x3b8] sm:$0xff]
  %v628 = vld [vmem:[%s3 + $0x3c0] sm:$0xff]
  %v629 = vld [vmem:[%s3 + $0x3c8] sm:$0xff]
  %v630 = vld [vmem:[%s3 + $0x3d0] sm:$0xff]
  %v631 = vld [vmem:[%s3 + $0x3d8] sm:$0xff]
  %v632 = vld [vmem:[%s3 + $0x3e0] sm:$0xff]
  %v633 = vld [vmem:[%s3 + $0x3e8] sm:$0xff]
  %v634 = vld [vmem:[%s3 + $0x3f0] sm:$0xff]
  %v635 = vld [vmem:[%s3 + $0x3f8] sm:$0xff]
  %v636 = vld [vmem:[%s3 + $0x400] sm:$0xff]
  %v637 = vld [vmem:[%s3 + $0x408] sm:$0xff]
  %v638 = vld [vmem:[%s3 + $0x410] sm:$0xff]
  %v639 = vld [vmem:[%s3 + $0x418] sm:$0xff]
  %v640 = vld [vmem:[%s3 + $0x420] sm:$0xff]
  %v641 = vld [vmem:[%s3 + $0x428] sm:$0xff]
  %v642 = vld [vmem:[%s3 + $0x430] sm:$0xff]
  %v643 = vld [vmem:[%s3 + $0x438] sm:$0xff]
  %v644 = vld [vmem:[%s3 + $0x440] sm:$0xff]
  %v645 = vld [vmem:[%s3 + $0x448] sm:$0xff]
  %v646 = vld [vmem:[%s3 + $0x450] sm:$0xff]
  %v647 = vld [vmem:[%s3 + $0x458] sm:$0xff]
  %v648 = vld [vmem:[%s3 + $0x460] sm:$0xff]
  %v649 = vld [vmem:[%s3 + $0x468] sm:$0xff]
  %v650 = vld [vmem:[%s3 + $0x470] sm:$0xff]
  %v651 = vld [vmem:[%s3 + $0x478] sm:$0xff]
  %v652 = vld [vmem:[%s6 + $0x24] sm:$0x1]
  %v653 = vlaneseq
  %v654 = vshrl.u32 %v653, 7
  %v655 = vsub.s32 0, %v654
  %v656 = vrot.slane %v652, %v655
  %657 = vmatprep.subr.mxu0 0.0
  %658 = vmatpush1.msra.mxu0 %v508
  %659 = vmatprep.subr.mxu0 0.0
  %660 = vmatpush1.msra.mxu0 %v509
  %661 = vmatprep.subr.mxu0 0.0
  %662 = vmatpush1.msra.mxu0 %v510
  %663 = vmatprep.subr.mxu0 0.0
  %664 = vmatpush1.msra.mxu0 %v511
  %665 = vmatprep.subr.mxu0 0.0
  %666 = vmatpush1.msra.mxu0 %v512
  %667 = vmatprep.subr.mxu0 0.0
  %668 = vmatpush1.msra.mxu0 %v513
  %669 = vmatprep.subr.mxu0 0.0
  %670 = vmatpush1.msra.mxu0 %v514
  %671 = vmatprep.subr.mxu0 0.0
  %672 = vmatpush1.msra.mxu0 %v515
  %673 = vmatprep.subr.mxu0 0.0
  %674 = vmatpush1.msra.mxu0 %v516
  %675 = vmatprep.subr.mxu0 0.0
  %676 = vmatpush1.msra.mxu0 %v517
  %677 = vmatprep.subr.mxu0 0.0
  %678 = vmatpush1.msra.mxu0 %v518
  %679 = vmatprep.subr.mxu0 0.0
  %680 = vmatpush1.msra.mxu0 %v519
  %681 = vmatprep.subr.mxu0 0.0
  %682 = vmatpush1.msra.mxu0 %v520
  %683 = vmatprep.subr.mxu0 0.0
  %684 = vmatpush1.msra.mxu0 %v521
  %685 = vmatprep.subr.mxu0 0.0
  %686 = vmatpush1.msra.mxu0 %v522
  %687 = vmatprep.subr.mxu0 0.0
  %688 = vmatpush1.msra.mxu0 %v523
  %689 = vmatprep.subr.mxu0 0.0
  %690 = vmatpush1.msra.mxu0 %v524
  %691 = vmatprep.subr.mxu0 0.0
  %692 = vmatpush1.msra.mxu0 %v525
  %693 = vmatprep.subr.mxu0 0.0
  %694 = vmatpush1.msra.mxu0 %v526
  %695 = vmatprep.subr.mxu0 0.0
  %696 = vmatpush1.msra.mxu0 %v527
  %697 = vmatprep.subr.mxu0 0.0
  %698 = vmatpush1.msra.mxu0 %v528
  %699 = vmatprep.subr.mxu0 0.0
  %700 = vmatpush1.msra.mxu0 %v529
  %701 = vmatprep.subr.mxu0 0.0
  %702 = vmatpush1.msra.mxu0 %v530
  %703 = vmatprep.subr.mxu0 0.0
  %704 = vmatpush1.msra.mxu0 %v531
  %705 = vmatprep.subr.mxu0 0.0
  %706 = vmatpush1.msra.mxu0 %v532
  %707 = vmatprep.subr.mxu0 0.0
  %708 = vmatpush1.msra.mxu0 %v533
  %709 = vmatprep.subr.mxu0 0.0
  %710 = vmatpush1.msra.mxu0 %v534
  %711 = vmatprep.subr.mxu0 0.0
  %712 = vmatpush1.msra.mxu0 %v535
  %713 = vmatprep.subr.mxu0 0.0
  %714 = vmatpush1.msra.mxu0 %v536
  %715 = vmatprep.subr.mxu0 0.0
  %716 = vmatpush1.msra.mxu0 %v537
  %717 = vmatprep.subr.mxu0 0.0
  %718 = vmatpush1.msra.mxu0 %v538
  %719 = vmatprep.subr.mxu0 0.0
  %720 = vmatpush1.msra.mxu0 %v539
  %721 = vmatprep.mubr.f32.mxu0 %v500
  %722 = vmatmul.mubr.f32.gmra.mrb[0].mxu0 %v499
  %v723 = vpop.f32.mrb[0].mxu0
  %v724 = vadd.f32 %v656, %v723
  %v725 = vpop.f32.mrb[0].mxu0
  %726 = vdwg.mxu0
  %727 = vmatprep.subr.mxu0 0.0
  %728 = vmatpush1.msra.mxu0 %v540
  %729 = vmatprep.subr.mxu0 0.0
  %730 = vmatpush1.msra.mxu0 %v541
  %731 = vmatprep.subr.mxu0 0.0
  %732 = vmatpush1.msra.mxu0 %v542
  %733 = vmatprep.subr.mxu0 0.0
  %734 = vmatpush1.msra.mxu0 %v543
  %735 = vmatprep.subr.mxu0 0.0
  %736 = vmatpush1.msra.mxu0 %v544
  %737 = vmatprep.subr.mxu0 0.0
  %738 = vmatpush1.msra.mxu0 %v545
  %739 = vmatprep.subr.mxu0 0.0
  %740 = vmatpush1.msra.mxu0 %v546
  %741 = vmatprep.subr.mxu0 0.0
  %742 = vmatpush1.msra.mxu0 %v547
  %743 = vmatprep.subr.mxu0 0.0
  %744 = vmatpush1.msra.mxu0 %v548
  %745 = vmatprep.subr.mxu0 0.0
  %746 = vmatpush1.msra.mxu0 %v549
  %747 = vmatprep.subr.mxu0 0.0
  %748 = vmatpush1.msra.mxu0 %v550
  %749 = vmatprep.subr.mxu0 0.0
  %750 = vmatpush1.msra.mxu0 %v551
  %751 = vmatprep.subr.mxu0 0.0
  %752 = vmatpush1.msra.mxu0 %v552
  %753 = vmatprep.subr.mxu0 0.0
  %754 = vmatpush1.msra.mxu0 %v553
  %755 = vmatprep.subr.mxu0 0.0
  %756 = vmatpush1.msra.mxu0 %v554
  %757 = vmatprep.subr.mxu0 0.0
  %758 = vmatpush1.msra.mxu0 %v555
  %759 = vmatprep.subr.mxu0 0.0
  %760 = vmatpush1.msra.mxu0 %v556
  %761 = vmatprep.subr.mxu0 0.0
  %762 = vmatpush1.msra.mxu0 %v557
  %763 = vmatprep.subr.mxu0 0.0
  %764 = vmatpush1.msra.mxu0 %v558
  %765 = vmatprep.subr.mxu0 0.0
  %766 = vmatpush1.msra.mxu0 %v559
  %767 = vmatprep.subr.mxu0 0.0
  %768 = vmatpush1.msra.mxu0 %v560
  %769 = vmatprep.subr.mxu0 0.0
  %770 = vmatpush1.msra.mxu0 %v561
  %771 = vmatprep.subr.mxu0 0.0
  %772 = vmatpush1.msra.mxu0 %v562
  %773 = vmatprep.subr.mxu0 0.0
  %774 = vmatpush1.msra.mxu0 %v563
  %775 = vmatprep.subr.mxu0 0.0
  %776 = vmatpush1.msra.mxu0 %v564
  %777 = vmatprep.subr.mxu0 0.0
  %778 = vmatpush1.msra.mxu0 %v565
  %779 = vmatprep.subr.mxu0 0.0
  %780 = vmatpush1.msra.mxu0 %v566
  %781 = vmatprep.subr.mxu0 0.0
  %782 = vmatpush1.msra.mxu0 %v567
  %783 = vmatprep.subr.mxu0 0.0
  %784 = vmatpush1.msra.mxu0 %v568
  %785 = vmatprep.subr.mxu0 0.0
  %786 = vmatpush1.msra.mxu0 %v569
  %787 = vmatprep.subr.mxu0 0.0
  %788 = vmatpush1.msra.mxu0 %v570
  %789 = vmatprep.subr.mxu0 0.0
  %790 = vmatpush1.msra.mxu0 %v571
  %791 = vmatprep.mubr.f32.mxu0 %v502
  %792 = vmatmul.mubr.f32.gmra.mrb[0].mxu0 %v501
  %v793 = vpop.f32.mrb[0].mxu0
  %v794 = vadd.f32 %v724, %v793
  %v795 = vpop.f32.mrb[0].mxu0
  %796 = vdwg.mxu0
  %797 = vmatprep.subr.mxu0 0.0
  %798 = vmatpush1.msra.mxu0 %v572
  %799 = vmatprep.subr.mxu0 0.0
  %800 = vmatpush1.msra.mxu0 %v573
  %801 = vmatprep.subr.mxu0 0.0
  %802 = vmatpush1.msra.mxu0 %v574
  %803 = vmatprep.subr.mxu0 0.0
  %804 = vmatpush1.msra.mxu0 %v575
  %805 = vmatprep.subr.mxu0 0.0
  %806 = vmatpush1.msra.mxu0 %v576
  %807 = vmatprep.subr.mxu0 0.0
  %808 = vmatpush1.msra.mxu0 %v577
  %809 = vmatprep.subr.mxu0 0.0
  %810 = vmatpush1.msra.mxu0 %v578
  %811 = vmatprep.subr.mxu0 0.0
  %812 = vmatpush1.msra.mxu0 %v579
  %813 = vmatprep.subr.mxu0 0.0
  %814 = vmatpush1.msra.mxu0 %v580
  %815 = vmatprep.subr.mxu0 0.0
  %816 = vmatpush1.msra.mxu0 %v581
  %817 = vmatprep.subr.mxu0 0.0
  %818 = vmatpush1.msra.mxu0 %v582
  %819 = vmatprep.subr.mxu0 0.0
  %820 = vmatpush1.msra.mxu0 %v583
  %821 = vmatprep.subr.mxu0 0.0
  %822 = vmatpush1.msra.mxu0 %v584
  %823 = vmatprep.subr.mxu0 0.0
  %824 = vmatpush1.msra.mxu0 %v585
  %825 = vmatprep.subr.mxu0 0.0
  %826 = vmatpush1.msra.mxu0 %v586
  %827 = vmatprep.subr.mxu0 0.0
  %828 = vmatpush1.msra.mxu0 %v587
  %829 = vmatprep.subr.mxu0 0.0
  %830 = vmatpush1.msra.mxu0 %v588
  %831 = vmatprep.subr.mxu0 0.0
  %832 = vmatpush1.msra.mxu0 %v589
  %833 = vmatprep.subr.mxu0 0.0
  %834 = vmatpush1.msra.mxu0 %v590
  %835 = vmatprep.subr.mxu0 0.0
  %836 = vmatpush1.msra.mxu0 %v591
  %837 = vmatprep.subr.mxu0 0.0
  %838 = vmatpush1.msra.mxu0 %v592
  %839 = vmatprep.subr.mxu0 0.0
  %840 = vmatpush1.msra.mxu0 %v593
  %841 = vmatprep.subr.mxu0 0.0
  %842 = vmatpush1.msra.mxu0 %v594
  %843 = vmatprep.subr.mxu0 0.0
  %844 = vmatpush1.msra.mxu0 %v595
  %845 = vmatprep.subr.mxu0 0.0
  %846 = vmatpush1.msra.mxu0 %v596
  %847 = vmatprep.subr.mxu0 0.0
  %848 = vmatpush1.msra.mxu0 %v597
  %849 = vmatprep.subr.mxu0 0.0
  %850 = vmatpush1.msra.mxu0 %v598
  %851 = vmatprep.subr.mxu0 0.0
  %852 = vmatpush1.msra.mxu0 %v599
  %853 = vmatprep.subr.mxu0 0.0
  %854 = vmatpush1.msra.mxu0 %v600
  %855 = vmatprep.subr.mxu0 0.0
  %856 = vmatpush1.msra.mxu0 %v601
  %857 = vmatprep.subr.mxu0 0.0
  %858 = vmatpush1.msra.mxu0 %v602
  %859 = vmatprep.subr.mxu0 0.0
  %860 = vmatpush1.msra.mxu0 %v603
  %861 = vmatprep.mubr.f32.mxu0 %v504
  %862 = vmatmul.mubr.f32.gmra.mrb[0].mxu0 %v503
  %v863 = vpop.f32.mrb[0].mxu0
  %v864 = vadd.f32 %v794, %v863
  %v865 = vpop.f32.mrb[0].mxu0
  %866 = vdwg.mxu0
  %867 = vmatprep.subr.mxu0 0.0
  %868 = vmatpush1.msra.mxu0 %v604
  %869 = vmatprep.subr.mxu0 0.0
  %870 = vmatpush1.msra.mxu0 %v605
  %871 = vmatprep.subr.mxu0 0.0
  %872 = vmatpush1.msra.mxu0 %v606
  %873 = vmatprep.subr.mxu0 0.0
  %874 = vmatpush1.msra.mxu0 %v607
  %875 = vmatprep.subr.mxu0 0.0
  %876 = vmatpush1.msra.mxu0 %v608
  %877 = vmatprep.subr.mxu0 0.0
  %878 = vmatpush1.msra.mxu0 %v609
  %879 = vmatprep.subr.mxu0 0.0
  %880 = vmatpush1.msra.mxu0 %v610
  %881 = vmatprep.subr.mxu0 0.0
  %882 = vmatpush1.msra.mxu0 %v611
  %883 = vmatprep.subr.mxu0 0.0
  %884 = vmatpush1.msra.mxu0 %v612
  %885 = vmatprep.subr.mxu0 0.0
  %886 = vmatpush1.msra.mxu0 %v613
  %887 = vmatprep.subr.mxu0 0.0
  %888 = vmatpush1.msra.mxu0 %v614
  %889 = vmatprep.subr.mxu0 0.0
  %890 = vmatpush1.msra.mxu0 %v615
  %891 = vmatprep.subr.mxu0 0.0
  %892 = vmatpush1.msra.mxu0 %v616
  %893 = vmatprep.subr.mxu0 0.0
  %894 = vmatpush1.msra.mxu0 %v617
  %895 = vmatprep.subr.mxu0 0.0
  %896 = vmatpush1.msra.mxu0 %v618
  %897 = vmatprep.subr.mxu0 0.0
  %898 = vmatpush1.msra.mxu0 %v619
  %899 = vmatprep.subr.mxu0 0.0
  %900 = vmatpush1.msra.mxu0 %v620
  %901 = vmatprep.subr.mxu0 0.0
  %902 = vmatpush1.msra.mxu0 %v621
  %903 = vmatprep.subr.mxu0 0.0
  %904 = vmatpush1.msra.mxu0 %v622
  %905 = vmatprep.subr.mxu0 0.0
  %906 = vmatpush1.msra.mxu0 %v623
  %907 = vmatprep.subr.mxu0 0.0
  %908 = vmatpush1.msra.mxu0 %v624
  %909 = vmatprep.subr.mxu0 0.0
  %910 = vmatpush1.msra.mxu0 %v625
  %911 = vmatprep.subr.mxu0 0.0
  %912 = vmatpush1.msra.mxu0 %v626
  %913 = vmatprep.subr.mxu0 0.0
  %914 = vmatpush1.msra.mxu0 %v627
  %915 = vmatprep.subr.mxu0 0.0
  %916 = vmatpush1.msra.mxu0 %v628
  %917 = vmatprep.subr.mxu0 0.0
  %918 = vmatpush1.msra.mxu0 %v629
  %919 = vmatprep.subr.mxu0 0.0
  %920 = vmatpush1.msra.mxu0 %v630
  %921 = vmatprep.subr.mxu0 0.0
  %922 = vmatpush1.msra.mxu0 %v631
  %923 = vmatprep.subr.mxu0 0.0
  %924 = vmatpush1.msra.mxu0 %v632
  %925 = vmatprep.subr.mxu0 0.0
  %926 = vmatpush1.msra.mxu0 %v633
  %927 = vmatprep.subr.mxu0 0.0
  %928 = vmatpush1.msra.mxu0 %v634
  %929 = vmatprep.subr.mxu0 0.0
  %930 = vmatpush1.msra.mxu0 %v635
  %931 = vmatprep.mubr.f32.mxu0 %v506
  %932 = vmatmul.mubr.f32.gmra.mrb[0].mxu0 %v505
  %v933 = vpop.f32.mrb[0].mxu0
  %v934 = vadd.f32 %v864, %v933
  %v935 = vpop.f32.mrb[0].mxu0
  %936 = vdwg.mxu0
  %937 = vmatprep.subr.mxu0 0.0
  %938 = vmatpush1.msra.mxu0 %v636
  %939 = vmatprep.subr.mxu0 0.0
  %940 = vmatpush1.msra.mxu0 %v637
  %941 = vmatprep.subr.mxu0 0.0
  %942 = vmatpush1.msra.mxu0 %v638
  %943 = vmatprep.subr.mxu0 0.0
  %944 = vmatpush1.msra.mxu0 %v639
  %945 = vmatprep.subr.mxu0 0.0
  %946 = vmatpush1.msra.mxu0 %v640
  %947 = vmatprep.subr.mxu0 0.0
  %948 = vmatpush1.msra.mxu0 %v641
  %949 = vmatprep.subr.mxu0 0.0
  %950 = vmatpush1.msra.mxu0 %v642
  %951 = vmatprep.subr.mxu0 0.0
  %952 = vmatpush1.msra.mxu0 %v643
  %953 = vmatprep.subr.mxu0 0.0
  %954 = vmatpush1.msra.mxu0 %v644
  %955 = vmatprep.subr.mxu0 0.0
  %956 = vmatpush1.msra.mxu0 %v645
  %957 = vmatprep.subr.mxu0 0.0
  %958 = vmatpush1.msra.mxu0 %v646
  %959 = vmatprep.subr.mxu0 0.0
  %960 = vmatpush1.msra.mxu0 %v647
  %961 = vmatprep.subr.mxu0 0.0
  %962 = vmatpush1.msra.mxu0 %v648
  %963 = vmatprep.subr.mxu0 0.0
  %964 = vmatpush1.msra.mxu0 %v649
  %965 = vmatprep.subr.mxu0 0.0
  %966 = vmatpush1.msra.mxu0 %v650
  %967 = vmatprep.subr.mxu0 0.0
  %968 = vmatpush1.msra.mxu0 %v651
  %969 = vmatprep.subr.mxu0 0.0
  %970 = vmatpush1.msra.mxu0 0.0
  %971 = vmatprep.subr.mxu0 0.0
  %972 = vmatpush1.msra.mxu0 0.0
  %973 = vmatprep.subr.mxu0 0.0
  %974 = vmatpush1.msra.mxu0 0.0
  %975 = vmatprep.subr.mxu0 0.0
  %976 = vmatpush1.msra.mxu0 0.0
  %977 = vmatprep.subr.mxu0 0.0
  %978 = vmatpush1.msra.mxu0 0.0
  %979 = vmatprep.subr.mxu0 0.0
  %980 = vmatpush1.msra.mxu0 0.0
  %981 = vmatprep.subr.mxu0 0.0
  %982 = vmatpush1.msra.mxu0 0.0
  %983 = vmatprep.subr.mxu0 0.0
  %984 = vmatpush1.msra.mxu0 0.0
  %985 = vmatprep.subr.mxu0 0.0
  %986 = vmatpush1.msra.mxu0 0.0
  %987 = vmatprep.subr.mxu0 0.0
  %988 = vmatpush1.msra.mxu0 0.0
  %989 = vmatprep.subr.mxu0 0.0
  %990 = vmatpush1.msra.mxu0 0.0
  %991 = vmatprep.subr.mxu0 0.0
  %992 = vmatpush1.msra.mxu0 0.0
  %993 = vmatprep.subr.mxu0 0.0
  %994 = vmatpush1.msra.mxu0 0.0
  %995 = vmatprep.subr.mxu0 0.0
  %996 = vmatpush1.msra.mxu0 0.0
  %997 = vmatprep.subr.mxu0 0.0
  %998 = vmatpush1.msra.mxu0 0.0
  %999 = vmatprep.subr.mxu0 0.0
  %1000 = vmatpush1.msra.mxu0 0.0
  %1001 = vmatprep.mubr.f32.mxu0 0.0
  %1002 = vmatmul.mubr.f32.gmra.mrb[0].mxu0 %v507
  %v1003 = vpop.f32.mrb[0].mxu0
  %v1004 = vadd.f32 %v934, %v1003
  %v1005 = vpop.f32.mrb[0].mxu0
  %1006 = vdwg.mxu0
  %v1007 = vmax.f32 %v1004, 0.0
  %s1008 = scalar_lea.vmem %s4, 576
  %v1009 = vld [vmem:[%s1008] sm:$0xff]
  %v1010 = vld [vmem:[%s1008 + $0x8] sm:$0xff]
  %v1011 = vld [vmem:[%s1008 + $0x10] sm:$0xff]
  %v1012 = vld [vmem:[%s1008 + $0x18] sm:$0xff]
  %v1013 = vld [vmem:[%s1008 + $0x20] sm:$0xff]
  %v1014 = vld [vmem:[%s1008 + $0x28] sm:$0xff]
  %v1015 = vld [vmem:[%s1008 + $0x30] sm:$0xff]
  %v1016 = vld [vmem:[%s1008 + $0x38] sm:$0xff]
  %v1017 = vld [vmem:[%s6 + $0x25] sm:$0x1]
  %v1018 = vlaneseq
  %v1019 = vshrl.u32 %v1018, 7
  %v1020 = vsub.s32 0, %v1019
  %v1021 = vrot.slane %v1017, %v1020
  %v1023 = vsel %vm136, %v1007, 0
  %1025 = vmatprep.subr.mxu0 0.0
  %1026 = vmatpush1.msra.mxu0 %v1009
  %1027 = vmatprep.subr.mxu0 0.0
  %1028 = vmatpush1.msra.mxu0 %v1010
  %1029 = vmatprep.subr.mxu0 0.0
  %1030 = vmatpush1.msra.mxu0 %v1011
  %1031 = vmatprep.subr.mxu0 0.0
  %1032 = vmatpush1.msra.mxu0 %v1012
  %1033 = vmatprep.subr.mxu0 0.0
  %1034 = vmatpush1.msra.mxu0 %v1013
  %1035 = vmatprep.subr.mxu0 0.0
  %1036 = vmatpush1.msra.mxu0 %v1014
  %1037 = vmatprep.subr.mxu0 0.0
  %1038 = vmatpush1.msra.mxu0 %v1015
  %1039 = vmatprep.subr.mxu0 0.0
  %1040 = vmatpush1.msra.mxu0 %v1016
  %1041 = vmatprep.subr.mxu0 0.0
  %1042 = vmatpush1.msra.mxu0 0.0
  %1043 = vmatprep.subr.mxu0 0.0
  %1044 = vmatpush1.msra.mxu0 0.0
  %1045 = vmatprep.subr.mxu0 0.0
  %1046 = vmatpush1.msra.mxu0 0.0
  %1047 = vmatprep.subr.mxu0 0.0
  %1048 = vmatpush1.msra.mxu0 0.0
  %1049 = vmatprep.subr.mxu0 0.0
  %1050 = vmatpush1.msra.mxu0 0.0
  %1051 = vmatprep.subr.mxu0 0.0
  %1052 = vmatpush1.msra.mxu0 0.0
  %1053 = vmatprep.subr.mxu0 0.0
  %1054 = vmatpush1.msra.mxu0 0.0
  %1055 = vmatprep.subr.mxu0 0.0
  %1056 = vmatpush1.msra.mxu0 0.0
  %1057 = vmatprep.subr.mxu0 0.0
  %1058 = vmatpush1.msra.mxu0 0.0
  %1059 = vmatprep.subr.mxu0 0.0
  %1060 = vmatpush1.msra.mxu0 0.0
  %1061 = vmatprep.subr.mxu0 0.0
  %1062 = vmatpush1.msra.mxu0 0.0
  %1063 = vmatprep.subr.mxu0 0.0
  %1064 = vmatpush1.msra.mxu0 0.0
  %1065 = vmatprep.subr.mxu0 0.0
  %1066 = vmatpush1.msra.mxu0 0.0
  %1067 = vmatprep.subr.mxu0 0.0
  %1068 = vmatpush1.msra.mxu0 0.0
  %1069 = vmatprep.subr.mxu0 0.0
  %1070 = vmatpush1.msra.mxu0 0.0
  %1071 = vmatprep.subr.mxu0 0.0
  %1072 = vmatpush1.msra.mxu0 0.0
  %1073 = vmatprep.subr.mxu0 0.0
  %1074 = vmatpush1.msra.mxu0 0.0
  %1075 = vmatprep.subr.mxu0 0.0
  %1076 = vmatpush1.msra.mxu0 0.0
  %1077 = vmatprep.subr.mxu0 0.0
  %1078 = vmatpush1.msra.mxu0 0.0
  %1079 = vmatprep.subr.mxu0 0.0
  %1080 = vmatpush1.msra.mxu0 0.0
  %1081 = vmatprep.subr.mxu0 0.0
  %1082 = vmatpush1.msra.mxu0 0.0
  %1083 = vmatprep.subr.mxu0 0.0
  %1084 = vmatpush1.msra.mxu0 0.0
  %1085 = vmatprep.subr.mxu0 0.0
  %1086 = vmatpush1.msra.mxu0 0.0
  %1087 = vmatprep.subr.mxu0 0.0
  %1088 = vmatpush1.msra.mxu0 0.0
  %1089 = vmatprep.mubr.f32.mxu0 0.0
  %1090 = vmatmul.mubr.f32.gmra.mrb[0].mxu0 %v1023
  %v1091 = vpop.f32.mrb[0].mxu0
  %v1092 = vadd.f32 %v1021, %v1091
  %v1093 = vpop.f32.mrb[0].mxu0
  %1094 = vdwg.mxu0
  %v1095 = vmax.f32 %v1092, 0.0
  %1097 = vrot.lane.b32.xlu0 %v1095, 64
  %v1098 = vpop.permute.xlu0 %1097
  %1101 = vrot.lane.b32.xlu0 %v29, 112
  %v1102 = vpop.permute.xlu0 %1101
  %v1104 = vsel %vm136, %v498, %v1098
  %v1105 = vld [vmem:[%s2 + $0x10] sm:$0xff]
  %v1106 = vld [vmem:[%s2 + $0x18] sm:$0xff]
  %v1107 = vld [vmem:[%s2 + $0x20] sm:$0xff]
  %v1108 = vld [vmem:[%s2 + $0x28] sm:$0xff]
  %v1109 = vld [vmem:[%s2 + $0x30] sm:$0xff]
  %v1110 = vld [vmem:[%s2 + $0x38] sm:$0xff]
  %v1111 = vld [vmem:[%s2 + $0x40] sm:$0xff]
  %v1112 = vld [vmem:[%s2 + $0x48] sm:$0xff]
  %v1113 = vld [vmem:[%s2 + $0x50] sm:$0xff]
  %v1114 = vld [vmem:[%s2 + $0x58] sm:$0xff]
  %v1115 = vld [vmem:[%s2 + $0x60] sm:$0xff]
  %v1116 = vld [vmem:[%s2 + $0x68] sm:$0xff]
  %v1117 = vld [vmem:[%s2 + $0x70] sm:$0xff]
  %v1118 = vld [vmem:[%s2 + $0x78] sm:$0xff]
  %v1119 = vld [vmem:[%s2 + $0x80] sm:$0xff]
  %v1120 = vld [vmem:[%s2 + $0x88] sm:$0xff]
  %v1121 = vld [vmem:[%s2 + $0x90] sm:$0x1f]
  %s1122 = scalar_lea.vmem %s7, 2
  %v1123 = vld [vmem:[%s1122] ss:$8 sm:$0x3]
  %s1124 = scalar_lea.vmem %s7, 3
  %v1125 = vld [vmem:[%s1124] ss:$8 sm:$0x3]
  %vm1126 = vcmask 39936
  %v1127 = vsel %vm1126, %v1102, 0.0
  %v1128 = vadd.f32 %v1104, %v1127
  %1129 = vadd.xlane.f32.xlu0 %v1128
  %v1130 = vpop.xlane.xlu0 %1129
  %v1131 = vrcp.pop 133.0
  %v1132 = vmul.f32 %v1130, %v1131
  %v1133 = vsub.f32 %v1104, %v1132
  %v1134 = vsub.f32 %v1102, %v1132
  %v1135 = vmul.f32 %v1133, %v1133
  %v1136 = vmul.f32 %v1134, %v1134
  %v1137 = vsel %vm1126, %v1136, 0.0
  %v1138 = vadd.f32 %v1135, %v1137
  %1139 = vadd.xlane.f32.xlu0 %v1138
  %v1140 = vpop.xlane.xlu0 %1139
  %v1141 = vmul.f32 %v1140, %v1131
  %v1142 = vadd.f32 %v1141, 1e-05
  %v1143 = vrsqrt.pop %v1142
  %v1144 = vmul.f32 %v1133, %v1143
  %v1145 = vmul.f32 %v1134, %v1143
  %v1147 = vlaneseq
  %v1148 = vshrl.u32 %v1147, 7
  %v1149 = vsub.s32 0, %v1148
  %v1150 = vrot.slane %v1123, %v1149
  %v1151 = vlaneseq
  %v1152 = vshrl.u32 %v1151, 7
  %v1153 = vsub.s32 1, %v1152
  %v1154 = vrot.slane %v1123, %v1153
  %v1157 = vmul.f32 %v1144, %v1150
  %v1158 = vmul.f32 %v1145, %v1154
  %v1160 = vlaneseq
  %v1161 = vshrl.u32 %v1160, 7
  %v1162 = vsub.s32 0, %v1161
  %v1163 = vrot.slane %v1125, %v1162
  %v1164 = vlaneseq
  %v1165 = vshrl.u32 %v1164, 7
  %v1166 = vsub.s32 1, %v1165
  %v1167 = vrot.slane %v1125, %v1166
  %v1170 = vadd.f32 %v1157, %v1163
  %v1171 = vadd.f32 %v1158, %v1167
  %v1172 = vld [vmem:[%s6 + $0xc] sm:$0x1]
  %v1173 = vlaneseq
  %v1174 = vshrl.u32 %v1173, 7
  %v1175 = vsub.s32 0, %v1174
  %v1176 = vrot.slane %v1172, %v1175
  %v1178 = vsel %vm1126, %v1171, 0
  %vm1180 = vcmask 1044480
  %v1182 = vsel %vm1180, %v1121, 0
  %1184 = vmatprep.subr.mxu0 0.0
  %1185 = vmatpush1.msra.mxu0 %v1105
  %1186 = vmatprep.subr.mxu0 0.0
  %1187 = vmatpush1.msra.mxu0 %v1106
  %1188 = vmatprep.subr.mxu0 0.0
  %1189 = vmatpush1.msra.mxu0 %v1107
  %1190 = vmatprep.subr.mxu0 0.0
  %1191 = vmatpush1.msra.mxu0 %v1108
  %1192 = vmatprep.subr.mxu0 0.0
  %1193 = vmatpush1.msra.mxu0 %v1109
  %1194 = vmatprep.subr.mxu0 0.0
  %1195 = vmatpush1.msra.mxu0 %v1110
  %1196 = vmatprep.subr.mxu0 0.0
  %1197 = vmatpush1.msra.mxu0 %v1111
  %1198 = vmatprep.subr.mxu0 0.0
  %1199 = vmatpush1.msra.mxu0 %v1112
  %1200 = vmatprep.subr.mxu0 0.0
  %1201 = vmatpush1.msra.mxu0 %v1113
  %1202 = vmatprep.subr.mxu0 0.0
  %1203 = vmatpush1.msra.mxu0 %v1114
  %1204 = vmatprep.subr.mxu0 0.0
  %1205 = vmatpush1.msra.mxu0 %v1115
  %1206 = vmatprep.subr.mxu0 0.0
  %1207 = vmatpush1.msra.mxu0 %v1116
  %1208 = vmatprep.subr.mxu0 0.0
  %1209 = vmatpush1.msra.mxu0 %v1117
  %1210 = vmatprep.subr.mxu0 0.0
  %1211 = vmatpush1.msra.mxu0 %v1118
  %1212 = vmatprep.subr.mxu0 0.0
  %1213 = vmatpush1.msra.mxu0 %v1119
  %1214 = vmatprep.subr.mxu0 0.0
  %1215 = vmatpush1.msra.mxu0 %v1120
  %1216 = vmatprep.subr.mxu0 0.0
  %1217 = vmatpush1.msra.mxu0 %v1182
  %1218 = vmatprep.subr.mxu0 0.0
  %1219 = vmatpush1.msra.mxu0 0.0
  %1220 = vmatprep.subr.mxu0 0.0
  %1221 = vmatpush1.msra.mxu0 0.0
  %1222 = vmatprep.subr.mxu0 0.0
  %1223 = vmatpush1.msra.mxu0 0.0
  %1224 = vmatprep.subr.mxu0 0.0
  %1225 = vmatpush1.msra.mxu0 0.0
  %1226 = vmatprep.subr.mxu0 0.0
  %1227 = vmatpush1.msra.mxu0 0.0
  %1228 = vmatprep.subr.mxu0 0.0
  %1229 = vmatpush1.msra.mxu0 0.0
  %1230 = vmatprep.subr.mxu0 0.0
  %1231 = vmatpush1.msra.mxu0 0.0
  %1232 = vmatprep.subr.mxu0 0.0
  %1233 = vmatpush1.msra.mxu0 0.0
  %1234 = vmatprep.subr.mxu0 0.0
  %1235 = vmatpush1.msra.mxu0 0.0
  %1236 = vmatprep.subr.mxu0 0.0
  %1237 = vmatpush1.msra.mxu0 0.0
  %1238 = vmatprep.subr.mxu0 0.0
  %1239 = vmatpush1.msra.mxu0 0.0
  %1240 = vmatprep.subr.mxu0 0.0
  %1241 = vmatpush1.msra.mxu0 0.0
  %1242 = vmatprep.subr.mxu0 0.0
  %1243 = vmatpush1.msra.mxu0 0.0
  %1244 = vmatprep.subr.mxu0 0.0
  %1245 = vmatpush1.msra.mxu0 0.0
  %1246 = vmatprep.subr.mxu0 0.0
  %1247 = vmatpush1.msra.mxu0 0.0
  %1248 = vmatprep.mubr.f32.mxu0 %v1178
  %1249 = vmatmul.mubr.f32.gmra.mrb[0].mxu0 %v1170
  %v1250 = vpop.f32.mrb[0].mxu0
  %v1251 = vadd.f32 %v1176, %v1250
  %v1252 = vpop.f32.mrb[0].mxu0
  %1253 = vdwg.mxu0
  %v1254 = vmax.f32 %v1251, 0.0
  %v1255 = vld [vmem:[%s6 + $0xd] sm:$0x1]
  %v1256 = vld [vmem:[%s6 + $0xe] sm:$0x1]
  %v1257 = vsel %vm136, %v1254, 0.0
  %1258 = vadd.xlane.f32.xlu0 %v1257
  %v1259 = vpop.xlane.xlu0 %1258
  %v1260 = vmul.f32 %v1259, %v140
  %v1261 = vsub.f32 %v1254, %v1260
  %v1262 = vmul.f32 %v1261, %v1261
  %v1263 = vsel %vm136, %v1262, 0.0
  %1264 = vadd.xlane.f32.xlu0 %v1263
  %v1265 = vpop.xlane.xlu0 %1264
  %v1266 = vmul.f32 %v1265, %v140
  %v1267 = vadd.f32 %v1266, 1e-05
  %v1268 = vrsqrt.pop %v1267
  %v1269 = vmul.f32 %v1261, %v1268
  %v1270 = vlaneseq
  %v1271 = vshrl.u32 %v1270, 7
  %v1272 = vsub.s32 0, %v1271
  %v1273 = vrot.slane %v1255, %v1272
  %v1274 = vmul.f32 %v1269, %v1273
  %v1275 = vlaneseq
  %v1276 = vshrl.u32 %v1275, 7
  %v1277 = vsub.s32 0, %v1276
  %v1278 = vrot.slane %v1256, %v1277
  %v1279 = vadd.f32 %v1274, %v1278
  %s1280 = scalar_lea.vmem %s4, 192
  %v1281 = vld [vmem:[%s1280] sm:$0xff]
  %v1282 = vld [vmem:[%s1280 + $0x8] sm:$0xff]
  %v1283 = vld [vmem:[%s1280 + $0x10] sm:$0xff]
  %v1284 = vld [vmem:[%s1280 + $0x18] sm:$0xff]
  %v1285 = vld [vmem:[%s1280 + $0x20] sm:$0xff]
  %v1286 = vld [vmem:[%s1280 + $0x28] sm:$0xff]
  %v1287 = vld [vmem:[%s1280 + $0x30] sm:$0xff]
  %v1288 = vld [vmem:[%s1280 + $0x38] sm:$0xff]
  %v1289 = vld [vmem:[%s6 + $0xf] sm:$0x1]
  %v1290 = vlaneseq
  %v1291 = vshrl.u32 %v1290, 7
  %v1292 = vsub.s32 0, %v1291
  %v1293 = vrot.slane %v1289, %v1292
  %v1295 = vsel %vm136, %v1279, 0
  %1297 = vmatprep.subr.mxu0 0.0
  %1298 = vmatpush1.msra.mxu0 %v1281
  %1299 = vmatprep.subr.mxu0 0.0
  %1300 = vmatpush1.msra.mxu0 %v1282
  %1301 = vmatprep.subr.mxu0 0.0
  %1302 = vmatpush1.msra.mxu0 %v1283
  %1303 = vmatprep.subr.mxu0 0.0
  %1304 = vmatpush1.msra.mxu0 %v1284
  %1305 = vmatprep.subr.mxu0 0.0
  %1306 = vmatpush1.msra.mxu0 %v1285
  %1307 = vmatprep.subr.mxu0 0.0
  %1308 = vmatpush1.msra.mxu0 %v1286
  %1309 = vmatprep.subr.mxu0 0.0
  %1310 = vmatpush1.msra.mxu0 %v1287
  %1311 = vmatprep.subr.mxu0 0.0
  %1312 = vmatpush1.msra.mxu0 %v1288
  %1313 = vmatprep.subr.mxu0 0.0
  %1314 = vmatpush1.msra.mxu0 0.0
  %1315 = vmatprep.subr.mxu0 0.0
  %1316 = vmatpush1.msra.mxu0 0.0
  %1317 = vmatprep.subr.mxu0 0.0
  %1318 = vmatpush1.msra.mxu0 0.0
  %1319 = vmatprep.subr.mxu0 0.0
  %1320 = vmatpush1.msra.mxu0 0.0
  %1321 = vmatprep.subr.mxu0 0.0
  %1322 = vmatpush1.msra.mxu0 0.0
  %1323 = vmatprep.subr.mxu0 0.0
  %1324 = vmatpush1.msra.mxu0 0.0
  %1325 = vmatprep.subr.mxu0 0.0
  %1326 = vmatpush1.msra.mxu0 0.0
  %1327 = vmatprep.subr.mxu0 0.0
  %1328 = vmatpush1.msra.mxu0 0.0
  %1329 = vmatprep.subr.mxu0 0.0
  %1330 = vmatpush1.msra.mxu0 0.0
  %1331 = vmatprep.subr.mxu0 0.0
  %1332 = vmatpush1.msra.mxu0 0.0
  %1333 = vmatprep.subr.mxu0 0.0
  %1334 = vmatpush1.msra.mxu0 0.0
  %1335 = vmatprep.subr.mxu0 0.0
  %1336 = vmatpush1.msra.mxu0 0.0
  %1337 = vmatprep.subr.mxu0 0.0
  %1338 = vmatpush1.msra.mxu0 0.0
  %1339 = vmatprep.subr.mxu0 0.0
  %1340 = vmatpush1.msra.mxu0 0.0
  %1341 = vmatprep.subr.mxu0 0.0
  %1342 = vmatpush1.msra.mxu0 0.0
  %1343 = vmatprep.subr.mxu0 0.0
  %1344 = vmatpush1.msra.mxu0 0.0
  %1345 = vmatprep.subr.mxu0 0.0
  %1346 = vmatpush1.msra.mxu0 0.0
  %1347 = vmatprep.subr.mxu0 0.0
  %1348 = vmatpush1.msra.mxu0 0.0
  %1349 = vmatprep.subr.mxu0 0.0
  %1350 = vmatpush1.msra.mxu0 0.0
  %1351 = vmatprep.subr.mxu0 0.0
  %1352 = vmatpush1.msra.mxu0 0.0
  %1353 = vmatprep.subr.mxu0 0.0
  %1354 = vmatpush1.msra.mxu0 0.0
  %1355 = vmatprep.subr.mxu0 0.0
  %1356 = vmatpush1.msra.mxu0 0.0
  %1357 = vmatprep.subr.mxu0 0.0
  %1358 = vmatpush1.msra.mxu0 0.0
  %1359 = vmatprep.subr.mxu0 0.0
  %1360 = vmatpush1.msra.mxu0 0.0
  %1361 = vmatprep.mubr.f32.mxu0 0.0
  %1362 = vmatmul.mubr.f32.gmra.mrb[0].mxu0 %v1295
  %v1363 = vpop.f32.mrb[0].mxu0
  %v1364 = vadd.f32 %v1293, %v1363
  %v1365 = vpop.f32.mrb[0].mxu0
  %1366 = vdwg.mxu0
  %v1367 = vmax.f32 %v1364, 0.0
  %v1368 = vld [vmem:[%s6 + $0x10] sm:$0x1]
  %v1369 = vld [vmem:[%s6 + $0x11] sm:$0x1]
  %v1370 = vsel %vm136, %v1367, 0.0
  %1371 = vadd.xlane.f32.xlu0 %v1370
  %v1372 = vpop.xlane.xlu0 %1371
  %v1373 = vmul.f32 %v1372, %v140
  %v1374 = vsub.f32 %v1367, %v1373
  %v1375 = vmul.f32 %v1374, %v1374
  %v1376 = vsel %vm136, %v1375, 0.0
  %1377 = vadd.xlane.f32.xlu0 %v1376
  %v1378 = vpop.xlane.xlu0 %1377
  %v1379 = vmul.f32 %v1378, %v140
  %v1380 = vadd.f32 %v1379, 1e-05
  %v1381 = vrsqrt.pop %v1380
  %v1382 = vmul.f32 %v1374, %v1381
  %v1383 = vlaneseq
  %v1384 = vshrl.u32 %v1383, 7
  %v1385 = vsub.s32 0, %v1384
  %v1386 = vrot.slane %v1368, %v1385
  %v1387 = vmul.f32 %v1382, %v1386
  %v1388 = vlaneseq
  %v1389 = vshrl.u32 %v1388, 7
  %v1390 = vsub.s32 0, %v1389
  %v1391 = vrot.slane %v1369, %v1390
  %v1392 = vadd.f32 %v1387, %v1391
  %s1393 = scalar_lea.vmem %s4, 256
  %v1394 = vld [vmem:[%s1393] sm:$0xff]
  %v1395 = vld [vmem:[%s1393 + $0x8] sm:$0xff]
  %v1396 = vld [vmem:[%s1393 + $0x10] sm:$0xff]
  %v1397 = vld [vmem:[%s1393 + $0x18] sm:$0xff]
  %v1398 = vld [vmem:[%s1393 + $0x20] sm:$0xff]
  %v1399 = vld [vmem:[%s1393 + $0x28] sm:$0xff]
  %v1400 = vld [vmem:[%s1393 + $0x30] sm:$0xff]
  %v1401 = vld [vmem:[%s1393 + $0x38] sm:$0xff]
  %v1402 = vld [vmem:[%s6 + $0x12] sm:$0x1]
  %v1403 = vlaneseq
  %v1404 = vshrl.u32 %v1403, 7
  %v1405 = vsub.s32 0, %v1404
  %v1406 = vrot.slane %v1402, %v1405
  %v1408 = vsel %vm136, %v1392, 0
  %1410 = vmatprep.subr.mxu0 0.0
  %1411 = vmatpush1.msra.mxu0 %v1394
  %1412 = vmatprep.subr.mxu0 0.0
  %1413 = vmatpush1.msra.mxu0 %v1395
  %1414 = vmatprep.subr.mxu0 0.0
  %1415 = vmatpush1.msra.mxu0 %v1396
  %1416 = vmatprep.subr.mxu0 0.0
  %1417 = vmatpush1.msra.mxu0 %v1397
  %1418 = vmatprep.subr.mxu0 0.0
  %1419 = vmatpush1.msra.mxu0 %v1398
  %1420 = vmatprep.subr.mxu0 0.0
  %1421 = vmatpush1.msra.mxu0 %v1399
  %1422 = vmatprep.subr.mxu0 0.0
  %1423 = vmatpush1.msra.mxu0 %v1400
  %1424 = vmatprep.subr.mxu0 0.0
  %1425 = vmatpush1.msra.mxu0 %v1401
  %1426 = vmatprep.subr.mxu0 0.0
  %1427 = vmatpush1.msra.mxu0 0.0
  %1428 = vmatprep.subr.mxu0 0.0
  %1429 = vmatpush1.msra.mxu0 0.0
  %1430 = vmatprep.subr.mxu0 0.0
  %1431 = vmatpush1.msra.mxu0 0.0
  %1432 = vmatprep.subr.mxu0 0.0
  %1433 = vmatpush1.msra.mxu0 0.0
  %1434 = vmatprep.subr.mxu0 0.0
  %1435 = vmatpush1.msra.mxu0 0.0
  %1436 = vmatprep.subr.mxu0 0.0
  %1437 = vmatpush1.msra.mxu0 0.0
  %1438 = vmatprep.subr.mxu0 0.0
  %1439 = vmatpush1.msra.mxu0 0.0
  %1440 = vmatprep.subr.mxu0 0.0
  %1441 = vmatpush1.msra.mxu0 0.0
  %1442 = vmatprep.subr.mxu0 0.0
  %1443 = vmatpush1.msra.mxu0 0.0
  %1444 = vmatprep.subr.mxu0 0.0
  %1445 = vmatpush1.msra.mxu0 0.0
  %1446 = vmatprep.subr.mxu0 0.0
  %1447 = vmatpush1.msra.mxu0 0.0
  %1448 = vmatprep.subr.mxu0 0.0
  %1449 = vmatpush1.msra.mxu0 0.0
  %1450 = vmatprep.subr.mxu0 0.0
  %1451 = vmatpush1.msra.mxu0 0.0
  %1452 = vmatprep.subr.mxu0 0.0
  %1453 = vmatpush1.msra.mxu0 0.0
  %1454 = vmatprep.subr.mxu0 0.0
  %1455 = vmatpush1.msra.mxu0 0.0
  %1456 = vmatprep.subr.mxu0 0.0
  %1457 = vmatpush1.msra.mxu0 0.0
  %1458 = vmatprep.subr.mxu0 0.0
  %1459 = vmatpush1.msra.mxu0 0.0
  %1460 = vmatprep.subr.mxu0 0.0
  %1461 = vmatpush1.msra.mxu0 0.0
  %1462 = vmatprep.subr.mxu0 0.0
  %1463 = vmatpush1.msra.mxu0 0.0
  %1464 = vmatprep.subr.mxu0 0.0
  %1465 = vmatpush1.msra.mxu0 0.0
  %1466 = vmatprep.subr.mxu0 0.0
  %1467 = vmatpush1.msra.mxu0 0.0
  %1468 = vmatprep.subr.mxu0 0.0
  %1469 = vmatpush1.msra.mxu0 0.0
  %1470 = vmatprep.subr.mxu0 0.0
  %1471 = vmatpush1.msra.mxu0 0.0
  %1472 = vmatprep.subr.mxu0 0.0
  %1473 = vmatpush1.msra.mxu0 0.0
  %1474 = vmatprep.mubr.f32.mxu0 0.0
  %1475 = vmatmul.mubr.f32.gmra.mrb[0].mxu0 %v1408
  %v1476 = vpop.f32.mrb[0].mxu0
  %v1477 = vadd.f32 %v1406, %v1476
  %v1478 = vpop.f32.mrb[0].mxu0
  %1479 = vdwg.mxu0
  %v1480 = vmax.f32 %v1477, 0.0
  %v1481 = vld [vmem:[%s6 + $0x13] sm:$0x1]
  %v1482 = vld [vmem:[%s6 + $0x14] sm:$0x1]
  %v1483 = vsel %vm136, %v1480, 0.0
  %1484 = vadd.xlane.f32.xlu0 %v1483
  %v1485 = vpop.xlane.xlu0 %1484
  %v1486 = vmul.f32 %v1485, %v140
  %v1487 = vsub.f32 %v1480, %v1486
  %v1488 = vmul.f32 %v1487, %v1487
  %v1489 = vsel %vm136, %v1488, 0.0
  %1490 = vadd.xlane.f32.xlu0 %v1489
  %v1491 = vpop.xlane.xlu0 %1490
  %v1492 = vmul.f32 %v1491, %v140
  %v1493 = vadd.f32 %v1492, 1e-05
  %v1494 = vrsqrt.pop %v1493
  %v1495 = vmul.f32 %v1487, %v1494
  %v1496 = vlaneseq
  %v1497 = vshrl.u32 %v1496, 7
  %v1498 = vsub.s32 0, %v1497
  %v1499 = vrot.slane %v1481, %v1498
  %v1500 = vmul.f32 %v1495, %v1499
  %v1501 = vlaneseq
  %v1502 = vshrl.u32 %v1501, 7
  %v1503 = vsub.s32 0, %v1502
  %v1504 = vrot.slane %v1482, %v1503
  %v1505 = vadd.f32 %v1500, %v1504
  %s1506 = scalar_lea.vmem %s4, 320
  %v1507 = vld [vmem:[%s1506] sm:$0xff]
  %v1508 = vld [vmem:[%s1506 + $0x8] sm:$0xff]
  %v1509 = vld [vmem:[%s1506 + $0x10] sm:$0xff]
  %v1510 = vld [vmem:[%s1506 + $0x18] sm:$0xff]
  %v1511 = vld [vmem:[%s1506 + $0x20] sm:$0xff]
  %v1512 = vld [vmem:[%s1506 + $0x28] sm:$0xff]
  %v1513 = vld [vmem:[%s1506 + $0x30] sm:$0xff]
  %v1514 = vld [vmem:[%s1506 + $0x38] sm:$0xff]
  %v1515 = vld [vmem:[%s6 + $0x15] sm:$0x1]
  %v1516 = vlaneseq
  %v1517 = vshrl.u32 %v1516, 7
  %v1518 = vsub.s32 0, %v1517
  %v1519 = vrot.slane %v1515, %v1518
  %v1521 = vsel %vm136, %v1505, 0
  %1523 = vmatprep.subr.mxu0 0.0
  %1524 = vmatpush1.msra.mxu0 %v1507
  %1525 = vmatprep.subr.mxu0 0.0
  %1526 = vmatpush1.msra.mxu0 %v1508
  %1527 = vmatprep.subr.mxu0 0.0
  %1528 = vmatpush1.msra.mxu0 %v1509
  %1529 = vmatprep.subr.mxu0 0.0
  %1530 = vmatpush1.msra.mxu0 %v1510
  %1531 = vmatprep.subr.mxu0 0.0
  %1532 = vmatpush1.msra.mxu0 %v1511
  %1533 = vmatprep.subr.mxu0 0.0
  %1534 = vmatpush1.msra.mxu0 %v1512
  %1535 = vmatprep.subr.mxu0 0.0
  %1536 = vmatpush1.msra.mxu0 %v1513
  %1537 = vmatprep.subr.mxu0 0.0
  %1538 = vmatpush1.msra.mxu0 %v1514
  %1539 = vmatprep.subr.mxu0 0.0
  %1540 = vmatpush1.msra.mxu0 0.0
  %1541 = vmatprep.subr.mxu0 0.0
  %1542 = vmatpush1.msra.mxu0 0.0
  %1543 = vmatprep.subr.mxu0 0.0
  %1544 = vmatpush1.msra.mxu0 0.0
  %1545 = vmatprep.subr.mxu0 0.0
  %1546 = vmatpush1.msra.mxu0 0.0
  %1547 = vmatprep.subr.mxu0 0.0
  %1548 = vmatpush1.msra.mxu0 0.0
  %1549 = vmatprep.subr.mxu0 0.0
  %1550 = vmatpush1.msra.mxu0 0.0
  %1551 = vmatprep.subr.mxu0 0.0
  %1552 = vmatpush1.msra.mxu0 0.0
  %1553 = vmatprep.subr.mxu0 0.0
  %1554 = vmatpush1.msra.mxu0 0.0
  %1555 = vmatprep.subr.mxu0 0.0
  %1556 = vmatpush1.msra.mxu0 0.0
  %1557 = vmatprep.subr.mxu0 0.0
  %1558 = vmatpush1.msra.mxu0 0.0
  %1559 = vmatprep.subr.mxu0 0.0
  %1560 = vmatpush1.msra.mxu0 0.0
  %1561 = vmatprep.subr.mxu0 0.0
  %1562 = vmatpush1.msra.mxu0 0.0
  %1563 = vmatprep.subr.mxu0 0.0
  %1564 = vmatpush1.msra.mxu0 0.0
  %1565 = vmatprep.subr.mxu0 0.0
  %1566 = vmatpush1.msra.mxu0 0.0
  %1567 = vmatprep.subr.mxu0 0.0
  %1568 = vmatpush1.msra.mxu0 0.0
  %1569 = vmatprep.subr.mxu0 0.0
  %1570 = vmatpush1.msra.mxu0 0.0
  %1571 = vmatprep.subr.mxu0 0.0
  %1572 = vmatpush1.msra.mxu0 0.0
  %1573 = vmatprep.subr.mxu0 0.0
  %1574 = vmatpush1.msra.mxu0 0.0
  %1575 = vmatprep.subr.mxu0 0.0
  %1576 = vmatpush1.msra.mxu0 0.0
  %1577 = vmatprep.subr.mxu0 0.0
  %1578 = vmatpush1.msra.mxu0 0.0
  %1579 = vmatprep.subr.mxu0 0.0
  %1580 = vmatpush1.msra.mxu0 0.0
  %1581 = vmatprep.subr.mxu0 0.0
  %1582 = vmatpush1.msra.mxu0 0.0
  %1583 = vmatprep.subr.mxu0 0.0
  %1584 = vmatpush1.msra.mxu0 0.0
  %1585 = vmatprep.subr.mxu0 0.0
  %1586 = vmatpush1.msra.mxu0 0.0
  %1587 = vmatprep.mubr.f32.mxu0 0.0
  %1588 = vmatmul.mubr.f32.gmra.mrb[0].mxu0 %v1521
  %v1589 = vpop.f32.mrb[0].mxu0
  %v1590 = vadd.f32 %v1519, %v1589
  %v1591 = vpop.f32.mrb[0].mxu0
  %1592 = vdwg.mxu0
  %v1593 = vmax.f32 %v1590, 0.0
  %v1594 = vld [vmem:[%s6 + $0x16] sm:$0x1]
  %v1595 = vld [vmem:[%s6 + $0x17] sm:$0x1]
  %v1596 = vsel %vm136, %v1593, 0.0
  %1597 = vadd.xlane.f32.xlu0 %v1596
  %v1598 = vpop.xlane.xlu0 %1597
  %v1599 = vmul.f32 %v1598, %v140
  %v1600 = vsub.f32 %v1593, %v1599
  %v1601 = vmul.f32 %v1600, %v1600
  %v1602 = vsel %vm136, %v1601, 0.0
  %1603 = vadd.xlane.f32.xlu0 %v1602
  %v1604 = vpop.xlane.xlu0 %1603
  %v1605 = vmul.f32 %v1604, %v140
  %v1606 = vadd.f32 %v1605, 1e-05
  %v1607 = vrsqrt.pop %v1606
  %v1608 = vmul.f32 %v1600, %v1607
  %v1609 = vlaneseq
  %v1610 = vshrl.u32 %v1609, 7
  %v1611 = vsub.s32 0, %v1610
  %v1612 = vrot.slane %v1594, %v1611
  %v1613 = vmul.f32 %v1608, %v1612
  %v1614 = vlaneseq
  %v1615 = vshrl.u32 %v1614, 7
  %v1616 = vsub.s32 0, %v1615
  %v1617 = vrot.slane %v1595, %v1616
  %v1618 = vadd.f32 %v1613, %v1617
  %v1619 = vlaneseq
  %v1620 = vshrl.u32 %v1619, 7
  %vm1621 = vcmp.lt.s32.totalorder %v1620, 0
  %v1622 = vsub.s32 0, %v1620
  %v1623 = vsel %vm1621, %v1622, %v1620
  %v1624 = vshrl.u32 %v1623, 1
  %v1625 = vand.u32 %v1623, 1
  %v1626 = vsub.s32 0, %v1625
  %v1627 = vsel %vm1621, %v1626, %v1625
  %vm1628 = vcmp.ne.s32.totalorder %v1627, 0
  %vm1629 = vcmp.lt.s32.totalorder %v1627, 0
  %vm1630 = vmand %vm1629, %vm1628
  %v1631 = vadd.s32 %v1627, 2
  %v1632 = vsel %vm1630, %v1631, %v1627
  %vm1633 = vcmp.eq.s32.totalorder %v1632, 0
  %v1634 = vsel %vm1633, 1, 0
  %vm1635 = vcmp.eq.s32.totalorder %v1634, 1
  %v1636 = vsel %vm1635, %v1618, 0.0
  %v1637 = vrot.slane %v1618, 7
  %vm1638 = vcmp.eq.s32.totalorder %v1632, 1
  %v1639 = vsel %vm1638, 1, 0
  %vm1640 = vcmp.eq.s32.totalorder %v1639, 1
  %v1641 = vsel %vm1640, %v1637, %v1636
  %v1642 = vrot.slane %v1618, 1
  %v1643 = vsel %vm1635, %v1642, 0.0
  %v1644 = vsel %vm1640, %v1618, %v1643
  %1646 = vrot.lane.b32.xlu0 %v1644, 64
  %v1647 = vpop.permute.xlu0 %1646
  %v1649 = vsel %vm136, %v1641, %v1647
  %v1650 = vld [vmem:[%s2 + $0x98] sm:$0xff]
  %v1651 = vld [vmem:[%s2 + $0xa0] sm:$0xff]
  %v1652 = vld [vmem:[%s2 + $0xa8] sm:$0xff]
  %v1653 = vld [vmem:[%s2 + $0xb0] sm:$0xff]
  %v1654 = vld [vmem:[%s2 + $0xb8] sm:$0xff]
  %v1655 = vld [vmem:[%s2 + $0xc0] sm:$0xff]
  %v1656 = vld [vmem:[%s2 + $0xc8] sm:$0xff]
  %v1657 = vld [vmem:[%s2 + $0xd0] sm:$0xff]
  %v1658 = vld [vmem:[%s2 + $0xd8] sm:$0xff]
  %v1659 = vld [vmem:[%s2 + $0xe0] sm:$0xff]
  %v1660 = vld [vmem:[%s2 + $0xe8] sm:$0xff]
  %v1661 = vld [vmem:[%s2 + $0xf0] sm:$0xff]
  %v1662 = vld [vmem:[%s2 + $0xf8] sm:$0xff]
  %v1663 = vld [vmem:[%s2 + $0x100] sm:$0xff]
  %v1664 = vld [vmem:[%s2 + $0x108] sm:$0xff]
  %v1665 = vld [vmem:[%s2 + $0x110] sm:$0xff]
  %v1666 = vld [vmem:[%s2 + $0x118] sm:$0xff]
  %v1667 = vld [vmem:[%s2 + $0x120] sm:$0xff]
  %v1668 = vld [vmem:[%s2 + $0x128] sm:$0xff]
  %v1669 = vld [vmem:[%s2 + $0x130] sm:$0xff]
  %v1670 = vld [vmem:[%s2 + $0x138] sm:$0xff]
  %v1671 = vld [vmem:[%s2 + $0x140] sm:$0xff]
  %v1672 = vld [vmem:[%s2 + $0x148] sm:$0xff]
  %v1673 = vld [vmem:[%s2 + $0x150] sm:$0xff]
  %v1674 = vld [vmem:[%s2 + $0x158] sm:$0xff]
  %v1675 = vld [vmem:[%s2 + $0x160] sm:$0xff]
  %v1676 = vld [vmem:[%s2 + $0x168] sm:$0xff]
  %v1677 = vld [vmem:[%s2 + $0x170] sm:$0xff]
  %v1678 = vld [vmem:[%s2 + $0x178] sm:$0xff]
  %v1679 = vld [vmem:[%s2 + $0x180] sm:$0xff]
  %v1680 = vld [vmem:[%s2 + $0x188] sm:$0xff]
  %v1681 = vld [vmem:[%s2 + $0x190] sm:$0xff]
  %s1682 = scalar_lea.vmem %s7, 4
  %v1683 = vld [vmem:[%s1682] ss:$8 sm:$0x3]
  %s1684 = scalar_lea.vmem %s7, 5
  %v1685 = vld [vmem:[%s1684] ss:$8 sm:$0x3]
  %v1686 = vadd.f32 %v1104, %v1649
  %1687 = vadd.xlane.f32.xlu0 %v1686
  %v1688 = vpop.xlane.xlu0 %1687
  %v1689 = vrcp.pop 256.0
  %v1690 = vmul.f32 %v1688, %v1689
  %v1691 = vsub.f32 %v1104, %v1690
  %v1692 = vsub.f32 %v1649, %v1690
  %v1693 = vmul.f32 %v1691, %v1691
  %v1694 = vmul.f32 %v1692, %v1692
  %v1695 = vadd.f32 %v1693, %v1694
  %1696 = vadd.xlane.f32.xlu0 %v1695
  %v1697 = vpop.xlane.xlu0 %1696
  %v1698 = vmul.f32 %v1697, %v1689
  %v1699 = vadd.f32 %v1698, 1e-05
  %v1700 = vrsqrt.pop %v1699
  %v1701 = vmul.f32 %v1691, %v1700
  %v1702 = vmul.f32 %v1692, %v1700
  %v1704 = vlaneseq
  %v1705 = vshrl.u32 %v1704, 7
  %v1706 = vsub.s32 0, %v1705
  %v1707 = vrot.slane %v1683, %v1706
  %v1708 = vlaneseq
  %v1709 = vshrl.u32 %v1708, 7
  %v1710 = vsub.s32 1, %v1709
  %v1711 = vrot.slane %v1683, %v1710
  %v1714 = vmul.f32 %v1701, %v1707
  %v1715 = vmul.f32 %v1702, %v1711
  %v1717 = vlaneseq
  %v1718 = vshrl.u32 %v1717, 7
  %v1719 = vsub.s32 0, %v1718
  %v1720 = vrot.slane %v1685, %v1719
  %v1721 = vlaneseq
  %v1722 = vshrl.u32 %v1721, 7
  %v1723 = vsub.s32 1, %v1722
  %v1724 = vrot.slane %v1685, %v1723
  %v1727 = vadd.f32 %v1714, %v1720
  %v1728 = vadd.f32 %v1715, %v1724
  %v1729 = vld [vmem:[%s6 + $0x18] sm:$0x1]
  %v1730 = vlaneseq
  %v1731 = vshrl.u32 %v1730, 7
  %v1732 = vsub.s32 0, %v1731
  %v1733 = vrot.slane %v1729, %v1732
  %1734 = vmatprep.subr.mxu0 0.0
  %1735 = vmatpush1.msra.mxu0 %v1650
  %1736 = vmatprep.subr.mxu0 0.0
  %1737 = vmatpush1.msra.mxu0 %v1651
  %1738 = vmatprep.subr.mxu0 0.0
  %1739 = vmatpush1.msra.mxu0 %v1652
  %1740 = vmatprep.subr.mxu0 0.0
  %1741 = vmatpush1.msra.mxu0 %v1653
  %1742 = vmatprep.subr.mxu0 0.0
  %1743 = vmatpush1.msra.mxu0 %v1654
  %1744 = vmatprep.subr.mxu0 0.0
  %1745 = vmatpush1.msra.mxu0 %v1655
  %1746 = vmatprep.subr.mxu0 0.0
  %1747 = vmatpush1.msra.mxu0 %v1656
  %1748 = vmatprep.subr.mxu0 0.0
  %1749 = vmatpush1.msra.mxu0 %v1657
  %1750 = vmatprep.subr.mxu0 0.0
  %1751 = vmatpush1.msra.mxu0 %v1658
  %1752 = vmatprep.subr.mxu0 0.0
  %1753 = vmatpush1.msra.mxu0 %v1659
  %1754 = vmatprep.subr.mxu0 0.0
  %1755 = vmatpush1.msra.mxu0 %v1660
  %1756 = vmatprep.subr.mxu0 0.0
  %1757 = vmatpush1.msra.mxu0 %v1661
  %1758 = vmatprep.subr.mxu0 0.0
  %1759 = vmatpush1.msra.mxu0 %v1662
  %1760 = vmatprep.subr.mxu0 0.0
  %1761 = vmatpush1.msra.mxu0 %v1663
  %1762 = vmatprep.subr.mxu0 0.0
  %1763 = vmatpush1.msra.mxu0 %v1664
  %1764 = vmatprep.subr.mxu0 0.0
  %1765 = vmatpush1.msra.mxu0 %v1665
  %1766 = vmatprep.subr.mxu0 0.0
  %1767 = vmatpush1.msra.mxu0 %v1666
  %1768 = vmatprep.subr.mxu0 0.0
  %1769 = vmatpush1.msra.mxu0 %v1667
  %1770 = vmatprep.subr.mxu0 0.0
  %1771 = vmatpush1.msra.mxu0 %v1668
  %1772 = vmatprep.subr.mxu0 0.0
  %1773 = vmatpush1.msra.mxu0 %v1669
  %1774 = vmatprep.subr.mxu0 0.0
  %1775 = vmatpush1.msra.mxu0 %v1670
  %1776 = vmatprep.subr.mxu0 0.0
  %1777 = vmatpush1.msra.mxu0 %v1671
  %1778 = vmatprep.subr.mxu0 0.0
  %1779 = vmatpush1.msra.mxu0 %v1672
  %1780 = vmatprep.subr.mxu0 0.0
  %1781 = vmatpush1.msra.mxu0 %v1673
  %1782 = vmatprep.subr.mxu0 0.0
  %1783 = vmatpush1.msra.mxu0 %v1674
  %1784 = vmatprep.subr.mxu0 0.0
  %1785 = vmatpush1.msra.mxu0 %v1675
  %1786 = vmatprep.subr.mxu0 0.0
  %1787 = vmatpush1.msra.mxu0 %v1676
  %1788 = vmatprep.subr.mxu0 0.0
  %1789 = vmatpush1.msra.mxu0 %v1677
  %1790 = vmatprep.subr.mxu0 0.0
  %1791 = vmatpush1.msra.mxu0 %v1678
  %1792 = vmatprep.subr.mxu0 0.0
  %1793 = vmatpush1.msra.mxu0 %v1679
  %1794 = vmatprep.subr.mxu0 0.0
  %1795 = vmatpush1.msra.mxu0 %v1680
  %1796 = vmatprep.subr.mxu0 0.0
  %1797 = vmatpush1.msra.mxu0 %v1681
  %1798 = vmatprep.mubr.f32.mxu0 %v1728
  %1799 = vmatmul.mubr.f32.gmra.mrb[0].mxu0 %v1727
  %v1800 = vpop.f32.mrb[0].mxu0
  %v1801 = vadd.f32 %v1733, %v1800
  %v1802 = vpop.f32.mrb[0].mxu0
  %1803 = vdwg.mxu0
  %v1804 = vmax.f32 %v1801, 0.0
  %v1805 = vld [vmem:[%s6 + $0x19] sm:$0x1]
  %v1806 = vld [vmem:[%s6 + $0x1a] sm:$0x1]
  %v1807 = vsel %vm136, %v1804, 0.0
  %1808 = vadd.xlane.f32.xlu0 %v1807
  %v1809 = vpop.xlane.xlu0 %1808
  %v1810 = vmul.f32 %v1809, %v140
  %v1811 = vsub.f32 %v1804, %v1810
  %v1812 = vmul.f32 %v1811, %v1811
  %v1813 = vsel %vm136, %v1812, 0.0
  %1814 = vadd.xlane.f32.xlu0 %v1813
  %v1815 = vpop.xlane.xlu0 %1814
  %v1816 = vmul.f32 %v1815, %v140
  %v1817 = vadd.f32 %v1816, 1e-05
  %v1818 = vrsqrt.pop %v1817
  %v1819 = vmul.f32 %v1811, %v1818
  %v1820 = vlaneseq
  %v1821 = vshrl.u32 %v1820, 7
  %v1822 = vsub.s32 0, %v1821
  %v1823 = vrot.slane %v1805, %v1822
  %v1824 = vmul.f32 %v1819, %v1823
  %v1825 = vlaneseq
  %v1826 = vshrl.u32 %v1825, 7
  %v1827 = vsub.s32 0, %v1826
  %v1828 = vrot.slane %v1806, %v1827
  %v1829 = vadd.f32 %v1824, %v1828
  %s1830 = scalar_lea.vmem %s4, 384
  %v1831 = vld [vmem:[%s1830] sm:$0xff]
  %v1832 = vld [vmem:[%s1830 + $0x8] sm:$0xff]
  %v1833 = vld [vmem:[%s1830 + $0x10] sm:$0xff]
  %v1834 = vld [vmem:[%s1830 + $0x18] sm:$0xff]
  %v1835 = vld [vmem:[%s1830 + $0x20] sm:$0xff]
  %v1836 = vld [vmem:[%s1830 + $0x28] sm:$0xff]
  %v1837 = vld [vmem:[%s1830 + $0x30] sm:$0xff]
  %v1838 = vld [vmem:[%s1830 + $0x38] sm:$0xff]
  %v1839 = vld [vmem:[%s6 + $0x1b] sm:$0x1]
  %v1840 = vlaneseq
  %v1841 = vshrl.u32 %v1840, 7
  %v1842 = vsub.s32 0, %v1841
  %v1843 = vrot.slane %v1839, %v1842
  %v1845 = vsel %vm136, %v1829, 0
  %1847 = vmatprep.subr.mxu0 0.0
  %1848 = vmatpush1.msra.mxu0 %v1831
  %1849 = vmatprep.subr.mxu0 0.0
  %1850 = vmatpush1.msra.mxu0 %v1832
  %1851 = vmatprep.subr.mxu0 0.0
  %1852 = vmatpush1.msra.mxu0 %v1833
  %1853 = vmatprep.subr.mxu0 0.0
  %1854 = vmatpush1.msra.mxu0 %v1834
  %1855 = vmatprep.subr.mxu0 0.0
  %1856 = vmatpush1.msra.mxu0 %v1835
  %1857 = vmatprep.subr.mxu0 0.0
  %1858 = vmatpush1.msra.mxu0 %v1836
  %1859 = vmatprep.subr.mxu0 0.0
  %1860 = vmatpush1.msra.mxu0 %v1837
  %1861 = vmatprep.subr.mxu0 0.0
  %1862 = vmatpush1.msra.mxu0 %v1838
  %1863 = vmatprep.subr.mxu0 0.0
  %1864 = vmatpush1.msra.mxu0 0.0
  %1865 = vmatprep.subr.mxu0 0.0
  %1866 = vmatpush1.msra.mxu0 0.0
  %1867 = vmatprep.subr.mxu0 0.0
  %1868 = vmatpush1.msra.mxu0 0.0
  %1869 = vmatprep.subr.mxu0 0.0
  %1870 = vmatpush1.msra.mxu0 0.0
  %1871 = vmatprep.subr.mxu0 0.0
  %1872 = vmatpush1.msra.mxu0 0.0
  %1873 = vmatprep.subr.mxu0 0.0
  %1874 = vmatpush1.msra.mxu0 0.0
  %1875 = vmatprep.subr.mxu0 0.0
  %1876 = vmatpush1.msra.mxu0 0.0
  %1877 = vmatprep.subr.mxu0 0.0
  %1878 = vmatpush1.msra.mxu0 0.0
  %1879 = vmatprep.subr.mxu0 0.0
  %1880 = vmatpush1.msra.mxu0 0.0
  %1881 = vmatprep.subr.mxu0 0.0
  %1882 = vmatpush1.msra.mxu0 0.0
  %1883 = vmatprep.subr.mxu0 0.0
  %1884 = vmatpush1.msra.mxu0 0.0
  %1885 = vmatprep.subr.mxu0 0.0
  %1886 = vmatpush1.msra.mxu0 0.0
  %1887 = vmatprep.subr.mxu0 0.0
  %1888 = vmatpush1.msra.mxu0 0.0
  %1889 = vmatprep.subr.mxu0 0.0
  %1890 = vmatpush1.msra.mxu0 0.0
  %1891 = vmatprep.subr.mxu0 0.0
  %1892 = vmatpush1.msra.mxu0 0.0
  %1893 = vmatprep.subr.mxu0 0.0
  %1894 = vmatpush1.msra.mxu0 0.0
  %1895 = vmatprep.subr.mxu0 0.0
  %1896 = vmatpush1.msra.mxu0 0.0
  %1897 = vmatprep.subr.mxu0 0.0
  %1898 = vmatpush1.msra.mxu0 0.0
  %1899 = vmatprep.subr.mxu0 0.0
  %1900 = vmatpush1.msra.mxu0 0.0
  %1901 = vmatprep.subr.mxu0 0.0
  %1902 = vmatpush1.msra.mxu0 0.0
  %1903 = vmatprep.subr.mxu0 0.0
  %1904 = vmatpush1.msra.mxu0 0.0
  %1905 = vmatprep.subr.mxu0 0.0
  %1906 = vmatpush1.msra.mxu0 0.0
  %1907 = vmatprep.subr.mxu0 0.0
  %1908 = vmatpush1.msra.mxu0 0.0
  %1909 = vmatprep.subr.mxu0 0.0
  %1910 = vmatpush1.msra.mxu0 0.0
  %1911 = vmatprep.mubr.f32.mxu0 0.0
  %1912 = vmatmul.mubr.f32.gmra.mrb[0].mxu0 %v1845
  %v1913 = vpop.f32.mrb[0].mxu0
  %v1914 = vadd.f32 %v1843, %v1913
  %v1915 = vpop.f32.mrb[0].mxu0
  %1916 = vdwg.mxu0
  %v1917 = vmax.f32 %v1914, 0.0
  %v1918 = vld [vmem:[%s6 + $0x1c] sm:$0x1]
  %v1919 = vld [vmem:[%s6 + $0x1d] sm:$0x1]
  %v1920 = vsel %vm136, %v1917, 0.0
  %1921 = vadd.xlane.f32.xlu0 %v1920
  %v1922 = vpop.xlane.xlu0 %1921
  %v1923 = vmul.f32 %v1922, %v140
  %v1924 = vsub.f32 %v1917, %v1923
  %v1925 = vmul.f32 %v1924, %v1924
  %v1926 = vsel %vm136, %v1925, 0.0
  %1927 = vadd.xlane.f32.xlu0 %v1926
  %v1928 = vpop.xlane.xlu0 %1927
  %v1929 = vmul.f32 %v1928, %v140
  %v1930 = vadd.f32 %v1929, 1e-05
  %v1931 = vrsqrt.pop %v1930
  %v1932 = vmul.f32 %v1924, %v1931
  %v1933 = vlaneseq
  %v1934 = vshrl.u32 %v1933, 7
  %v1935 = vsub.s32 0, %v1934
  %v1936 = vrot.slane %v1918, %v1935
  %v1937 = vmul.f32 %v1932, %v1936
  %v1938 = vlaneseq
  %v1939 = vshrl.u32 %v1938, 7
  %v1940 = vsub.s32 0, %v1939
  %v1941 = vrot.slane %v1919, %v1940
  %v1942 = vadd.f32 %v1937, %v1941
  %s1943 = scalar_lea.vmem %s4, 448
  %v1944 = vld [vmem:[%s1943] sm:$0xff]
  %v1945 = vld [vmem:[%s1943 + $0x8] sm:$0xff]
  %v1946 = vld [vmem:[%s1943 + $0x10] sm:$0xff]
  %v1947 = vld [vmem:[%s1943 + $0x18] sm:$0xff]
  %v1948 = vld [vmem:[%s1943 + $0x20] sm:$0xff]
  %v1949 = vld [vmem:[%s1943 + $0x28] sm:$0xff]
  %v1950 = vld [vmem:[%s1943 + $0x30] sm:$0xff]
  %v1951 = vld [vmem:[%s1943 + $0x38] sm:$0xff]
  %v1952 = vld [vmem:[%s6 + $0x1e] sm:$0x1]
  %v1953 = vlaneseq
  %v1954 = vshrl.u32 %v1953, 7
  %v1955 = vsub.s32 0, %v1954
  %v1956 = vrot.slane %v1952, %v1955
  %v1958 = vsel %vm136, %v1942, 0
  %1960 = vmatprep.subr.mxu0 0.0
  %1961 = vmatpush1.msra.mxu0 %v1944
  %1962 = vmatprep.subr.mxu0 0.0
  %1963 = vmatpush1.msra.mxu0 %v1945
  %1964 = vmatprep.subr.mxu0 0.0
  %1965 = vmatpush1.msra.mxu0 %v1946
  %1966 = vmatprep.subr.mxu0 0.0
  %1967 = vmatpush1.msra.mxu0 %v1947
  %1968 = vmatprep.subr.mxu0 0.0
  %1969 = vmatpush1.msra.mxu0 %v1948
  %1970 = vmatprep.subr.mxu0 0.0
  %1971 = vmatpush1.msra.mxu0 %v1949
  %1972 = vmatprep.subr.mxu0 0.0
  %1973 = vmatpush1.msra.mxu0 %v1950
  %1974 = vmatprep.subr.mxu0 0.0
  %1975 = vmatpush1.msra.mxu0 %v1951
  %1976 = vmatprep.subr.mxu0 0.0
  %1977 = vmatpush1.msra.mxu0 0.0
  %1978 = vmatprep.subr.mxu0 0.0
  %1979 = vmatpush1.msra.mxu0 0.0
  %1980 = vmatprep.subr.mxu0 0.0
  %1981 = vmatpush1.msra.mxu0 0.0
  %1982 = vmatprep.subr.mxu0 0.0
  %1983 = vmatpush1.msra.mxu0 0.0
  %1984 = vmatprep.subr.mxu0 0.0
  %1985 = vmatpush1.msra.mxu0 0.0
  %1986 = vmatprep.subr.mxu0 0.0
  %1987 = vmatpush1.msra.mxu0 0.0
  %1988 = vmatprep.subr.mxu0 0.0
  %1989 = vmatpush1.msra.mxu0 0.0
  %1990 = vmatprep.subr.mxu0 0.0
  %1991 = vmatpush1.msra.mxu0 0.0
  %1992 = vmatprep.subr.mxu0 0.0
  %1993 = vmatpush1.msra.mxu0 0.0
  %1994 = vmatprep.subr.mxu0 0.0
  %1995 = vmatpush1.msra.mxu0 0.0
  %1996 = vmatprep.subr.mxu0 0.0
  %1997 = vmatpush1.msra.mxu0 0.0
  %1998 = vmatprep.subr.mxu0 0.0
  %1999 = vmatpush1.msra.mxu0 0.0
  %2000 = vmatprep.subr.mxu0 0.0
  %2001 = vmatpush1.msra.mxu0 0.0
  %2002 = vmatprep.subr.mxu0 0.0
  %2003 = vmatpush1.msra.mxu0 0.0
  %2004 = vmatprep.subr.mxu0 0.0
  %2005 = vmatpush1.msra.mxu0 0.0
  %2006 = vmatprep.subr.mxu0 0.0
  %2007 = vmatpush1.msra.mxu0 0.0
  %2008 = vmatprep.subr.mxu0 0.0
  %2009 = vmatpush1.msra.mxu0 0.0
  %2010 = vmatprep.subr.mxu0 0.0
  %2011 = vmatpush1.msra.mxu0 0.0
  %2012 = vmatprep.subr.mxu0 0.0
  %2013 = vmatpush1.msra.mxu0 0.0
  %2014 = vmatprep.subr.mxu0 0.0
  %2015 = vmatpush1.msra.mxu0 0.0
  %2016 = vmatprep.subr.mxu0 0.0
  %2017 = vmatpush1.msra.mxu0 0.0
  %2018 = vmatprep.subr.mxu0 0.0
  %2019 = vmatpush1.msra.mxu0 0.0
  %2020 = vmatprep.subr.mxu0 0.0
  %2021 = vmatpush1.msra.mxu0 0.0
  %2022 = vmatprep.subr.mxu0 0.0
  %2023 = vmatpush1.msra.mxu0 0.0
  %2024 = vmatprep.mubr.f32.mxu0 0.0
  %2025 = vmatmul.mubr.f32.gmra.mrb[0].mxu0 %v1958
  %v2026 = vpop.f32.mrb[0].mxu0
  %v2027 = vadd.f32 %v1956, %v2026
  %v2028 = vpop.f32.mrb[0].mxu0
  %2029 = vdwg.mxu0
  %v2030 = vmax.f32 %v2027, 0.0
  %v2031 = vld [vmem:[%s6 + $0x1f] sm:$0x1]
  %v2032 = vld [vmem:[%s6 + $0x20] sm:$0x1]
  %v2033 = vsel %vm136, %v2030, 0.0
  %2034 = vadd.xlane.f32.xlu0 %v2033
  %v2035 = vpop.xlane.xlu0 %2034
  %v2036 = vmul.f32 %v2035, %v140
  %v2037 = vsub.f32 %v2030, %v2036
  %v2038 = vmul.f32 %v2037, %v2037
  %v2039 = vsel %vm136, %v2038, 0.0
  %2040 = vadd.xlane.f32.xlu0 %v2039
  %v2041 = vpop.xlane.xlu0 %2040
  %v2042 = vmul.f32 %v2041, %v140
  %v2043 = vadd.f32 %v2042, 1e-05
  %v2044 = vrsqrt.pop %v2043
  %v2045 = vmul.f32 %v2037, %v2044
  %v2046 = vlaneseq
  %v2047 = vshrl.u32 %v2046, 7
  %v2048 = vsub.s32 0, %v2047
  %v2049 = vrot.slane %v2031, %v2048
  %v2050 = vmul.f32 %v2045, %v2049
  %v2051 = vlaneseq
  %v2052 = vshrl.u32 %v2051, 7
  %v2053 = vsub.s32 0, %v2052
  %v2054 = vrot.slane %v2032, %v2053
  %v2055 = vadd.f32 %v2050, %v2054
  %s2056 = scalar_lea.vmem %s4, 512
  %v2057 = vld [vmem:[%s2056] sm:$0xff]
  %v2058 = vld [vmem:[%s2056 + $0x8] sm:$0xff]
  %v2059 = vld [vmem:[%s2056 + $0x10] sm:$0xff]
  %v2060 = vld [vmem:[%s2056 + $0x18] sm:$0xff]
  %v2061 = vld [vmem:[%s2056 + $0x20] sm:$0xff]
  %v2062 = vld [vmem:[%s2056 + $0x28] sm:$0xff]
  %v2063 = vld [vmem:[%s2056 + $0x30] sm:$0xff]
  %v2064 = vld [vmem:[%s2056 + $0x38] sm:$0xff]
  %v2065 = vld [vmem:[%s6 + $0x21] sm:$0x1]
  %v2066 = vlaneseq
  %v2067 = vshrl.u32 %v2066, 7
  %v2068 = vsub.s32 0, %v2067
  %v2069 = vrot.slane %v2065, %v2068
  %v2071 = vsel %vm136, %v2055, 0
  %2073 = vmatprep.subr.mxu0 0.0
  %2074 = vmatpush1.msra.mxu0 %v2057
  %2075 = vmatprep.subr.mxu0 0.0
  %2076 = vmatpush1.msra.mxu0 %v2058
  %2077 = vmatprep.subr.mxu0 0.0
  %2078 = vmatpush1.msra.mxu0 %v2059
  %2079 = vmatprep.subr.mxu0 0.0
  %2080 = vmatpush1.msra.mxu0 %v2060
  %2081 = vmatprep.subr.mxu0 0.0
  %2082 = vmatpush1.msra.mxu0 %v2061
  %2083 = vmatprep.subr.mxu0 0.0
  %2084 = vmatpush1.msra.mxu0 %v2062
  %2085 = vmatprep.subr.mxu0 0.0
  %2086 = vmatpush1.msra.mxu0 %v2063
  %2087 = vmatprep.subr.mxu0 0.0
  %2088 = vmatpush1.msra.mxu0 %v2064
  %2089 = vmatprep.subr.mxu0 0.0
  %2090 = vmatpush1.msra.mxu0 0.0
  %2091 = vmatprep.subr.mxu0 0.0
  %2092 = vmatpush1.msra.mxu0 0.0
  %2093 = vmatprep.subr.mxu0 0.0
  %2094 = vmatpush1.msra.mxu0 0.0
  %2095 = vmatprep.subr.mxu0 0.0
  %2096 = vmatpush1.msra.mxu0 0.0
  %2097 = vmatprep.subr.mxu0 0.0
  %2098 = vmatpush1.msra.mxu0 0.0
  %2099 = vmatprep.subr.mxu0 0.0
  %2100 = vmatpush1.msra.mxu0 0.0
  %2101 = vmatprep.subr.mxu0 0.0
  %2102 = vmatpush1.msra.mxu0 0.0
  %2103 = vmatprep.subr.mxu0 0.0
  %2104 = vmatpush1.msra.mxu0 0.0
  %2105 = vmatprep.subr.mxu0 0.0
  %2106 = vmatpush1.msra.mxu0 0.0
  %2107 = vmatprep.subr.mxu0 0.0
  %2108 = vmatpush1.msra.mxu0 0.0
  %2109 = vmatprep.subr.mxu0 0.0
  %2110 = vmatpush1.msra.mxu0 0.0
  %2111 = vmatprep.subr.mxu0 0.0
  %2112 = vmatpush1.msra.mxu0 0.0
  %2113 = vmatprep.subr.mxu0 0.0
  %2114 = vmatpush1.msra.mxu0 0.0
  %2115 = vmatprep.subr.mxu0 0.0
  %2116 = vmatpush1.msra.mxu0 0.0
  %2117 = vmatprep.subr.mxu0 0.0
  %2118 = vmatpush1.msra.mxu0 0.0
  %2119 = vmatprep.subr.mxu0 0.0
  %2120 = vmatpush1.msra.mxu0 0.0
  %2121 = vmatprep.subr.mxu0 0.0
  %2122 = vmatpush1.msra.mxu0 0.0
  %2123 = vmatprep.subr.mxu0 0.0
  %2124 = vmatpush1.msra.mxu0 0.0
  %2125 = vmatprep.subr.mxu0 0.0
  %2126 = vmatpush1.msra.mxu0 0.0
  %2127 = vmatprep.subr.mxu0 0.0
  %2128 = vmatpush1.msra.mxu0 0.0
  %2129 = vmatprep.subr.mxu0 0.0
  %2130 = vmatpush1.msra.mxu0 0.0
  %2131 = vmatprep.subr.mxu0 0.0
  %2132 = vmatpush1.msra.mxu0 0.0
  %2133 = vmatprep.subr.mxu0 0.0
  %2134 = vmatpush1.msra.mxu0 0.0
  %2135 = vmatprep.subr.mxu0 0.0
  %2136 = vmatpush1.msra.mxu0 0.0
  %2137 = vmatprep.mubr.f32.mxu0 0.0
  %2138 = vmatmul.mubr.f32.gmra.mrb[0].mxu0 %v2071
  %v2139 = vpop.f32.mrb[0].mxu0
  %v2140 = vadd.f32 %v2069, %v2139
  %v2141 = vpop.f32.mrb[0].mxu0
  %2142 = vdwg.mxu0
  %v2143 = vmax.f32 %v2140, 0.0
  %v2144 = vld [vmem:[%s6 + $0x22] sm:$0x1]
  %v2145 = vld [vmem:[%s6 + $0x23] sm:$0x1]
  %v2146 = vsel %vm136, %v2143, 0.0
  %2147 = vadd.xlane.f32.xlu0 %v2146
  %v2148 = vpop.xlane.xlu0 %2147
  %v2149 = vmul.f32 %v2148, %v140
  %v2150 = vsub.f32 %v2143, %v2149
  %v2151 = vmul.f32 %v2150, %v2150
  %v2152 = vsel %vm136, %v2151, 0.0
  %2153 = vadd.xlane.f32.xlu0 %v2152
  %v2154 = vpop.xlane.xlu0 %2153
  %v2155 = vmul.f32 %v2154, %v140
  %v2156 = vadd.f32 %v2155, 1e-05
  %v2157 = vrsqrt.pop %v2156
  %v2158 = vmul.f32 %v2150, %v2157
  %v2159 = vlaneseq
  %v2160 = vshrl.u32 %v2159, 7
  %v2161 = vsub.s32 0, %v2160
  %v2162 = vrot.slane %v2144, %v2161
  %v2163 = vmul.f32 %v2158, %v2162
  %v2164 = vlaneseq
  %v2165 = vshrl.u32 %v2164, 7
  %v2166 = vsub.s32 0, %v2165
  %v2167 = vrot.slane %v2145, %v2166
  %v2168 = vadd.f32 %v2163, %v2167
  %2169 = vset.pattern.permute.xlu0 32
  %2170 = vperm.xlu0 %2169, %v29
  %v2171 = vpop.permute.xlu0 %2170
  %v2173 = vmul.f32 %v29, %v2171
  %v2174 = vsel %vm136, %v2168, %v2173
  %v2175 = vld [vmem:[%s5] sm:$0xff]
  %v2176 = vld [vmem:[%s5 + $0x8] sm:$0xff]
  %v2177 = vld [vmem:[%s5 + $0x10] sm:$0xff]
  %v2178 = vld [vmem:[%s5 + $0x18] sm:$0xff]
  %v2179 = vld [vmem:[%s5 + $0x20] sm:$0xff]
  %v2180 = vld [vmem:[%s5 + $0x28] sm:$0xff]
  %v2181 = vld [vmem:[%s5 + $0x30] sm:$0xff]
  %v2182 = vld [vmem:[%s5 + $0x38] sm:$0xff]
  %v2183 = vld [vmem:[%s5 + $0x40] sm:$0xff]
  %v2184 = vld [vmem:[%s5 + $0x48] sm:$0xff]
  %v2185 = vld [vmem:[%s5 + $0x50] sm:$0xff]
  %v2186 = vld [vmem:[%s5 + $0x58] sm:$0xff]
  %v2187 = vld [vmem:[%s5 + $0x60] sm:$0xff]
  %v2188 = vld [vmem:[%s5 + $0x68] sm:$0xff]
  %v2189 = vld [vmem:[%s5 + $0x70] sm:$0xff]
  %v2190 = vld [vmem:[%s5 + $0x78] sm:$0xff]
  %v2191 = vld [vmem:[%s5 + $0x80] sm:$0xff]
  %v2192 = vld [vmem:[%s5 + $0x88] sm:$0xff]
  %v2193 = vld [vmem:[%s5 + $0x90] sm:$0xff]
  %v2194 = vld [vmem:[%s5 + $0x98] sm:$0xff]
  %v2195 = vld [vmem:[%s5 + $0xa0] sm:$0xff]
  %v2196 = vld [vmem:[%s5 + $0xa8] sm:$0xff]
  %v2197 = vld [vmem:[%s5 + $0xb0] sm:$0xff]
  %v2198 = vld [vmem:[%s5 + $0xb8] sm:$0xff]
  %v2199 = vld [vmem:[%s5 + $0xc0] sm:$0xff]
  %v2200 = vld [vmem:[%s5 + $0xc8] sm:$0xff]
  %v2201 = vld [vmem:[%s5 + $0xd0] sm:$0xff]
  %v2202 = vld [vmem:[%s5 + $0xd8] sm:$0xff]
  %v2203 = vld [vmem:[%s5 + $0xe0] sm:$0xff]
  %v2204 = vld [vmem:[%s5 + $0xe8] sm:$0xff]
  %v2205 = vld [vmem:[%s5 + $0xf0] sm:$0xff]
  %v2206 = vld [vmem:[%s5 + $0xf8] sm:$0xff]
  %s2207 = scalar_lea.vmem %s7, 6
  %v2208 = vld [vmem:[%s2207] ss:$8 sm:$0x3]
  %v2210 = vlaneseq
  %v2211 = vshrl.u32 %v2210, 7
  %v2212 = vsub.s32 0, %v2211
  %v2213 = vrot.slane %v2208, %v2212
  %v2214 = vlaneseq
  %v2215 = vshrl.u32 %v2214, 7
  %v2216 = vsub.s32 1, %v2215
  %v2217 = vrot.slane %v2208, %v2216
  %2220 = vmatprep.subr.mxu0 %v2176
  %2221 = vmatpush1.msra.mxu0 %v2175
  %2222 = vmatprep.subr.mxu0 %v2178
  %2223 = vmatpush1.msra.mxu0 %v2177
  %2224 = vmatprep.subr.mxu0 %v2180
  %2225 = vmatpush1.msra.mxu0 %v2179
  %2226 = vmatprep.subr.mxu0 %v2182
  %2227 = vmatpush1.msra.mxu0 %v2181
  %2228 = vmatprep.subr.mxu0 %v2184
  %2229 = vmatpush1.msra.mxu0 %v2183
  %2230 = vmatprep.subr.mxu0 %v2186
  %2231 = vmatpush1.msra.mxu0 %v2185
  %2232 = vmatprep.subr.mxu0 %v2188
  %2233 = vmatpush1.msra.mxu0 %v2187
  %2234 = vmatprep.subr.mxu0 %v2190
  %2235 = vmatpush1.msra.mxu0 %v2189
  %2236 = vmatprep.subr.mxu0 %v2192
  %2237 = vmatpush1.msra.mxu0 %v2191
  %2238 = vmatprep.subr.mxu0 %v2194
  %2239 = vmatpush1.msra.mxu0 %v2193
  %2240 = vmatprep.subr.mxu0 %v2196
  %2241 = vmatpush1.msra.mxu0 %v2195
  %2242 = vmatprep.subr.mxu0 %v2198
  %2243 = vmatpush1.msra.mxu0 %v2197
  %2244 = vmatprep.subr.mxu0 %v2200
  %2245 = vmatpush1.msra.mxu0 %v2199
  %2246 = vmatprep.subr.mxu0 %v2202
  %2247 = vmatpush1.msra.mxu0 %v2201
  %2248 = vmatprep.subr.mxu0 %v2204
  %2249 = vmatpush1.msra.mxu0 %v2203
  %2250 = vmatprep.subr.mxu0 %v2206
  %2251 = vmatpush1.msra.mxu0 %v2205
  %2252 = vmatprep.subr.mxu0 0.0
  %2253 = vmatpush1.msra.mxu0 0.0
  %2254 = vmatprep.subr.mxu0 0.0
  %2255 = vmatpush1.msra.mxu0 0.0
  %2256 = vmatprep.subr.mxu0 0.0
  %2257 = vmatpush1.msra.mxu0 0.0
  %2258 = vmatprep.subr.mxu0 0.0
  %2259 = vmatpush1.msra.mxu0 0.0
  %2260 = vmatprep.subr.mxu0 0.0
  %2261 = vmatpush1.msra.mxu0 0.0
  %2262 = vmatprep.subr.mxu0 0.0
  %2263 = vmatpush1.msra.mxu0 0.0
  %2264 = vmatprep.subr.mxu0 0.0
  %2265 = vmatpush1.msra.mxu0 0.0
  %2266 = vmatprep.subr.mxu0 0.0
  %2267 = vmatpush1.msra.mxu0 0.0
  %2268 = vmatprep.subr.mxu0 0.0
  %2269 = vmatpush1.msra.mxu0 0.0
  %2270 = vmatprep.subr.mxu0 0.0
  %2271 = vmatpush1.msra.mxu0 0.0
  %2272 = vmatprep.subr.mxu0 0.0
  %2273 = vmatpush1.msra.mxu0 0.0
  %2274 = vmatprep.subr.mxu0 0.0
  %2275 = vmatpush1.msra.mxu0 0.0
  %2276 = vmatprep.subr.mxu0 0.0
  %2277 = vmatpush1.msra.mxu0 0.0
  %2278 = vmatprep.subr.mxu0 0.0
  %2279 = vmatpush1.msra.mxu0 0.0
  %2280 = vmatprep.subr.mxu0 0.0
  %2281 = vmatpush1.msra.mxu0 0.0
  %2282 = vmatprep.subr.mxu0 0.0
  %2283 = vmatpush1.msra.mxu0 0.0
  %2284 = vmatprep.mubr.f32.mxu0 0.0
  %2285 = vmatmul.mubr.f32.gmra.mrb[0].mxu0 %v2174
  %v2286 = vpop.f32.mrb[0].mxu0
  %v2287 = vadd.f32 %v2213, %v2286
  %v2288 = vpop.f32.mrb[0].mxu0
  %v2289 = vadd.f32 %v2217, %v2288
  %2290 = vdwg.mxu0
  %v2291 = vxor.u32 %v2287, 2147483648
  %v2292 = vmul.f32 %v2291, 1.442695
  %v2293 = vpow.pop %v2292
  %v2294 = vadd.f32 %v2293, 1.0
  %v2295 = vrcp.pop %v2294
  %v2296 = vmul.f32 1.0, %v2295
  %2298 = vrot.lane.b32.xlu0 %v2289, 64
  %v2299 = vpop.permute.xlu0 %2298
  %v2301 = vmul.f32 %v2296, %v2299
  %v2302 = vadd.f32 %v2289, %v2301
  %v2303 = vtanh.pop %v2302
  %v2304 = vsub.f32 1.0, %v2296
  %2306 = vrot.lane.b32.xlu0 %v2303, 64
  %v2307 = vpop.permute.xlu0 %2306
  %v2309 = vmul.f32 %v2304, %v2307
  %v2310 = vmul.f32 %v2296, %v2173
  %v2311 = vadd.f32 %v2309, %v2310
  %v2312 = vld [vmem:[%s6 + $0x26] sm:$0x1]
  %v2313 = vld [vmem:[%s6 + $0x27] sm:$0x1]
  %2315 = vrot.lane.b32.xlu0 %v2311, 64
  %v2316 = vpop.permute.xlu0 %2315
  %v2318 = vsel %vm136, %v2316, 0.0
  %2319 = vadd.xlane.f32.xlu0 %v2318
  %v2320 = vpop.xlane.xlu0 %2319
  %v2321 = vmul.f32 %v2320, %v140
  %v2322 = vsub.f32 %v2311, %v2321
  %v2323 = vmul.f32 %v2322, %v2322
  %2325 = vrot.lane.b32.xlu0 %v2323, 64
  %v2326 = vpop.permute.xlu0 %2325
  %v2328 = vsel %vm136, %v2326, 0.0
  %2329 = vadd.xlane.f32.xlu0 %v2328
  %v2330 = vpop.xlane.xlu0 %2329
  %v2331 = vmul.f32 %v2330, %v140
  %v2332 = vadd.f32 %v2331, 1e-05
  %v2333 = vrsqrt.pop %v2332
  %v2334 = vmul.f32 %v2322, %v2333
  %v2335 = vlaneseq
  %v2336 = vshrl.u32 %v2335, 7
  %v2337 = vsub.s32 0, %v2336
  %v2338 = vrot.slane %v2312, %v2337
  %2340 = vrot.lane.b32.xlu0 %v2338, 64
  %v2341 = vpop.permute.xlu0 %2340
  %v2343 = vmul.f32 %v2334, %v2341
  %v2344 = vlaneseq
  %v2345 = vshrl.u32 %v2344, 7
  %v2346 = vsub.s32 0, %v2345
  %v2347 = vrot.slane %v2313, %v2346
  %2349 = vrot.lane.b32.xlu0 %v2347, 64
  %v2350 = vpop.permute.xlu0 %2349
  %v2352 = vadd.f32 %v2343, %v2350
  %s2353 = scalar_lea.vmem %s4, 640
  %v2354 = vld [vmem:[%s2353] sm:$0xff]
  %v2355 = vld [vmem:[%s2353 + $0x8] sm:$0xff]
  %v2356 = vld [vmem:[%s2353 + $0x10] sm:$0xff]
  %v2357 = vld [vmem:[%s2353 + $0x18] sm:$0xff]
  %v2358 = vld [vmem:[%s2353 + $0x20] sm:$0xff]
  %v2359 = vld [vmem:[%s2353 + $0x28] sm:$0xff]
  %v2360 = vld [vmem:[%s2353 + $0x30] sm:$0xff]
  %v2361 = vld [vmem:[%s2353 + $0x38] sm:$0xff]
  %v2362 = vld [vmem:[%s6 + $0x28] sm:$0x1]
  %v2363 = vlaneseq
  %v2364 = vshrl.u32 %v2363, 7
  %v2365 = vsub.s32 0, %v2364
  %v2366 = vrot.slane %v2362, %v2365
  %2368 = vrot.lane.b32.xlu0 %v2352, 64
  %v2369 = vpop.permute.xlu0 %2368
  %v2370 = vsel %vm136, %v2369, 0
  %2372 = vmatprep.subr.mxu0 0.0
  %2373 = vmatpush1.msra.mxu0 %v2354
  %2374 = vmatprep.subr.mxu0 0.0
  %2375 = vmatpush1.msra.mxu0 %v2355
  %2376 = vmatprep.subr.mxu0 0.0
  %2377 = vmatpush1.msra.mxu0 %v2356
  %2378 = vmatprep.subr.mxu0 0.0
  %2379 = vmatpush1.msra.mxu0 %v2357
  %2380 = vmatprep.subr.mxu0 0.0
  %2381 = vmatpush1.msra.mxu0 %v2358
  %2382 = vmatprep.subr.mxu0 0.0
  %2383 = vmatpush1.msra.mxu0 %v2359
  %2384 = vmatprep.subr.mxu0 0.0
  %2385 = vmatpush1.msra.mxu0 %v2360
  %2386 = vmatprep.subr.mxu0 0.0
  %2387 = vmatpush1.msra.mxu0 %v2361
  %2388 = vmatprep.subr.mxu0 0.0
  %2389 = vmatpush1.msra.mxu0 0.0
  %2390 = vmatprep.subr.mxu0 0.0
  %2391 = vmatpush1.msra.mxu0 0.0
  %2392 = vmatprep.subr.mxu0 0.0
  %2393 = vmatpush1.msra.mxu0 0.0
  %2394 = vmatprep.subr.mxu0 0.0
  %2395 = vmatpush1.msra.mxu0 0.0
  %2396 = vmatprep.subr.mxu0 0.0
  %2397 = vmatpush1.msra.mxu0 0.0
  %2398 = vmatprep.subr.mxu0 0.0
  %2399 = vmatpush1.msra.mxu0 0.0
  %2400 = vmatprep.subr.mxu0 0.0
  %2401 = vmatpush1.msra.mxu0 0.0
  %2402 = vmatprep.subr.mxu0 0.0
  %2403 = vmatpush1.msra.mxu0 0.0
  %2404 = vmatprep.subr.mxu0 0.0
  %2405 = vmatpush1.msra.mxu0 0.0
  %2406 = vmatprep.subr.mxu0 0.0
  %2407 = vmatpush1.msra.mxu0 0.0
  %2408 = vmatprep.subr.mxu0 0.0
  %2409 = vmatpush1.msra.mxu0 0.0
  %2410 = vmatprep.subr.mxu0 0.0
  %2411 = vmatpush1.msra.mxu0 0.0
  %2412 = vmatprep.subr.mxu0 0.0
  %2413 = vmatpush1.msra.mxu0 0.0
  %2414 = vmatprep.subr.mxu0 0.0
  %2415 = vmatpush1.msra.mxu0 0.0
  %2416 = vmatprep.subr.mxu0 0.0
  %2417 = vmatpush1.msra.mxu0 0.0
  %2418 = vmatprep.subr.mxu0 0.0
  %2419 = vmatpush1.msra.mxu0 0.0
  %2420 = vmatprep.subr.mxu0 0.0
  %2421 = vmatpush1.msra.mxu0 0.0
  %2422 = vmatprep.subr.mxu0 0.0
  %2423 = vmatpush1.msra.mxu0 0.0
  %2424 = vmatprep.subr.mxu0 0.0
  %2425 = vmatpush1.msra.mxu0 0.0
  %2426 = vmatprep.subr.mxu0 0.0
  %2427 = vmatpush1.msra.mxu0 0.0
  %2428 = vmatprep.subr.mxu0 0.0
  %2429 = vmatpush1.msra.mxu0 0.0
  %2430 = vmatprep.subr.mxu0 0.0
  %2431 = vmatpush1.msra.mxu0 0.0
  %2432 = vmatprep.subr.mxu0 0.0
  %2433 = vmatpush1.msra.mxu0 0.0
  %2434 = vmatprep.subr.mxu0 0.0
  %2435 = vmatpush1.msra.mxu0 0.0
  %2436 = vmatprep.mubr.f32.mxu0 0.0
  %2437 = vmatmul.mubr.f32.gmra.mrb[0].mxu0 %v2370
  %v2438 = vpop.f32.mrb[0].mxu0
  %v2439 = vadd.f32 %v2366, %v2438
  %v2440 = vpop.f32.mrb[0].mxu0
  %2441 = vdwg.mxu0
  %2443 = vrot.lane.b32.xlu0 %v2439, 64
  %v2444 = vpop.permute.xlu0 %2443
  %v2446 = vsel %vm136, %v2316, %v2444
  %2447 = vst [vmem:[%s8] sm:$0xff] %v2446
  // Predicated region
  $region34: #{r_cnn_critic_forward.1} parent=0 // pred_check
    _
  $region35: #{r_cnn_critic_forward.1} parent=0 // pred_check_branch
    %2449 = sbr.rel (0) target = $region37
  $region36: #{r_cnn_critic_forward.1} parent=0 // pred_region
    _
  $region37: #{r_cnn_critic_forward.1} parent=0 // pred_fallthru
    _
  // Predicated region
  $region38: #{r_cnn_critic_forward.1} parent=0 // pred_check
    _
  $region39: #{r_cnn_critic_forward.1} parent=0 // pred_check_branch
    %2451 = sbr.rel (0) target = $region41
  $region40: #{r_cnn_critic_forward.1} parent=0 // pred_region
    _
  $region41: #{r_cnn_critic_forward.1} parent=0 // pred_fallthru
    _

</llo_original>
